<compile_context>
chip_gen: v7x
topology: tpu7x:2x2x1
jax: 0.10.0
libtpu: 0.0.40
codegen_flags: <defaults>
</compile_context>

<pallas_src>
import numpy as np
import jax
import jax.numpy as jnp
from jax.experimental import pallas as pl
from jax.experimental.pallas import tpu as pltpu

# ----------------------------- configuration -------------------------------
B = 2            # batch
E = 8            # num_electrodes
T = 32           # time
EMB_K = 2        # emb_kernel (conv kernel / stride along time)
POOL = 2         # LPPool kernel
C = 32           # emb_dim
G = 2            # g_layers (Chebyshev order)
WOUT = T // EMB_K            # conv output width  = 16
S = WOUT // POOL             # pooled sequence    = 8
L = S + 1                    # + cls token        = 9
BL = B * L                   # stacked batch*tokens rows = 18
H = 4            # num_heads
DK = C // H
EXPAND = 2
DI = EXPAND * C  # mamba d_inner = 64
N = 8            # mamba d_state
DCONV = 4        # mamba d_conv
DTR = max(C // 16, 1)        # mamba dt_rank = 2
NCLS = 3         # num_classes
NLAYERS = 1      # TAM layers
MAXLEN = 1024
EPS_LN = 1e-5
EPS_BN = 1e-5
SCAN_ROWS = L * B * N        # 144 rows, ordered (t, b, n)
NEG_INF = -1e9


# ------------------------------ slab packing --------------------------------
def pack_slab(named_arrays, dtype, row_align):
    """Concatenate many small 2-D parameter arrays into one padded slab."""
    width = max(int(a.shape[1]) for _, a in named_arrays)
    offsets = {}
    pieces = []
    row = 0
    for name, a in named_arrays:
        a = jnp.asarray(a, jnp.float32).astype(dtype)
        h, w = int(a.shape[0]), int(a.shape[1])
        offsets[name] = (row, h, w)
        if w < width:
            a = jnp.pad(a, ((0, 0), (0, width - w)))
        pieces.append(a)
        row += h
        pad = (-row) % row_align
        if pad:
            pieces.append(jnp.zeros((pad, width), dtype))
            row += pad
    return jnp.concatenate(pieces, axis=0), offsets


# ------------------------------ fused kernel --------------------------------
def make_kernel(offw, offp):
    f32 = jnp.float32
    bf16 = jnp.bfloat16

    def kernel(xp_ref, w_ref, p_ref, out_ref, da_scr, dbx_scr, h_scr):
        def W(name):                                   # bf16 weight slab slice
            r, h, w = offw[name]
            return w_ref[pl.ds(r, h), pl.ds(0, w)]

        def P(name):                                   # f32 parameter slab slice
            r, h, w = offp[name]
            return p_ref[pl.ds(r, h), pl.ds(0, w)]

        def mm(a, b):                                  # bf16 x bf16 -> f32 matmul
            return jnp.dot(a.astype(bf16), b, preferred_element_type=f32)

        def layernorm(v, g, bb):
            mu = jnp.mean(v, axis=-1, keepdims=True)
            var = jnp.mean((v - mu) ** 2, axis=-1, keepdims=True)
            return (v - mu) * jax.lax.rsqrt(var + EPS_LN) * g + bb

        def silu(v):
            return v * (1.0 / (1.0 + jnp.exp(-v)))

        # ---------------- DSE: graph embedding + cls/pos tokens --------------
        xp = xp_ref[...] * P('bn_sc') + P('bn_sh')            # BN (eval), patches
        pre = mm(xp, W('wfT')) + P('bconv')                   # (B*WOUT, G*C)
        th = jnp.tanh(pre)
        sq = th * th
        pooled = jnp.dot(W('pool'), sq.astype(bf16),
                         preferred_element_type=f32)          # LPPool + placement
        sp = jnp.sqrt(pooled)                                 # (BL, G*C)
        acc = sp[:, 0:C]
        for g in range(1, G):
            acc = acc + sp[:, g * C:(g + 1) * C]              # sum over Cheby order
        x = P('tok_tmpl') + jnp.maximum(acc, 0.0)             # (BL, C) tokens

        # ---------------------------- STM (Mamba) ----------------------------
        def stm_block(xin, pre_n):
            xz = mm(xin, W(pre_n + 'win'))                    # (BL, 2*DI)
            xi = xz[:, :DI]
            z = xz[:, DI:]
            # causal depthwise conv via host-folded masked shift matrices
            cw = P(pre_n + 'cw')                              # (DCONV, DI)
            xib = xi.astype(bf16)
            xc = xi * cw[DCONV - 1:DCONV, :]
            for j in range(1, DCONV):
                sh = jnp.dot(W('shift%d' % j), xib,
                             preferred_element_type=f32)      # shift+causal mask
                xc = xc + sh * cw[DCONV - 1 - j:DCONV - j, :]
            xc = silu(xc + P(pre_n + 'convb'))
            xdbl = mm(xc, W(pre_n + 'wx'))                    # (BL, DTR+2N)
            dt = mm(xdbl[:, :DTR], W(pre_n + 'wdt')) + P(pre_n + 'bdt')
            dt = jnp.maximum(dt, 0.0) + jnp.log(1.0 + jnp.exp(-jnp.abs(dt)))
            Bm = xdbl[:, DTR:DTR + N]
            Cm = xdbl[:, DTR + N:DTR + 2 * N]

            # fully vectorized discretization; rows ordered (t, b, n)
            rrep = W('R_rep')                                 # (SCAN_ROWS, BL)
            nsel = P('N_sel')                                 # (SCAN_ROWS, N)
            dt_rep = jnp.dot(rrep, dt.astype(bf16), preferred_element_type=f32)
            dtxc_rep = jnp.dot(rrep, (dt * xc).astype(bf16),
                               preferred_element_type=f32)
            bm_rep = jnp.dot(rrep, Bm.astype(bf16), preferred_element_type=f32)
            b_col = jnp.sum(bm_rep * nsel, axis=1, keepdims=True)
            da_scr[...] = jnp.exp(dt_rep * P(pre_n + 'A_tile'))
            dbx_scr[...] = dtxc_rep * b_col

            # selective scan: pure-VPU recurrence, both batch chains in lockstep
            h = jnp.zeros((B * N, DI), f32)
            for t in range(L):
                sl = pl.ds(t * B * N, B * N)
                h = da_scr[sl, :] * h + dbx_scr[sl, :]
                h_scr[sl, :] = h

            # hoisted C.h projection: one elementwise pass + one reduce matmul
            cm_rep = jnp.dot(rrep, Cm.astype(bf16), preferred_element_type=f32)
            c_col = jnp.sum(cm_rep * nsel, axis=1, keepdims=True)
            prod = h_scr[...] * c_col                         # (SCAN_ROWS, DI)
            y = jnp.dot(W('R_red'), prod.astype(bf16),
                        preferred_element_type=f32)           # (BL, DI)
            y = y + P(pre_n + 'dp') * xc                      # + D * x
            y = y * silu(z)                                   # SiLU(z) gate
            r = xin + mm(y, W(pre_n + 'wout'))
            return layernorm(r, P(pre_n + 'ln_g'), P(pre_n + 'ln_b'))

        # -------------------------- STA (attention) ---------------------------
        def sta_block(xin, pre_n):
            qkv = mm(xin, W(pre_n + 'wqkv')) + P(pre_n + 'bqkv')   # fused QKV
            mask = P('attn_mask')                                   # batch block-diag
            acc_o = None
            for hh in range(H):                                     # heads: both
                c0 = hh * DK                                        # batches at once
                q = qkv[:, c0:c0 + DK].astype(bf16)
                k = qkv[:, C + c0:C + c0 + DK].astype(bf16)
                v = qkv[:, 2 * C + c0:2 * C + c0 + DK].astype(bf16)
                s = jax.lax.dot_general(q, k, (((1,), (1,)), ((), ())),
                                        preferred_element_type=f32) + mask
                s = s - jnp.max(s, axis=-1, keepdims=True)
                p = jnp.exp(s)
                p = p / jnp.sum(p, axis=-1, keepdims=True)
                hv = jnp.dot(p.astype(bf16), v, preferred_element_type=f32)
                contrib = mm(hv, W(pre_n + 'wo%d' % hh))            # per-head out-proj
                acc_o = contrib if acc_o is None else acc_o + contrib
            r = xin + acc_o + P(pre_n + 'bo')
            return layernorm(r, P(pre_n + 'ln_g'), P(pre_n + 'ln_b'))

        # ------------------------ transformer stack ---------------------------
        x = stm_block(x, 'stm0_')                             # pre_stm
        for li in range(NLAYERS):                             # TAM: STA -> STM
            x = sta_block(x, 'sta%d_' % li)
            x = stm_block(x, 'stm%d_' % (li + 1))

        # ----------------------------- classifier -----------------------------
        cls_x = jnp.dot(W('sel'), x.astype(bf16), preferred_element_type=f32)
        logits = mm(cls_x, W('wcls')) + P('cls_b')
        logits = logits - jnp.max(logits, axis=-1, keepdims=True)
        e = jnp.exp(logits)
        out_ref[...] = e / jnp.sum(e, axis=-1, keepdims=True)

    return kernel


# ------------------------------ host-side prep ------------------------------
def prep_x(x):
    # x (B,E,T) -> patches (B*WOUT, E*EMB_K) with t = w*EMB_K + k
    return x.reshape(B, E, WOUT, EMB_K).transpose(0, 2, 1, 3).reshape(
        B * WOUT, E * EMB_K)


def prep_params(p):
    """Parameter folding + slab packing (constant-folded under jit)."""
    # BatchNorm1d(time) eval-mode scale/shift laid out for the patch matrix
    scale = p['bn_gamma'] / jnp.sqrt(p['bn_var'] + EPS_BN)
    shift = p['bn_beta'] - p['bn_mean'] * scale
    bn_sc = jnp.tile(jnp.tile(scale.reshape(WOUT, EMB_K), (1, E)), (B, 1))
    bn_sh = jnp.tile(jnp.tile(shift.reshape(WOUT, EMB_K), (1, E)), (B, 1))

    # normalize_A (symmetric) + Chebyshev supports folded into conv weights
    A = jnp.maximum(p['A'], 0.0)
    A = A + A.T
    dinv = jax.lax.rsqrt(jnp.sum(A, axis=1) + 1e-10)
    Lmat = dinv[:, None] * A * dinv[None, :]
    supports = [jnp.eye(E, dtype=jnp.float32)]
    if G >= 2:
        supports.append(Lmat)
    for _ in range(2, G):
        supports.append(supports[-1] @ Lmat)
    adjs = jnp.stack(supports, axis=0)
    wf = jnp.einsum('gcek,gef->gcfk', p['conv_w'], adjs)
    wfT = wf.transpose(2, 3, 0, 1).reshape(E * EMB_K, G * C)
    bconv = p['conv_b'].reshape(1, G * C)

    # LPPool(2) + token placement (cls rows stay zero)
    pool_place = np.zeros((BL, B * WOUT), np.float32)
    for b in range(B):
        for w in range(WOUT):
            pool_place[b * L + 1 + w // POOL, b * WOUT + w] = 1.0

    # cls token + positional-encoding template, tiled over batch
    cls_row = p['cls_token'].reshape(1, C)
    tmpl = p['pos_enc'][:L] + jnp.concatenate(
        [cls_row, jnp.zeros((S, C), jnp.float32)], axis=0)
    tok_tmpl = jnp.tile(tmpl, (B, 1))

    # scan bookkeeping matrices (shared by all STM blocks); rows ordered (t,b,n)
    r_rep = np.zeros((SCAN_ROWS, BL), np.float32)
    r_red = np.zeros((BL, SCAN_ROWS), np.float32)
    n_sel = np.zeros((SCAN_ROWS, N), np.float32)
    for t in range(L):
        for b in range(B):
            for n in range(N):
                srow = t * B * N + b * N + n
                r_rep[srow, b * L + t] = 1.0
                r_red[b * L + t, srow] = 1.0
                n_sel[srow, n] = 1.0

    # causal depthwise-conv shift matrices, batch/causal masking baked in
    shift_mats = []
    for j in range(1, DCONV):
        sj = np.zeros((BL, BL), np.float32)
        for r in range(BL):
            if (r % L) >= j:
                sj[r, r - j] = 1.0
        shift_mats.append(sj)

    # attention mask: block-diagonal over the batch
    attn_mask = np.full((BL, BL), NEG_INF, np.float32)
    for b in range(B):
        attn_mask[b * L:(b + 1) * L, b * L:(b + 1) * L] = 0.0

    # cls-row selector for the classifier
    sel = np.zeros((B, BL), np.float32)
    for b in range(B):
        sel[b, b * L] = 1.0

    w_list = [('wfT', wfT), ('pool', pool_place), ('R_rep', r_rep),
              ('R_red', r_red), ('sel', sel), ('wcls', p['cls_w'])]
    for j in range(1, DCONV):
        w_list.append(('shift%d' % j, shift_mats[j - 1]))
    p_list = [('bn_sc', bn_sc), ('bn_sh', bn_sh), ('bconv', bconv),
              ('tok_tmpl', tok_tmpl), ('attn_mask', attn_mask),
              ('N_sel', n_sel), ('cls_b', p['cls_b'])]

    def stm_entries(pre_n, sp):
        a_tile = jnp.tile(-jnp.exp(sp['alog']), (L * B, 1))    # (SCAN_ROWS, DI)
        w_e = [(pre_n + 'win', sp['win']), (pre_n + 'wx', sp['wx']),
               (pre_n + 'wdt', sp['wdt']), (pre_n + 'wout', sp['wout'])]
        p_e = [(pre_n + 'cw', sp['convw']), (pre_n + 'convb', sp['convb']),
               (pre_n + 'bdt', sp['bdt']), (pre_n + 'dp', sp['dparam']),
               (pre_n + 'A_tile', a_tile),
               (pre_n + 'ln_g', sp['ln_g']), (pre_n + 'ln_b', sp['ln_b'])]
        return w_e, p_e

    def sta_entries(pre_n, ap):
        sc = 1.0 / float(np.sqrt(DK))                          # fold 1/sqrt(dk) into Q
        wqkv = jnp.concatenate([ap['wq'] * sc, ap['wk'], ap['wv']], axis=1)
        bqkv = jnp.concatenate([ap['bq'] * sc, ap['bk'], ap['bv']], axis=1)
        w_e = [(pre_n + 'wqkv', wqkv)]
        for hh in range(H):                                    # per-head out-proj rows
            w_e.append((pre_n + 'wo%d' % hh, ap['wo'][hh * DK:(hh + 1) * DK, :]))
        p_e = [(pre_n + 'bqkv', bqkv), (pre_n + 'bo', ap['bo']),
               (pre_n + 'ln_g', ap['ln_g']), (pre_n + 'ln_b', ap['ln_b'])]
        return w_e, p_e

    w_e, p_e = stm_entries('stm0_', p['pre_stm'])
    w_list += w_e
    p_list += p_e
    for li, lyr in enumerate(p['tam']):
        w_e, p_e = sta_entries('sta%d_' % li, lyr['sta'])
        w_list += w_e
        p_list += p_e
        w_e, p_e = stm_entries('stm%d_' % (li + 1), lyr['stm'])
        w_list += w_e
        p_list += p_e

    wslab, offw = pack_slab(w_list, jnp.bfloat16, 16)          # MXU weight slab
    pslab, offp = pack_slab(p_list, jnp.float32, 8)            # elementwise slab
    return wslab, pslab, offw, offp


def dse_tam_forward(x, params):
    wslab, pslab, offw, offp = prep_params(params)
    kernel = make_kernel(offw, offp)
    # single fused pallas_call: 3 input DMAs, everything resident in VMEM
    return pl.pallas_call(
        kernel,
        out_shape=jax.ShapeDtypeStruct((B, NCLS), jnp.float32),
        scratch_shapes=[pltpu.VMEM((SCAN_ROWS, DI), jnp.float32),   # dA
                        pltpu.VMEM((SCAN_ROWS, DI), jnp.float32),   # dB*x
                        pltpu.VMEM((SCAN_ROWS, DI), jnp.float32)],  # h stash
    )(prep_x(x), wslab, pslab)


# ---------------------------- parameter setup --------------------------------
def positional_encoding(maxlen, d):
    pos = np.arange(maxlen, dtype=np.float32)[:, None]
    two_i = np.arange(0, d, 2, dtype=np.float32)
    enc = np.zeros((maxlen, d), dtype=np.float32)
    div = np.power(10000.0, two_i / d)
    enc[:, 0::2] = np.sin(pos / div)
    enc[:, 1::2] = np.cos(pos / div)
    return jnp.asarray(enc)


def init_params(key):
    keys = iter(jax.random.split(key, 64))

    def nrm(shape, scale=0.1):
        return scale * jax.random.normal(next(keys), shape, dtype=jnp.float32)

    p = {}
    p['A'] = nrm((E, E), scale=float(np.sqrt(2.0 / (E + E))))
    p['bn_gamma'] = jnp.ones((T,), jnp.float32)
    p['bn_beta'] = jnp.zeros((T,), jnp.float32)
    p['bn_mean'] = jnp.zeros((T,), jnp.float32)
    p['bn_var'] = jnp.ones((T,), jnp.float32)
    p['conv_w'] = nrm((G, C, E, EMB_K), 0.2)
    p['conv_b'] = nrm((G, C), 0.05)
    p['cls_token'] = jnp.zeros((1, 1, C), jnp.float32)
    p['pos_enc'] = positional_encoding(MAXLEN, C)

    def mk_stm():
        alog = jnp.tile(jnp.log(jnp.arange(1, N + 1, dtype=jnp.float32))[:, None],
                        (1, DI))
        return {
            'win': nrm((C, 2 * DI), 0.1),
            'convw': nrm((DCONV, DI), 0.2),
            'convb': nrm((1, DI), 0.05),
            'wx': nrm((DI, DTR + 2 * N), 0.1),
            'wdt': nrm((DTR, DI), 0.3),
            'bdt': nrm((1, DI), 0.1),
            'alog': alog,
            'dparam': jnp.ones((1, DI), jnp.float32),
            'wout': nrm((DI, C), 0.1),
            'ln_g': jnp.ones((1, C), jnp.float32),
            'ln_b': jnp.zeros((1, C), jnp.float32),
        }

    def mk_sta():
        return {
            'wq': nrm((C, C), 0.1), 'bq': nrm((1, C), 0.02),
            'wk': nrm((C, C), 0.1), 'bk': nrm((1, C), 0.02),
            'wv': nrm((C, C), 0.1), 'bv': nrm((1, C), 0.02),
            'wo': nrm((C, C), 0.1), 'bo': nrm((1, C), 0.02),
            'ln_g': jnp.ones((1, C), jnp.float32),
            'ln_b': jnp.zeros((1, C), jnp.float32),
        }

    p['pre_stm'] = mk_stm()
    p['tam'] = [{'sta': mk_sta(), 'stm': mk_stm()} for _ in range(NLAYERS)]
    p['cls_w'] = nrm((C, NCLS), 0.1)
    p['cls_b'] = jnp.zeros((1, NCLS), jnp.float32)
    return p


# --------------------------------- main --------------------------------------
if __name__ == "__main__":
    key = jax.random.PRNGKey(0)
    kx, kp = jax.random.split(key)
    x = jax.random.normal(kx, (B, E, T), dtype=jnp.float32)   # (batch, electrodes, time)
    params = init_params(kp)

    fwd = jax.jit(lambda xx: dse_tam_forward(xx, params))
    out = fwd(x)
    out = jax.block_until_ready(out)

    assert out.shape == (B, NCLS)
    assert bool(jnp.all(jnp.isfinite(out)))
    # rows of a softmax must sum to 1
    assert bool(jnp.all(jnp.abs(jnp.sum(out, axis=1) - 1.0) < 1e-4))
    print("KERNEL_OK")
</pallas_src>

<mosaic_0001>
module attributes {stable_mosaic.version = 11 : i64} {
  func.func @kernel(%arg0: memref<32x16xf32, #tpu.memory_space<vmem>>, %arg1: memref<816x144xbf16, #tpu.memory_space<vmem>>, %arg2: memref<688x96xf32, #tpu.memory_space<vmem>>, %arg3: memref<2x3xf32, #tpu.memory_space<vmem>>, %arg4: memref<144x64xf32, #tpu.memory_space<vmem>>, %arg5: memref<144x64xf32, #tpu.memory_space<vmem>>, %arg6: memref<144x64xf32, #tpu.memory_space<vmem>>) attributes {dimension_semantics = [], scalar_prefetch = 0 : i64, scratch_operands = 3 : i64, tpu.core_type = #tpu.core_type<tc>} {
    %c0 = arith.constant 0 : index
    %c0_0 = arith.constant 0 : index
    %0 = vector.load %arg0[%c0, %c0_0] : memref<32x16xf32, #tpu.memory_space<vmem>>, vector<32x16xf32>
    %c0_1 = arith.constant 0 : index
    %c0_2 = arith.constant 0 : index
    %1 = vector.load %arg2[%c0_1, %c0_2] : memref<688x96xf32, #tpu.memory_space<vmem>>, vector<32x16xf32>
    %2 = arith.mulf %0, %1 : vector<32x16xf32>
    %c32 = arith.constant 32 : index
    %c0_3 = arith.constant 0 : index
    %3 = vector.load %arg2[%c32, %c0_3] : memref<688x96xf32, #tpu.memory_space<vmem>>, vector<32x16xf32>
    %4 = arith.addf %2, %3 : vector<32x16xf32>
    %c0_4 = arith.constant 0 : index
    %c0_5 = arith.constant 0 : index
    %5 = vector.load %arg1[%c0_4, %c0_5] : memref<816x144xbf16, #tpu.memory_space<vmem>>, vector<16x64xbf16>
    %6 = arith.truncf %4 : vector<32x16xf32> to vector<32x16xbf16>
    %cst = arith.constant dense<0.000000e+00> : vector<32x64xf32>
    %7 = tpu.matmul %6, %5, %cst {dimension_numbers = #tpu.dot_dimension_numbers<[1], [0], [0], [1], [0, 0, 1, 1], [], []>} : vector<32x16xbf16>, vector<16x64xbf16>, vector<32x64xf32> -> vector<32x64xf32>
    %c64 = arith.constant 64 : index
    %c0_6 = arith.constant 0 : index
    %8 = vector.load %arg2[%c64, %c0_6] : memref<688x96xf32, #tpu.memory_space<vmem>>, vector<1x64xf32>
    %9 = vector.broadcast %8 : vector<1x64xf32> to vector<32x64xf32>
    %10 = arith.addf %7, %9 : vector<32x64xf32>
    %11 = math.tanh %10 : vector<32x64xf32>
    %12 = arith.mulf %11, %11 : vector<32x64xf32>
    %c16 = arith.constant 16 : index
    %c0_7 = arith.constant 0 : index
    %13 = vector.load %arg1[%c16, %c0_7] : memref<816x144xbf16, #tpu.memory_space<vmem>>, vector<18x32xbf16>
    %14 = arith.truncf %12 : vector<32x64xf32> to vector<32x64xbf16>
    %cst_8 = arith.constant dense<0.000000e+00> : vector<18x64xf32>
    %15 = tpu.matmul %13, %14, %cst_8 {dimension_numbers = #tpu.dot_dimension_numbers<[1], [0], [0], [1], [0, 0, 1, 1], [], []>} : vector<18x32xbf16>, vector<32x64xbf16>, vector<18x64xf32> -> vector<18x64xf32>
    %16 = math.sqrt %15 : vector<18x64xf32>
    %17 = vector.extract_strided_slice %16 {offsets = [0, 0], sizes = [18, 32], strides = [1, 1]} : vector<18x64xf32> to vector<18x32xf32>
    %18 = vector.extract_strided_slice %16 {offsets = [0, 32], sizes = [18, 32], strides = [1, 1]} : vector<18x64xf32> to vector<18x32xf32>
    %19 = arith.addf %17, %18 : vector<18x32xf32>
    %c72 = arith.constant 72 : index
    %c0_9 = arith.constant 0 : index
    %20 = vector.load %arg2[%c72, %c0_9] : memref<688x96xf32, #tpu.memory_space<vmem>>, vector<18x32xf32>
    %cst_10 = arith.constant 0.000000e+00 : f32
    %21 = vector.broadcast %cst_10 : f32 to vector<18x32xf32>
    %22 = arith.maximumf %19, %21 : vector<18x32xf32>
    %23 = arith.addf %20, %22 : vector<18x32xf32>
    %c368 = arith.constant 368 : index
    %c0_11 = arith.constant 0 : index
    %24 = vector.load %arg1[%c368, %c0_11] : memref<816x144xbf16, #tpu.memory_space<vmem>>, vector<32x128xbf16>
    %25 = arith.truncf %23 : vector<18x32xf32> to vector<18x32xbf16>
    %cst_12 = arith.constant dense<0.000000e+00> : vector<18x128xf32>
    %26 = tpu.matmul %25, %24, %cst_12 {dimension_numbers = #tpu.dot_dimension_numbers<[1], [0], [0], [1], [0, 0, 1, 1], [], []>} : vector<18x32xbf16>, vector<32x128xbf16>, vector<18x128xf32> -> vector<18x128xf32>
    %27 = vector.extract_strided_slice %26 {offsets = [0, 0], sizes = [18, 64], strides = [1, 1]} : vector<18x128xf32> to vector<18x64xf32>
    %28 = vector.extract_strided_slice %26 {offsets = [0, 64], sizes = [18, 64], strides = [1, 1]} : vector<18x128xf32> to vector<18x64xf32>
    %c272 = arith.constant 272 : index
    %c0_13 = arith.constant 0 : index
    %29 = vector.load %arg2[%c272, %c0_13] : memref<688x96xf32, #tpu.memory_space<vmem>>, vector<4x64xf32>
    %30 = arith.truncf %27 : vector<18x64xf32> to vector<18x64xbf16>
    %31 = vector.extract_strided_slice %29 {offsets = [3, 0], sizes = [1, 64], strides = [1, 1]} : vector<4x64xf32> to vector<1x64xf32>
    %32 = vector.broadcast %31 : vector<1x64xf32> to vector<18x64xf32>
    %33 = arith.mulf %27, %32 : vector<18x64xf32>
    %c272_14 = arith.constant 272 : index
    %c0_15 = arith.constant 0 : index
    %34 = vector.load %arg1[%c272_14, %c0_15] : memref<816x144xbf16, #tpu.memory_space<vmem>>, vector<18x18xbf16>
    %cst_16 = arith.constant dense<0.000000e+00> : vector<18x64xf32>
    %35 = tpu.matmul %34, %30, %cst_16 {dimension_numbers = #tpu.dot_dimension_numbers<[1], [0], [0], [1], [0, 0, 1, 1], [], []>} : vector<18x18xbf16>, vector<18x64xbf16>, vector<18x64xf32> -> vector<18x64xf32>
    %36 = vector.extract_strided_slice %29 {offsets = [2, 0], sizes = [1, 64], strides = [1, 1]} : vector<4x64xf32> to vector<1x64xf32>
    %37 = vector.broadcast %36 : vector<1x64xf32> to vector<18x64xf32>
    %38 = arith.mulf %35, %37 : vector<18x64xf32>
    %39 = arith.addf %33, %38 : vector<18x64xf32>
    %c304 = arith.constant 304 : index
    %c0_17 = arith.constant 0 : index
    %40 = vector.load %arg1[%c304, %c0_17] : memref<816x144xbf16, #tpu.memory_space<vmem>>, vector<18x18xbf16>
    %cst_18 = arith.constant dense<0.000000e+00> : vector<18x64xf32>
    %41 = tpu.matmul %40, %30, %cst_18 {dimension_numbers = #tpu.dot_dimension_numbers<[1], [0], [0], [1], [0, 0, 1, 1], [], []>} : vector<18x18xbf16>, vector<18x64xbf16>, vector<18x64xf32> -> vector<18x64xf32>
    %42 = vector.extract_strided_slice %29 {offsets = [1, 0], sizes = [1, 64], strides = [1, 1]} : vector<4x64xf32> to vector<1x64xf32>
    %43 = vector.broadcast %42 : vector<1x64xf32> to vector<18x64xf32>
    %44 = arith.mulf %41, %43 : vector<18x64xf32>
    %45 = arith.addf %39, %44 : vector<18x64xf32>
    %c336 = arith.constant 336 : index
    %c0_19 = arith.constant 0 : index
    %46 = vector.load %arg1[%c336, %c0_19] : memref<816x144xbf16, #tpu.memory_space<vmem>>, vector<18x18xbf16>
    %cst_20 = arith.constant dense<0.000000e+00> : vector<18x64xf32>
    %47 = tpu.matmul %46, %30, %cst_20 {dimension_numbers = #tpu.dot_dimension_numbers<[1], [0], [0], [1], [0, 0, 1, 1], [], []>} : vector<18x18xbf16>, vector<18x64xbf16>, vector<18x64xf32> -> vector<18x64xf32>
    %48 = vector.extract_strided_slice %29 {offsets = [0, 0], sizes = [1, 64], strides = [1, 1]} : vector<4x64xf32> to vector<1x64xf32>
    %49 = vector.broadcast %48 : vector<1x64xf32> to vector<18x64xf32>
    %50 = arith.mulf %47, %49 : vector<18x64xf32>
    %51 = arith.addf %45, %50 : vector<18x64xf32>
    %c280 = arith.constant 280 : index
    %c0_21 = arith.constant 0 : index
    %52 = vector.load %arg2[%c280, %c0_21] : memref<688x96xf32, #tpu.memory_space<vmem>>, vector<1x64xf32>
    %53 = vector.broadcast %52 : vector<1x64xf32> to vector<18x64xf32>
    %54 = arith.addf %51, %53 : vector<18x64xf32>
    %cst_22 = arith.constant 0.000000e+00 : f32
    %55 = vector.broadcast %cst_22 : f32 to vector<18x64xf32>
    %56 = arith.subf %55, %54 : vector<18x64xf32>
    %57 = math.exp %56 : vector<18x64xf32>
    %cst_23 = arith.constant 1.000000e+00 : f32
    %58 = vector.broadcast %cst_23 : f32 to vector<18x64xf32>
    %59 = arith.addf %58, %57 : vector<18x64xf32>
    %cst_24 = arith.constant 1.000000e+00 : f32
    %60 = vector.broadcast %cst_24 : f32 to vector<18x64xf32>
    %61 = arith.divf %60, %59 : vector<18x64xf32>
    %62 = arith.mulf %54, %61 : vector<18x64xf32>
    %c400 = arith.constant 400 : index
    %c0_25 = arith.constant 0 : index
    %63 = vector.load %arg1[%c400, %c0_25] : memref<816x144xbf16, #tpu.memory_space<vmem>>, vector<64x18xbf16>
    %64 = arith.truncf %62 : vector<18x64xf32> to vector<18x64xbf16>
    %cst_26 = arith.constant dense<0.000000e+00> : vector<18x18xf32>
    %65 = tpu.matmul %64, %63, %cst_26 {dimension_numbers = #tpu.dot_dimension_numbers<[1], [0], [0], [1], [0, 0, 1, 1], [], []>} : vector<18x64xbf16>, vector<64x18xbf16>, vector<18x18xf32> -> vector<18x18xf32>
    %66 = vector.extract_strided_slice %65 {offsets = [0, 0], sizes = [18, 2], strides = [1, 1]} : vector<18x18xf32> to vector<18x2xf32>
    %c464 = arith.constant 464 : index
    %c0_27 = arith.constant 0 : index
    %67 = vector.load %arg1[%c464, %c0_27] : memref<816x144xbf16, #tpu.memory_space<vmem>>, vector<2x64xbf16>
    %68 = arith.truncf %66 : vector<18x2xf32> to vector<18x2xbf16>
    %cst_28 = arith.constant dense<0.000000e+00> : vector<18x64xf32>
    %69 = tpu.matmul %68, %67, %cst_28 {dimension_numbers = #tpu.dot_dimension_numbers<[1], [0], [0], [1], [0, 0, 1, 1], [], []>} : vector<18x2xbf16>, vector<2x64xbf16>, vector<18x64xf32> -> vector<18x64xf32>
    %c288 = arith.constant 288 : index
    %c0_29 = arith.constant 0 : index
    %70 = vector.load %arg2[%c288, %c0_29] : memref<688x96xf32, #tpu.memory_space<vmem>>, vector<1x64xf32>
    %71 = vector.broadcast %70 : vector<1x64xf32> to vector<18x64xf32>
    %72 = arith.addf %69, %71 : vector<18x64xf32>
    %cst_30 = arith.constant 0.000000e+00 : f32
    %73 = vector.broadcast %cst_30 : f32 to vector<18x64xf32>
    %74 = arith.maximumf %72, %73 : vector<18x64xf32>
    %75 = math.absf %72 : vector<18x64xf32>
    %cst_31 = arith.constant 0.000000e+00 : f32
    %76 = vector.broadcast %cst_31 : f32 to vector<18x64xf32>
    %77 = arith.subf %76, %75 : vector<18x64xf32>
    %78 = math.exp %77 : vector<18x64xf32>
    %cst_32 = arith.constant 1.000000e+00 : f32
    %79 = vector.broadcast %cst_32 : f32 to vector<18x64xf32>
    %80 = arith.addf %79, %78 : vector<18x64xf32>
    %81 = math.log %80 : vector<18x64xf32>
    %82 = arith.addf %74, %81 : vector<18x64xf32>
    %83 = vector.extract_strided_slice %65 {offsets = [0, 2], sizes = [18, 8], strides = [1, 1]} : vector<18x18xf32> to vector<18x8xf32>
    %84 = vector.extract_strided_slice %65 {offsets = [0, 10], sizes = [18, 8], strides = [1, 1]} : vector<18x18xf32> to vector<18x8xf32>
    %c48 = arith.constant 48 : index
    %c0_33 = arith.constant 0 : index
    %85 = vector.load %arg1[%c48, %c0_33] : memref<816x144xbf16, #tpu.memory_space<vmem>>, vector<144x18xbf16>
    %c120 = arith.constant 120 : index
    %c0_34 = arith.constant 0 : index
    %86 = vector.load %arg2[%c120, %c0_34] : memref<688x96xf32, #tpu.memory_space<vmem>>, vector<144x8xf32>
    %87 = arith.truncf %82 : vector<18x64xf32> to vector<18x64xbf16>
    %cst_35 = arith.constant dense<0.000000e+00> : vector<144x64xf32>
    %88 = tpu.matmul %85, %87, %cst_35 {dimension_numbers = #tpu.dot_dimension_numbers<[1], [0], [0], [1], [0, 0, 1, 1], [], []>} : vector<144x18xbf16>, vector<18x64xbf16>, vector<144x64xf32> -> vector<144x64xf32>
    %89 = arith.mulf %82, %62 : vector<18x64xf32>
    %90 = arith.truncf %89 : vector<18x64xf32> to vector<18x64xbf16>
    %cst_36 = arith.constant dense<0.000000e+00> : vector<144x64xf32>
    %91 = tpu.matmul %85, %90, %cst_36 {dimension_numbers = #tpu.dot_dimension_numbers<[1], [0], [0], [1], [0, 0, 1, 1], [], []>} : vector<144x18xbf16>, vector<18x64xbf16>, vector<144x64xf32> -> vector<144x64xf32>
    %92 = arith.truncf %83 : vector<18x8xf32> to vector<18x8xbf16>
    %cst_37 = arith.constant dense<0.000000e+00> : vector<144x8xf32>
    %93 = tpu.matmul %85, %92, %cst_37 {dimension_numbers = #tpu.dot_dimension_numbers<[1], [0], [0], [1], [0, 0, 1, 1], [], []>} : vector<144x18xbf16>, vector<18x8xbf16>, vector<144x8xf32> -> vector<144x8xf32>
    %94 = arith.mulf %93, %86 : vector<144x8xf32>
    %cst_38 = arith.constant dense<0.000000e+00> : vector<144xf32>
    %95 = vector.multi_reduction <add>, %94, %cst_38 [1] : vector<144x8xf32> to vector<144xf32>
    %96 = vector.shape_cast %95 : vector<144xf32> to vector<144x1xf32>
    %c304_39 = arith.constant 304 : index
    %c0_40 = arith.constant 0 : index
    %97 = vector.load %arg2[%c304_39, %c0_40] : memref<688x96xf32, #tpu.memory_space<vmem>>, vector<144x64xf32>
    %98 = arith.mulf %88, %97 : vector<144x64xf32>
    %99 = math.exp %98 : vector<144x64xf32>
    %c0_41 = arith.constant 0 : index
    %c0_42 = arith.constant 0 : index
    %100 = vector.load %arg4[%c0_41, %c0_42] : memref<144x64xf32, #tpu.memory_space<vmem>>, vector<144x64xf32>
    tpu.vector_store %arg4[%c0_41, %c0_42], %99 {strides = array<i32>} : memref<144x64xf32, #tpu.memory_space<vmem>>, vector<144x64xf32>,
    %101 = vector.broadcast %96 : vector<144x1xf32> to vector<144x64xf32>
    %102 = arith.mulf %91, %101 : vector<144x64xf32>
    %c0_43 = arith.constant 0 : index
    %c0_44 = arith.constant 0 : index
    %103 = vector.load %arg5[%c0_43, %c0_44] : memref<144x64xf32, #tpu.memory_space<vmem>>, vector<144x64xf32>
    tpu.vector_store %arg5[%c0_43, %c0_44], %102 {strides = array<i32>} : memref<144x64xf32, #tpu.memory_space<vmem>>, vector<144x64xf32>,
    %cst_45 = arith.constant 0.000000e+00 : f32
    %104 = vector.broadcast %cst_45 : f32 to vector<16x64xf32>
    %c0_46 = arith.constant 0 : index
    %c0_47 = arith.constant 0 : index
    %105 = vector.load %arg4[%c0_46, %c0_47] : memref<144x64xf32, #tpu.memory_space<vmem>>, vector<16x64xf32>
    %106 = arith.mulf %105, %104 : vector<16x64xf32>
    %c0_48 = arith.constant 0 : index
    %c0_49 = arith.constant 0 : index
    %107 = vector.load %arg5[%c0_48, %c0_49] : memref<144x64xf32, #tpu.memory_space<vmem>>, vector<16x64xf32>
    %108 = arith.addf %106, %107 : vector<16x64xf32>
    %c0_50 = arith.constant 0 : index
    %c0_51 = arith.constant 0 : index
    %109 = vector.load %arg6[%c0_50, %c0_51] : memref<144x64xf32, #tpu.memory_space<vmem>>, vector<16x64xf32>
    tpu.vector_store %arg6[%c0_50, %c0_51], %108 {strides = array<i32>} : memref<144x64xf32, #tpu.memory_space<vmem>>, vector<16x64xf32>,
    %c16_52 = arith.constant 16 : index
    %c0_53 = arith.constant 0 : index
    %110 = vector.load %arg4[%c16_52, %c0_53] : memref<144x64xf32, #tpu.memory_space<vmem>>, vector<16x64xf32>
    %111 = arith.mulf %110, %108 : vector<16x64xf32>
    %c16_54 = arith.constant 16 : index
    %c0_55 = arith.constant 0 : index
    %112 = vector.load %arg5[%c16_54, %c0_55] : memref<144x64xf32, #tpu.memory_space<vmem>>, vector<16x64xf32>
    %113 = arith.addf %111, %112 : vector<16x64xf32>
    %c16_56 = arith.constant 16 : index
    %c0_57 = arith.constant 0 : index
    %114 = vector.load %arg6[%c16_56, %c0_57] : memref<144x64xf32, #tpu.memory_space<vmem>>, vector<16x64xf32>
    tpu.vector_store %arg6[%c16_56, %c0_57], %113 {strides = array<i32>} : memref<144x64xf32, #tpu.memory_space<vmem>>, vector<16x64xf32>,
    %c32_58 = arith.constant 32 : index
    %c0_59 = arith.constant 0 : index
    %115 = vector.load %arg4[%c32_58, %c0_59] : memref<144x64xf32, #tpu.memory_space<vmem>>, vector<16x64xf32>
    %116 = arith.mulf %115, %113 : vector<16x64xf32>
    %c32_60 = arith.constant 32 : index
    %c0_61 = arith.constant 0 : index
    %117 = vector.load %arg5[%c32_60, %c0_61] : memref<144x64xf32, #tpu.memory_space<vmem>>, vector<16x64xf32>
    %118 = arith.addf %116, %117 : vector<16x64xf32>
    %c32_62 = arith.constant 32 : index
    %c0_63 = arith.constant 0 : index
    %119 = vector.load %arg6[%c32_62, %c0_63] : memref<144x64xf32, #tpu.memory_space<vmem>>, vector<16x64xf32>
    tpu.vector_store %arg6[%c32_62, %c0_63], %118 {strides = array<i32>} : memref<144x64xf32, #tpu.memory_space<vmem>>, vector<16x64xf32>,
    %c48_64 = arith.constant 48 : index
    %c0_65 = arith.constant 0 : index
    %120 = vector.load %arg4[%c48_64, %c0_65] : memref<144x64xf32, #tpu.memory_space<vmem>>, vector<16x64xf32>
    %121 = arith.mulf %120, %118 : vector<16x64xf32>
    %c48_66 = arith.constant 48 : index
    %c0_67 = arith.constant 0 : index
    %122 = vector.load %arg5[%c48_66, %c0_67] : memref<144x64xf32, #tpu.memory_space<vmem>>, vector<16x64xf32>
    %123 = arith.addf %121, %122 : vector<16x64xf32>
    %c48_68 = arith.constant 48 : index
    %c0_69 = arith.constant 0 : index
    %124 = vector.load %arg6[%c48_68, %c0_69] : memref<144x64xf32, #tpu.memory_space<vmem>>, vector<16x64xf32>
    tpu.vector_store %arg6[%c48_68, %c0_69], %123 {strides = array<i32>} : memref<144x64xf32, #tpu.memory_space<vmem>>, vector<16x64xf32>,
    %c64_70 = arith.constant 64 : index
    %c0_71 = arith.constant 0 : index
    %125 = vector.load %arg4[%c64_70, %c0_71] : memref<144x64xf32, #tpu.memory_space<vmem>>, vector<16x64xf32>
    %126 = arith.mulf %125, %123 : vector<16x64xf32>
    %c64_72 = arith.constant 64 : index
    %c0_73 = arith.constant 0 : index
    %127 = vector.load %arg5[%c64_72, %c0_73] : memref<144x64xf32, #tpu.memory_space<vmem>>, vector<16x64xf32>
    %128 = arith.addf %126, %127 : vector<16x64xf32>
    %c64_74 = arith.constant 64 : index
    %c0_75 = arith.constant 0 : index
    %129 = vector.load %arg6[%c64_74, %c0_75] : memref<144x64xf32, #tpu.memory_space<vmem>>, vector<16x64xf32>
    tpu.vector_store %arg6[%c64_74, %c0_75], %128 {strides = array<i32>} : memref<144x64xf32, #tpu.memory_space<vmem>>, vector<16x64xf32>,
    %c80 = arith.constant 80 : index
    %c0_76 = arith.constant 0 : index
    %130 = vector.load %arg4[%c80, %c0_76] : memref<144x64xf32, #tpu.memory_space<vmem>>, vector<16x64xf32>
    %131 = arith.mulf %130, %128 : vector<16x64xf32>
    %c80_77 = arith.constant 80 : index
    %c0_78 = arith.constant 0 : index
    %132 = vector.load %arg5[%c80_77, %c0_78] : memref<144x64xf32, #tpu.memory_space<vmem>>, vector<16x64xf32>
    %133 = arith.addf %131, %132 : vector<16x64xf32>
    %c80_79 = arith.constant 80 : index
    %c0_80 = arith.constant 0 : index
    %134 = vector.load %arg6[%c80_79, %c0_80] : memref<144x64xf32, #tpu.memory_space<vmem>>, vector<16x64xf32>
    tpu.vector_store %arg6[%c80_79, %c0_80], %133 {strides = array<i32>} : memref<144x64xf32, #tpu.memory_space<vmem>>, vector<16x64xf32>,
    %c96 = arith.constant 96 : index
    %c0_81 = arith.constant 0 : index
    %135 = vector.load %arg4[%c96, %c0_81] : memref<144x64xf32, #tpu.memory_space<vmem>>, vector<16x64xf32>
    %136 = arith.mulf %135, %133 : vector<16x64xf32>
    %c96_82 = arith.constant 96 : index
    %c0_83 = arith.constant 0 : index
    %137 = vector.load %arg5[%c96_82, %c0_83] : memref<144x64xf32, #tpu.memory_space<vmem>>, vector<16x64xf32>
    %138 = arith.addf %136, %137 : vector<16x64xf32>
    %c96_84 = arith.constant 96 : index
    %c0_85 = arith.constant 0 : index
    %139 = vector.load %arg6[%c96_84, %c0_85] : memref<144x64xf32, #tpu.memory_space<vmem>>, vector<16x64xf32>
    tpu.vector_store %arg6[%c96_84, %c0_85], %138 {strides = array<i32>} : memref<144x64xf32, #tpu.memory_space<vmem>>, vector<16x64xf32>,
    %c112 = arith.constant 112 : index
    %c0_86 = arith.constant 0 : index
    %140 = vector.load %arg4[%c112, %c0_86] : memref<144x64xf32, #tpu.memory_space<vmem>>, vector<16x64xf32>
    %141 = arith.mulf %140, %138 : vector<16x64xf32>
    %c112_87 = arith.constant 112 : index
    %c0_88 = arith.constant 0 : index
    %142 = vector.load %arg5[%c112_87, %c0_88] : memref<144x64xf32, #tpu.memory_space<vmem>>, vector<16x64xf32>
    %143 = arith.addf %141, %142 : vector<16x64xf32>
    %c112_89 = arith.constant 112 : index
    %c0_90 = arith.constant 0 : index
    %144 = vector.load %arg6[%c112_89, %c0_90] : memref<144x64xf32, #tpu.memory_space<vmem>>, vector<16x64xf32>
    tpu.vector_store %arg6[%c112_89, %c0_90], %143 {strides = array<i32>} : memref<144x64xf32, #tpu.memory_space<vmem>>, vector<16x64xf32>,
    %c128 = arith.constant 128 : index
    %c0_91 = arith.constant 0 : index
    %145 = vector.load %arg4[%c128, %c0_91] : memref<144x64xf32, #tpu.memory_space<vmem>>, vector<16x64xf32>
    %146 = arith.mulf %145, %143 : vector<16x64xf32>
    %c128_92 = arith.constant 128 : index
    %c0_93 = arith.constant 0 : index
    %147 = vector.load %arg5[%c128_92, %c0_93] : memref<144x64xf32, #tpu.memory_space<vmem>>, vector<16x64xf32>
    %148 = arith.addf %146, %147 : vector<16x64xf32>
    %c128_94 = arith.constant 128 : index
    %c0_95 = arith.constant 0 : index
    %149 = vector.load %arg6[%c128_94, %c0_95] : memref<144x64xf32, #tpu.memory_space<vmem>>, vector<16x64xf32>
    tpu.vector_store %arg6[%c128_94, %c0_95], %148 {strides = array<i32>} : memref<144x64xf32, #tpu.memory_space<vmem>>, vector<16x64xf32>,
    %150 = arith.truncf %84 : vector<18x8xf32> to vector<18x8xbf16>
    %cst_96 = arith.constant dense<0.000000e+00> : vector<144x8xf32>
    %151 = tpu.matmul %85, %150, %cst_96 {dimension_numbers = #tpu.dot_dimension_numbers<[1], [0], [0], [1], [0, 0, 1, 1], [], []>} : vector<144x18xbf16>, vector<18x8xbf16>, vector<144x8xf32> -> vector<144x8xf32>
    %152 = arith.mulf %151, %86 : vector<144x8xf32>
    %cst_97 = arith.constant dense<0.000000e+00> : vector<144xf32>
    %153 = vector.multi_reduction <add>, %152, %cst_97 [1] : vector<144x8xf32> to vector<144xf32>
    %154 = vector.shape_cast %153 : vector<144xf32> to vector<144x1xf32>
    %c0_98 = arith.constant 0 : index
    %c0_99 = arith.constant 0 : index
    %155 = vector.load %arg6[%c0_98, %c0_99] : memref<144x64xf32, #tpu.memory_space<vmem>>, vector<144x64xf32>
    %156 = vector.broadcast %154 : vector<144x1xf32> to vector<144x64xf32>
    %157 = arith.mulf %155, %156 : vector<144x64xf32>
    %c192 = arith.constant 192 : index
    %c0_100 = arith.constant 0 : index
    %158 = vector.load %arg1[%c192, %c0_100] : memref<816x144xbf16, #tpu.memory_space<vmem>>, vector<18x144xbf16>
    %159 = arith.truncf %157 : vector<144x64xf32> to vector<144x64xbf16>
    %cst_101 = arith.constant dense<0.000000e+00> : vector<18x64xf32>
    %160 = tpu.matmul %158, %159, %cst_101 {dimension_numbers = #tpu.dot_dimension_numbers<[1], [0], [0], [1], [0, 0, 1, 1], [], []>} : vector<18x144xbf16>, vector<144x64xbf16>, vector<18x64xf32> -> vector<18x64xf32>
    %c296 = arith.constant 296 : index
    %c0_102 = arith.constant 0 : index
    %161 = vector.load %arg2[%c296, %c0_102] : memref<688x96xf32, #tpu.memory_space<vmem>>, vector<1x64xf32>
    %162 = vector.broadcast %161 : vector<1x64xf32> to vector<18x64xf32>
    %163 = arith.mulf %162, %62 : vector<18x64xf32>
    %164 = arith.addf %160, %163 : vector<18x64xf32>
    %cst_103 = arith.constant 0.000000e+00 : f32
    %165 = vector.broadcast %cst_103 : f32 to vector<18x64xf32>
    %166 = arith.subf %165, %28 : vector<18x64xf32>
    %167 = math.exp %166 : vector<18x64xf32>
    %cst_104 = arith.constant 1.000000e+00 : f32
    %168 = vector.broadcast %cst_104 : f32 to vector<18x64xf32>
    %169 = arith.addf %168, %167 : vector<18x64xf32>
    %cst_105 = arith.constant 1.000000e+00 : f32
    %170 = vector.broadcast %cst_105 : f32 to vector<18x64xf32>
    %171 = arith.divf %170, %169 : vector<18x64xf32>
    %172 = arith.mulf %28, %171 : vector<18x64xf32>
    %173 = arith.mulf %164, %172 : vector<18x64xf32>
    %c480 = arith.constant 480 : index
    %c0_106 = arith.constant 0 : index
    %174 = vector.load %arg1[%c480, %c0_106] : memref<816x144xbf16, #tpu.memory_space<vmem>>, vector<64x32xbf16>
    %175 = arith.truncf %173 : vector<18x64xf32> to vector<18x64xbf16>
    %cst_107 = arith.constant dense<0.000000e+00> : vector<18x32xf32>
    %176 = tpu.matmul %175, %174, %cst_107 {dimension_numbers = #tpu.dot_dimension_numbers<[1], [0], [0], [1], [0, 0, 1, 1], [], []>} : vector<18x64xbf16>, vector<64x32xbf16>, vector<18x32xf32> -> vector<18x32xf32>
    %177 = arith.addf %23, %176 : vector<18x32xf32>
    %c448 = arith.constant 448 : index
    %c0_108 = arith.constant 0 : index
    %178 = vector.load %arg2[%c448, %c0_108] : memref<688x96xf32, #tpu.memory_space<vmem>>, vector<1x32xf32>
    %c456 = arith.constant 456 : index
    %c0_109 = arith.constant 0 : index
    %179 = vector.load %arg2[%c456, %c0_109] : memref<688x96xf32, #tpu.memory_space<vmem>>, vector<1x32xf32>
    %cst_110 = arith.constant dense<0.000000e+00> : vector<18xf32>
    %180 = vector.multi_reduction <add>, %177, %cst_110 [1] : vector<18x32xf32> to vector<18xf32>
    %181 = vector.shape_cast %180 : vector<18xf32> to vector<18x1xf32>
    %cst_111 = arith.constant 3.200000e+01 : f32
    %182 = vector.broadcast %cst_111 : f32 to vector<18x1xf32>
    %183 = arith.divf %181, %182 : vector<18x1xf32>
    %184 = vector.broadcast %183 : vector<18x1xf32> to vector<18x32xf32>
    %185 = arith.subf %177, %184 : vector<18x32xf32>
    %186 = arith.mulf %185, %185 : vector<18x32xf32>
    %cst_112 = arith.constant dense<0.000000e+00> : vector<18xf32>
    %187 = vector.multi_reduction <add>, %186, %cst_112 [1] : vector<18x32xf32> to vector<18xf32>
    %188 = vector.shape_cast %187 : vector<18xf32> to vector<18x1xf32>
    %cst_113 = arith.constant 3.200000e+01 : f32
    %189 = vector.broadcast %cst_113 : f32 to vector<18x1xf32>
    %190 = arith.divf %188, %189 : vector<18x1xf32>
    %191 = vector.broadcast %183 : vector<18x1xf32> to vector<18x32xf32>
    %192 = arith.subf %177, %191 : vector<18x32xf32>
    %cst_114 = arith.constant 9.99999974E-6 : f32
    %193 = vector.broadcast %cst_114 : f32 to vector<18x1xf32>
    %194 = arith.addf %190, %193 : vector<18x1xf32>
    %195 = math.rsqrt %194 : vector<18x1xf32>
    %196 = vector.broadcast %195 : vector<18x1xf32> to vector<18x32xf32>
    %197 = arith.mulf %192, %196 : vector<18x32xf32>
    %198 = vector.broadcast %178 : vector<1x32xf32> to vector<18x32xf32>
    %199 = arith.mulf %197, %198 : vector<18x32xf32>
    %200 = vector.broadcast %179 : vector<1x32xf32> to vector<18x32xf32>
    %201 = arith.addf %199, %200 : vector<18x32xf32>
    %c544 = arith.constant 544 : index
    %c0_115 = arith.constant 0 : index
    %202 = vector.load %arg1[%c544, %c0_115] : memref<816x144xbf16, #tpu.memory_space<vmem>>, vector<32x96xbf16>
    %203 = arith.truncf %201 : vector<18x32xf32> to vector<18x32xbf16>
    %cst_116 = arith.constant dense<0.000000e+00> : vector<18x96xf32>
    %204 = tpu.matmul %203, %202, %cst_116 {dimension_numbers = #tpu.dot_dimension_numbers<[1], [0], [0], [1], [0, 0, 1, 1], [], []>} : vector<18x32xbf16>, vector<32x96xbf16>, vector<18x96xf32> -> vector<18x96xf32>
    %c464_117 = arith.constant 464 : index
    %c0_118 = arith.constant 0 : index
    %205 = vector.load %arg2[%c464_117, %c0_118] : memref<688x96xf32, #tpu.memory_space<vmem>>, vector<1x96xf32>
    %206 = vector.broadcast %205 : vector<1x96xf32> to vector<18x96xf32>
    %207 = arith.addf %204, %206 : vector<18x96xf32>
    %c96_119 = arith.constant 96 : index
    %c0_120 = arith.constant 0 : index
    %208 = vector.load %arg2[%c96_119, %c0_120] : memref<688x96xf32, #tpu.memory_space<vmem>>, vector<18x18xf32>
    %209 = vector.extract_strided_slice %207 {offsets = [0, 0], sizes = [18, 8], strides = [1, 1]} : vector<18x96xf32> to vector<18x8xf32>
    %210 = arith.truncf %209 : vector<18x8xf32> to vector<18x8xbf16>
    %211 = vector.extract_strided_slice %207 {offsets = [0, 32], sizes = [18, 8], strides = [1, 1]} : vector<18x96xf32> to vector<18x8xf32>
    %212 = arith.truncf %211 : vector<18x8xf32> to vector<18x8xbf16>
    %213 = vector.extract_strided_slice %207 {offsets = [0, 64], sizes = [18, 8], strides = [1, 1]} : vector<18x96xf32> to vector<18x8xf32>
    %214 = arith.truncf %213 : vector<18x8xf32> to vector<18x8xbf16>
    %cst_121 = arith.constant dense<0.000000e+00> : vector<18x18xf32>
    %215 = tpu.matmul %210, %212, %cst_121 {dimension_numbers = #tpu.dot_dimension_numbers<[1], [1], [0], [0], [0, 0, 1, 0], [], []>} : vector<18x8xbf16>, vector<18x8xbf16>, vector<18x18xf32> -> vector<18x18xf32>
    %216 = arith.addf %215, %208 : vector<18x18xf32>
    %cst_122 = arith.constant dense<0xFF800000> : vector<18xf32>
    %217 = vector.multi_reduction <maximumf>, %216, %cst_122 [1] : vector<18x18xf32> to vector<18xf32>
    %218 = vector.shape_cast %217 : vector<18xf32> to vector<18x1xf32>
    %219 = vector.broadcast %218 : vector<18x1xf32> to vector<18x18xf32>
    %220 = arith.subf %216, %219 : vector<18x18xf32>
    %221 = math.exp %220 : vector<18x18xf32>
    %cst_123 = arith.constant dense<0.000000e+00> : vector<18xf32>
    %222 = vector.multi_reduction <add>, %221, %cst_123 [1] : vector<18x18xf32> to vector<18xf32>
    %223 = vector.shape_cast %222 : vector<18xf32> to vector<18x1xf32>
    %224 = vector.broadcast %223 : vector<18x1xf32> to vector<18x18xf32>
    %225 = arith.divf %221, %224 : vector<18x18xf32>
    %226 = arith.truncf %225 : vector<18x18xf32> to vector<18x18xbf16>
    %cst_124 = arith.constant dense<0.000000e+00> : vector<18x8xf32>
    %227 = tpu.matmul %226, %214, %cst_124 {dimension_numbers = #tpu.dot_dimension_numbers<[1], [0], [0], [1], [0, 0, 1, 1], [], []>} : vector<18x18xbf16>, vector<18x8xbf16>, vector<18x8xf32> -> vector<18x8xf32>
    %c576 = arith.constant 576 : index
    %c0_125 = arith.constant 0 : index
    %228 = vector.load %arg1[%c576, %c0_125] : memref<816x144xbf16, #tpu.memory_space<vmem>>, vector<8x32xbf16>
    %229 = arith.truncf %227 : vector<18x8xf32> to vector<18x8xbf16>
    %cst_126 = arith.constant dense<0.000000e+00> : vector<18x32xf32>
    %230 = tpu.matmul %229, %228, %cst_126 {dimension_numbers = #tpu.dot_dimension_numbers<[1], [0], [0], [1], [0, 0, 1, 1], [], []>} : vector<18x8xbf16>, vector<8x32xbf16>, vector<18x32xf32> -> vector<18x32xf32>
    %231 = vector.extract_strided_slice %207 {offsets = [0, 8], sizes = [18, 8], strides = [1, 1]} : vector<18x96xf32> to vector<18x8xf32>
    %232 = arith.truncf %231 : vector<18x8xf32> to vector<18x8xbf16>
    %233 = vector.extract_strided_slice %207 {offsets = [0, 40], sizes = [18, 8], strides = [1, 1]} : vector<18x96xf32> to vector<18x8xf32>
    %234 = arith.truncf %233 : vector<18x8xf32> to vector<18x8xbf16>
    %235 = vector.extract_strided_slice %207 {offsets = [0, 72], sizes = [18, 8], strides = [1, 1]} : vector<18x96xf32> to vector<18x8xf32>
    %236 = arith.truncf %235 : vector<18x8xf32> to vector<18x8xbf16>
    %cst_127 = arith.constant dense<0.000000e+00> : vector<18x18xf32>
    %237 = tpu.matmul %232, %234, %cst_127 {dimension_numbers = #tpu.dot_dimension_numbers<[1], [1], [0], [0], [0, 0, 1, 0], [], []>} : vector<18x8xbf16>, vector<18x8xbf16>, vector<18x18xf32> -> vector<18x18xf32>
    %238 = arith.addf %237, %208 : vector<18x18xf32>
    %cst_128 = arith.constant dense<0xFF800000> : vector<18xf32>
    %239 = vector.multi_reduction <maximumf>, %238, %cst_128 [1] : vector<18x18xf32> to vector<18xf32>
    %240 = vector.shape_cast %239 : vector<18xf32> to vector<18x1xf32>
    %241 = vector.broadcast %240 : vector<18x1xf32> to vector<18x18xf32>
    %242 = arith.subf %238, %241 : vector<18x18xf32>
    %243 = math.exp %242 : vector<18x18xf32>
    %cst_129 = arith.constant dense<0.000000e+00> : vector<18xf32>
    %244 = vector.multi_reduction <add>, %243, %cst_129 [1] : vector<18x18xf32> to vector<18xf32>
    %245 = vector.shape_cast %244 : vector<18xf32> to vector<18x1xf32>
    %246 = vector.broadcast %245 : vector<18x1xf32> to vector<18x18xf32>
    %247 = arith.divf %243, %246 : vector<18x18xf32>
    %248 = arith.truncf %247 : vector<18x18xf32> to vector<18x18xbf16>
    %cst_130 = arith.constant dense<0.000000e+00> : vector<18x8xf32>
    %249 = tpu.matmul %248, %236, %cst_130 {dimension_numbers = #tpu.dot_dimension_numbers<[1], [0], [0], [1], [0, 0, 1, 1], [], []>} : vector<18x18xbf16>, vector<18x8xbf16>, vector<18x8xf32> -> vector<18x8xf32>
    %c592 = arith.constant 592 : index
    %c0_131 = arith.constant 0 : index
    %250 = vector.load %arg1[%c592, %c0_131] : memref<816x144xbf16, #tpu.memory_space<vmem>>, vector<8x32xbf16>
    %251 = arith.truncf %249 : vector<18x8xf32> to vector<18x8xbf16>
    %cst_132 = arith.constant dense<0.000000e+00> : vector<18x32xf32>
    %252 = tpu.matmul %251, %250, %cst_132 {dimension_numbers = #tpu.dot_dimension_numbers<[1], [0], [0], [1], [0, 0, 1, 1], [], []>} : vector<18x8xbf16>, vector<8x32xbf16>, vector<18x32xf32> -> vector<18x32xf32>
    %253 = arith.addf %230, %252 : vector<18x32xf32>
    %254 = vector.extract_strided_slice %207 {offsets = [0, 16], sizes = [18, 8], strides = [1, 1]} : vector<18x96xf32> to vector<18x8xf32>
    %255 = arith.truncf %254 : vector<18x8xf32> to vector<18x8xbf16>
    %256 = vector.extract_strided_slice %207 {offsets = [0, 48], sizes = [18, 8], strides = [1, 1]} : vector<18x96xf32> to vector<18x8xf32>
    %257 = arith.truncf %256 : vector<18x8xf32> to vector<18x8xbf16>
    %258 = vector.extract_strided_slice %207 {offsets = [0, 80], sizes = [18, 8], strides = [1, 1]} : vector<18x96xf32> to vector<18x8xf32>
    %259 = arith.truncf %258 : vector<18x8xf32> to vector<18x8xbf16>
    %cst_133 = arith.constant dense<0.000000e+00> : vector<18x18xf32>
    %260 = tpu.matmul %255, %257, %cst_133 {dimension_numbers = #tpu.dot_dimension_numbers<[1], [1], [0], [0], [0, 0, 1, 0], [], []>} : vector<18x8xbf16>, vector<18x8xbf16>, vector<18x18xf32> -> vector<18x18xf32>
    %261 = arith.addf %260, %208 : vector<18x18xf32>
    %cst_134 = arith.constant dense<0xFF800000> : vector<18xf32>
    %262 = vector.multi_reduction <maximumf>, %261, %cst_134 [1] : vector<18x18xf32> to vector<18xf32>
    %263 = vector.shape_cast %262 : vector<18xf32> to vector<18x1xf32>
    %264 = vector.broadcast %263 : vector<18x1xf32> to vector<18x18xf32>
    %265 = arith.subf %261, %264 : vector<18x18xf32>
    %266 = math.exp %265 : vector<18x18xf32>
    %cst_135 = arith.constant dense<0.000000e+00> : vector<18xf32>
    %267 = vector.multi_reduction <add>, %266, %cst_135 [1] : vector<18x18xf32> to vector<18xf32>
    %268 = vector.shape_cast %267 : vector<18xf32> to vector<18x1xf32>
    %269 = vector.broadcast %268 : vector<18x1xf32> to vector<18x18xf32>
    %270 = arith.divf %266, %269 : vector<18x18xf32>
    %271 = arith.truncf %270 : vector<18x18xf32> to vector<18x18xbf16>
    %cst_136 = arith.constant dense<0.000000e+00> : vector<18x8xf32>
    %272 = tpu.matmul %271, %259, %cst_136 {dimension_numbers = #tpu.dot_dimension_numbers<[1], [0], [0], [1], [0, 0, 1, 1], [], []>} : vector<18x18xbf16>, vector<18x8xbf16>, vector<18x8xf32> -> vector<18x8xf32>
    %c608 = arith.constant 608 : index
    %c0_137 = arith.constant 0 : index
    %273 = vector.load %arg1[%c608, %c0_137] : memref<816x144xbf16, #tpu.memory_space<vmem>>, vector<8x32xbf16>
    %274 = arith.truncf %272 : vector<18x8xf32> to vector<18x8xbf16>
    %cst_138 = arith.constant dense<0.000000e+00> : vector<18x32xf32>
    %275 = tpu.matmul %274, %273, %cst_138 {dimension_numbers = #tpu.dot_dimension_numbers<[1], [0], [0], [1], [0, 0, 1, 1], [], []>} : vector<18x8xbf16>, vector<8x32xbf16>, vector<18x32xf32> -> vector<18x32xf32>
    %276 = arith.addf %253, %275 : vector<18x32xf32>
    %277 = vector.extract_strided_slice %207 {offsets = [0, 24], sizes = [18, 8], strides = [1, 1]} : vector<18x96xf32> to vector<18x8xf32>
    %278 = arith.truncf %277 : vector<18x8xf32> to vector<18x8xbf16>
    %279 = vector.extract_strided_slice %207 {offsets = [0, 56], sizes = [18, 8], strides = [1, 1]} : vector<18x96xf32> to vector<18x8xf32>
    %280 = arith.truncf %279 : vector<18x8xf32> to vector<18x8xbf16>
    %281 = vector.extract_strided_slice %207 {offsets = [0, 88], sizes = [18, 8], strides = [1, 1]} : vector<18x96xf32> to vector<18x8xf32>
    %282 = arith.truncf %281 : vector<18x8xf32> to vector<18x8xbf16>
    %cst_139 = arith.constant dense<0.000000e+00> : vector<18x18xf32>
    %283 = tpu.matmul %278, %280, %cst_139 {dimension_numbers = #tpu.dot_dimension_numbers<[1], [1], [0], [0], [0, 0, 1, 0], [], []>} : vector<18x8xbf16>, vector<18x8xbf16>, vector<18x18xf32> -> vector<18x18xf32>
    %284 = arith.addf %283, %208 : vector<18x18xf32>
    %cst_140 = arith.constant dense<0xFF800000> : vector<18xf32>
    %285 = vector.multi_reduction <maximumf>, %284, %cst_140 [1] : vector<18x18xf32> to vector<18xf32>
    %286 = vector.shape_cast %285 : vector<18xf32> to vector<18x1xf32>
    %287 = vector.broadcast %286 : vector<18x1xf32> to vector<18x18xf32>
    %288 = arith.subf %284, %287 : vector<18x18xf32>
    %289 = math.exp %288 : vector<18x18xf32>
    %cst_141 = arith.constant dense<0.000000e+00> : vector<18xf32>
    %290 = vector.multi_reduction <add>, %289, %cst_141 [1] : vector<18x18xf32> to vector<18xf32>
    %291 = vector.shape_cast %290 : vector<18xf32> to vector<18x1xf32>
    %292 = vector.broadcast %291 : vector<18x1xf32> to vector<18x18xf32>
    %293 = arith.divf %289, %292 : vector<18x18xf32>
    %294 = arith.truncf %293 : vector<18x18xf32> to vector<18x18xbf16>
    %cst_142 = arith.constant dense<0.000000e+00> : vector<18x8xf32>
    %295 = tpu.matmul %294, %282, %cst_142 {dimension_numbers = #tpu.dot_dimension_numbers<[1], [0], [0], [1], [0, 0, 1, 1], [], []>} : vector<18x18xbf16>, vector<18x8xbf16>, vector<18x8xf32> -> vector<18x8xf32>
    %c624 = arith.constant 624 : index
    %c0_143 = arith.constant 0 : index
    %296 = vector.load %arg1[%c624, %c0_143] : memref<816x144xbf16, #tpu.memory_space<vmem>>, vector<8x32xbf16>
    %297 = arith.truncf %295 : vector<18x8xf32> to vector<18x8xbf16>
    %cst_144 = arith.constant dense<0.000000e+00> : vector<18x32xf32>
    %298 = tpu.matmul %297, %296, %cst_144 {dimension_numbers = #tpu.dot_dimension_numbers<[1], [0], [0], [1], [0, 0, 1, 1], [], []>} : vector<18x8xbf16>, vector<8x32xbf16>, vector<18x32xf32> -> vector<18x32xf32>
    %299 = arith.addf %276, %298 : vector<18x32xf32>
    %300 = arith.addf %201, %299 : vector<18x32xf32>
    %c472 = arith.constant 472 : index
    %c0_145 = arith.constant 0 : index
    %301 = vector.load %arg2[%c472, %c0_145] : memref<688x96xf32, #tpu.memory_space<vmem>>, vector<1x32xf32>
    %302 = vector.broadcast %301 : vector<1x32xf32> to vector<18x32xf32>
    %303 = arith.addf %300, %302 : vector<18x32xf32>
    %c480_146 = arith.constant 480 : index
    %c0_147 = arith.constant 0 : index
    %304 = vector.load %arg2[%c480_146, %c0_147] : memref<688x96xf32, #tpu.memory_space<vmem>>, vector<1x32xf32>
    %c488 = arith.constant 488 : index
    %c0_148 = arith.constant 0 : index
    %305 = vector.load %arg2[%c488, %c0_148] : memref<688x96xf32, #tpu.memory_space<vmem>>, vector<1x32xf32>
    %cst_149 = arith.constant dense<0.000000e+00> : vector<18xf32>
    %306 = vector.multi_reduction <add>, %303, %cst_149 [1] : vector<18x32xf32> to vector<18xf32>
    %307 = vector.shape_cast %306 : vector<18xf32> to vector<18x1xf32>
    %cst_150 = arith.constant 3.200000e+01 : f32
    %308 = vector.broadcast %cst_150 : f32 to vector<18x1xf32>
    %309 = arith.divf %307, %308 : vector<18x1xf32>
    %310 = vector.broadcast %309 : vector<18x1xf32> to vector<18x32xf32>
    %311 = arith.subf %303, %310 : vector<18x32xf32>
    %312 = arith.mulf %311, %311 : vector<18x32xf32>
    %cst_151 = arith.constant dense<0.000000e+00> : vector<18xf32>
    %313 = vector.multi_reduction <add>, %312, %cst_151 [1] : vector<18x32xf32> to vector<18xf32>
    %314 = vector.shape_cast %313 : vector<18xf32> to vector<18x1xf32>
    %cst_152 = arith.constant 3.200000e+01 : f32
    %315 = vector.broadcast %cst_152 : f32 to vector<18x1xf32>
    %316 = arith.divf %314, %315 : vector<18x1xf32>
    %317 = vector.broadcast %309 : vector<18x1xf32> to vector<18x32xf32>
    %318 = arith.subf %303, %317 : vector<18x32xf32>
    %cst_153 = arith.constant 9.99999974E-6 : f32
    %319 = vector.broadcast %cst_153 : f32 to vector<18x1xf32>
    %320 = arith.addf %316, %319 : vector<18x1xf32>
    %321 = math.rsqrt %320 : vector<18x1xf32>
    %322 = vector.broadcast %321 : vector<18x1xf32> to vector<18x32xf32>
    %323 = arith.mulf %318, %322 : vector<18x32xf32>
    %324 = vector.broadcast %304 : vector<1x32xf32> to vector<18x32xf32>
    %325 = arith.mulf %323, %324 : vector<18x32xf32>
    %326 = vector.broadcast %305 : vector<1x32xf32> to vector<18x32xf32>
    %327 = arith.addf %325, %326 : vector<18x32xf32>
    %c640 = arith.constant 640 : index
    %c0_154 = arith.constant 0 : index
    %328 = vector.load %arg1[%c640, %c0_154] : memref<816x144xbf16, #tpu.memory_space<vmem>>, vector<32x128xbf16>
    %329 = arith.truncf %327 : vector<18x32xf32> to vector<18x32xbf16>
    %cst_155 = arith.constant dense<0.000000e+00> : vector<18x128xf32>
    %330 = tpu.matmul %329, %328, %cst_155 {dimension_numbers = #tpu.dot_dimension_numbers<[1], [0], [0], [1], [0, 0, 1, 1], [], []>} : vector<18x32xbf16>, vector<32x128xbf16>, vector<18x128xf32> -> vector<18x128xf32>
    %331 = vector.extract_strided_slice %330 {offsets = [0, 0], sizes = [18, 64], strides = [1, 1]} : vector<18x128xf32> to vector<18x64xf32>
    %332 = vector.extract_strided_slice %330 {offsets = [0, 64], sizes = [18, 64], strides = [1, 1]} : vector<18x128xf32> to vector<18x64xf32>
    %c496 = arith.constant 496 : index
    %c0_156 = arith.constant 0 : index
    %333 = vector.load %arg2[%c496, %c0_156] : memref<688x96xf32, #tpu.memory_space<vmem>>, vector<4x64xf32>
    %334 = arith.truncf %331 : vector<18x64xf32> to vector<18x64xbf16>
    %335 = vector.extract_strided_slice %333 {offsets = [3, 0], sizes = [1, 64], strides = [1, 1]} : vector<4x64xf32> to vector<1x64xf32>
    %336 = vector.broadcast %335 : vector<1x64xf32> to vector<18x64xf32>
    %337 = arith.mulf %331, %336 : vector<18x64xf32>
    %c272_157 = arith.constant 272 : index
    %c0_158 = arith.constant 0 : index
    %338 = vector.load %arg1[%c272_157, %c0_158] : memref<816x144xbf16, #tpu.memory_space<vmem>>, vector<18x18xbf16>
    %cst_159 = arith.constant dense<0.000000e+00> : vector<18x64xf32>
    %339 = tpu.matmul %338, %334, %cst_159 {dimension_numbers = #tpu.dot_dimension_numbers<[1], [0], [0], [1], [0, 0, 1, 1], [], []>} : vector<18x18xbf16>, vector<18x64xbf16>, vector<18x64xf32> -> vector<18x64xf32>
    %340 = vector.extract_strided_slice %333 {offsets = [2, 0], sizes = [1, 64], strides = [1, 1]} : vector<4x64xf32> to vector<1x64xf32>
    %341 = vector.broadcast %340 : vector<1x64xf32> to vector<18x64xf32>
    %342 = arith.mulf %339, %341 : vector<18x64xf32>
    %343 = arith.addf %337, %342 : vector<18x64xf32>
    %c304_160 = arith.constant 304 : index
    %c0_161 = arith.constant 0 : index
    %344 = vector.load %arg1[%c304_160, %c0_161] : memref<816x144xbf16, #tpu.memory_space<vmem>>, vector<18x18xbf16>
    %cst_162 = arith.constant dense<0.000000e+00> : vector<18x64xf32>
    %345 = tpu.matmul %344, %334, %cst_162 {dimension_numbers = #tpu.dot_dimension_numbers<[1], [0], [0], [1], [0, 0, 1, 1], [], []>} : vector<18x18xbf16>, vector<18x64xbf16>, vector<18x64xf32> -> vector<18x64xf32>
    %346 = vector.extract_strided_slice %333 {offsets = [1, 0], sizes = [1, 64], strides = [1, 1]} : vector<4x64xf32> to vector<1x64xf32>
    %347 = vector.broadcast %346 : vector<1x64xf32> to vector<18x64xf32>
    %348 = arith.mulf %345, %347 : vector<18x64xf32>
    %349 = arith.addf %343, %348 : vector<18x64xf32>
    %c336_163 = arith.constant 336 : index
    %c0_164 = arith.constant 0 : index
    %350 = vector.load %arg1[%c336_163, %c0_164] : memref<816x144xbf16, #tpu.memory_space<vmem>>, vector<18x18xbf16>
    %cst_165 = arith.constant dense<0.000000e+00> : vector<18x64xf32>
    %351 = tpu.matmul %350, %334, %cst_165 {dimension_numbers = #tpu.dot_dimension_numbers<[1], [0], [0], [1], [0, 0, 1, 1], [], []>} : vector<18x18xbf16>, vector<18x64xbf16>, vector<18x64xf32> -> vector<18x64xf32>
    %352 = vector.extract_strided_slice %333 {offsets = [0, 0], sizes = [1, 64], strides = [1, 1]} : vector<4x64xf32> to vector<1x64xf32>
    %353 = vector.broadcast %352 : vector<1x64xf32> to vector<18x64xf32>
    %354 = arith.mulf %351, %353 : vector<18x64xf32>
    %355 = arith.addf %349, %354 : vector<18x64xf32>
    %c504 = arith.constant 504 : index
    %c0_166 = arith.constant 0 : index
    %356 = vector.load %arg2[%c504, %c0_166] : memref<688x96xf32, #tpu.memory_space<vmem>>, vector<1x64xf32>
    %357 = vector.broadcast %356 : vector<1x64xf32> to vector<18x64xf32>
    %358 = arith.addf %355, %357 : vector<18x64xf32>
    %cst_167 = arith.constant 0.000000e+00 : f32
    %359 = vector.broadcast %cst_167 : f32 to vector<18x64xf32>
    %360 = arith.subf %359, %358 : vector<18x64xf32>
    %361 = math.exp %360 : vector<18x64xf32>
    %cst_168 = arith.constant 1.000000e+00 : f32
    %362 = vector.broadcast %cst_168 : f32 to vector<18x64xf32>
    %363 = arith.addf %362, %361 : vector<18x64xf32>
    %cst_169 = arith.constant 1.000000e+00 : f32
    %364 = vector.broadcast %cst_169 : f32 to vector<18x64xf32>
    %365 = arith.divf %364, %363 : vector<18x64xf32>
    %366 = arith.mulf %358, %365 : vector<18x64xf32>
    %c672 = arith.constant 672 : index
    %c0_170 = arith.constant 0 : index
    %367 = vector.load %arg1[%c672, %c0_170] : memref<816x144xbf16, #tpu.memory_space<vmem>>, vector<64x18xbf16>
    %368 = arith.truncf %366 : vector<18x64xf32> to vector<18x64xbf16>
    %cst_171 = arith.constant dense<0.000000e+00> : vector<18x18xf32>
    %369 = tpu.matmul %368, %367, %cst_171 {dimension_numbers = #tpu.dot_dimension_numbers<[1], [0], [0], [1], [0, 0, 1, 1], [], []>} : vector<18x64xbf16>, vector<64x18xbf16>, vector<18x18xf32> -> vector<18x18xf32>
    %370 = vector.extract_strided_slice %369 {offsets = [0, 0], sizes = [18, 2], strides = [1, 1]} : vector<18x18xf32> to vector<18x2xf32>
    %c736 = arith.constant 736 : index
    %c0_172 = arith.constant 0 : index
    %371 = vector.load %arg1[%c736, %c0_172] : memref<816x144xbf16, #tpu.memory_space<vmem>>, vector<2x64xbf16>
    %372 = arith.truncf %370 : vector<18x2xf32> to vector<18x2xbf16>
    %cst_173 = arith.constant dense<0.000000e+00> : vector<18x64xf32>
    %373 = tpu.matmul %372, %371, %cst_173 {dimension_numbers = #tpu.dot_dimension_numbers<[1], [0], [0], [1], [0, 0, 1, 1], [], []>} : vector<18x2xbf16>, vector<2x64xbf16>, vector<18x64xf32> -> vector<18x64xf32>
    %c512 = arith.constant 512 : index
    %c0_174 = arith.constant 0 : index
    %374 = vector.load %arg2[%c512, %c0_174] : memref<688x96xf32, #tpu.memory_space<vmem>>, vector<1x64xf32>
    %375 = vector.broadcast %374 : vector<1x64xf32> to vector<18x64xf32>
    %376 = arith.addf %373, %375 : vector<18x64xf32>
    %cst_175 = arith.constant 0.000000e+00 : f32
    %377 = vector.broadcast %cst_175 : f32 to vector<18x64xf32>
    %378 = arith.maximumf %376, %377 : vector<18x64xf32>
    %379 = math.absf %376 : vector<18x64xf32>
    %cst_176 = arith.constant 0.000000e+00 : f32
    %380 = vector.broadcast %cst_176 : f32 to vector<18x64xf32>
    %381 = arith.subf %380, %379 : vector<18x64xf32>
    %382 = math.exp %381 : vector<18x64xf32>
    %cst_177 = arith.constant 1.000000e+00 : f32
    %383 = vector.broadcast %cst_177 : f32 to vector<18x64xf32>
    %384 = arith.addf %383, %382 : vector<18x64xf32>
    %385 = math.log %384 : vector<18x64xf32>
    %386 = arith.addf %378, %385 : vector<18x64xf32>
    %387 = vector.extract_strided_slice %369 {offsets = [0, 2], sizes = [18, 8], strides = [1, 1]} : vector<18x18xf32> to vector<18x8xf32>
    %388 = vector.extract_strided_slice %369 {offsets = [0, 10], sizes = [18, 8], strides = [1, 1]} : vector<18x18xf32> to vector<18x8xf32>
    %c48_178 = arith.constant 48 : index
    %c0_179 = arith.constant 0 : index
    %389 = vector.load %arg1[%c48_178, %c0_179] : memref<816x144xbf16, #tpu.memory_space<vmem>>, vector<144x18xbf16>
    %c120_180 = arith.constant 120 : index
    %c0_181 = arith.constant 0 : index
    %390 = vector.load %arg2[%c120_180, %c0_181] : memref<688x96xf32, #tpu.memory_space<vmem>>, vector<144x8xf32>
    %391 = arith.truncf %386 : vector<18x64xf32> to vector<18x64xbf16>
    %cst_182 = arith.constant dense<0.000000e+00> : vector<144x64xf32>
    %392 = tpu.matmul %389, %391, %cst_182 {dimension_numbers = #tpu.dot_dimension_numbers<[1], [0], [0], [1], [0, 0, 1, 1], [], []>} : vector<144x18xbf16>, vector<18x64xbf16>, vector<144x64xf32> -> vector<144x64xf32>
    %393 = arith.mulf %386, %366 : vector<18x64xf32>
    %394 = arith.truncf %393 : vector<18x64xf32> to vector<18x64xbf16>
    %cst_183 = arith.constant dense<0.000000e+00> : vector<144x64xf32>
    %395 = tpu.matmul %389, %394, %cst_183 {dimension_numbers = #tpu.dot_dimension_numbers<[1], [0], [0], [1], [0, 0, 1, 1], [], []>} : vector<144x18xbf16>, vector<18x64xbf16>, vector<144x64xf32> -> vector<144x64xf32>
    %396 = arith.truncf %387 : vector<18x8xf32> to vector<18x8xbf16>
    %cst_184 = arith.constant dense<0.000000e+00> : vector<144x8xf32>
    %397 = tpu.matmul %389, %396, %cst_184 {dimension_numbers = #tpu.dot_dimension_numbers<[1], [0], [0], [1], [0, 0, 1, 1], [], []>} : vector<144x18xbf16>, vector<18x8xbf16>, vector<144x8xf32> -> vector<144x8xf32>
    %398 = arith.mulf %397, %390 : vector<144x8xf32>
    %cst_185 = arith.constant dense<0.000000e+00> : vector<144xf32>
    %399 = vector.multi_reduction <add>, %398, %cst_185 [1] : vector<144x8xf32> to vector<144xf32>
    %400 = vector.shape_cast %399 : vector<144xf32> to vector<144x1xf32>
    %c528 = arith.constant 528 : index
    %c0_186 = arith.constant 0 : index
    %401 = vector.load %arg2[%c528, %c0_186] : memref<688x96xf32, #tpu.memory_space<vmem>>, vector<144x64xf32>
    %402 = arith.mulf %392, %401 : vector<144x64xf32>
    %403 = math.exp %402 : vector<144x64xf32>
    %c0_187 = arith.constant 0 : index
    %c0_188 = arith.constant 0 : index
    %404 = vector.load %arg4[%c0_187, %c0_188] : memref<144x64xf32, #tpu.memory_space<vmem>>, vector<144x64xf32>
    tpu.vector_store %arg4[%c0_187, %c0_188], %403 {strides = array<i32>} : memref<144x64xf32, #tpu.memory_space<vmem>>, vector<144x64xf32>,
    %405 = vector.broadcast %400 : vector<144x1xf32> to vector<144x64xf32>
    %406 = arith.mulf %395, %405 : vector<144x64xf32>
    %c0_189 = arith.constant 0 : index
    %c0_190 = arith.constant 0 : index
    %407 = vector.load %arg5[%c0_189, %c0_190] : memref<144x64xf32, #tpu.memory_space<vmem>>, vector<144x64xf32>
    tpu.vector_store %arg5[%c0_189, %c0_190], %406 {strides = array<i32>} : memref<144x64xf32, #tpu.memory_space<vmem>>, vector<144x64xf32>,
    %cst_191 = arith.constant 0.000000e+00 : f32
    %408 = vector.broadcast %cst_191 : f32 to vector<16x64xf32>
    %c0_192 = arith.constant 0 : index
    %c0_193 = arith.constant 0 : index
    %409 = vector.load %arg4[%c0_192, %c0_193] : memref<144x64xf32, #tpu.memory_space<vmem>>, vector<16x64xf32>
    %410 = arith.mulf %409, %408 : vector<16x64xf32>
    %c0_194 = arith.constant 0 : index
    %c0_195 = arith.constant 0 : index
    %411 = vector.load %arg5[%c0_194, %c0_195] : memref<144x64xf32, #tpu.memory_space<vmem>>, vector<16x64xf32>
    %412 = arith.addf %410, %411 : vector<16x64xf32>
    %c0_196 = arith.constant 0 : index
    %c0_197 = arith.constant 0 : index
    %413 = vector.load %arg6[%c0_196, %c0_197] : memref<144x64xf32, #tpu.memory_space<vmem>>, vector<16x64xf32>
    tpu.vector_store %arg6[%c0_196, %c0_197], %412 {strides = array<i32>} : memref<144x64xf32, #tpu.memory_space<vmem>>, vector<16x64xf32>,
    %c16_198 = arith.constant 16 : index
    %c0_199 = arith.constant 0 : index
    %414 = vector.load %arg4[%c16_198, %c0_199] : memref<144x64xf32, #tpu.memory_space<vmem>>, vector<16x64xf32>
    %415 = arith.mulf %414, %412 : vector<16x64xf32>
    %c16_200 = arith.constant 16 : index
    %c0_201 = arith.constant 0 : index
    %416 = vector.load %arg5[%c16_200, %c0_201] : memref<144x64xf32, #tpu.memory_space<vmem>>, vector<16x64xf32>
    %417 = arith.addf %415, %416 : vector<16x64xf32>
    %c16_202 = arith.constant 16 : index
    %c0_203 = arith.constant 0 : index
    %418 = vector.load %arg6[%c16_202, %c0_203] : memref<144x64xf32, #tpu.memory_space<vmem>>, vector<16x64xf32>
    tpu.vector_store %arg6[%c16_202, %c0_203], %417 {strides = array<i32>} : memref<144x64xf32, #tpu.memory_space<vmem>>, vector<16x64xf32>,
    %c32_204 = arith.constant 32 : index
    %c0_205 = arith.constant 0 : index
    %419 = vector.load %arg4[%c32_204, %c0_205] : memref<144x64xf32, #tpu.memory_space<vmem>>, vector<16x64xf32>
    %420 = arith.mulf %419, %417 : vector<16x64xf32>
    %c32_206 = arith.constant 32 : index
    %c0_207 = arith.constant 0 : index
    %421 = vector.load %arg5[%c32_206, %c0_207] : memref<144x64xf32, #tpu.memory_space<vmem>>, vector<16x64xf32>
    %422 = arith.addf %420, %421 : vector<16x64xf32>
    %c32_208 = arith.constant 32 : index
    %c0_209 = arith.constant 0 : index
    %423 = vector.load %arg6[%c32_208, %c0_209] : memref<144x64xf32, #tpu.memory_space<vmem>>, vector<16x64xf32>
    tpu.vector_store %arg6[%c32_208, %c0_209], %422 {strides = array<i32>} : memref<144x64xf32, #tpu.memory_space<vmem>>, vector<16x64xf32>,
    %c48_210 = arith.constant 48 : index
    %c0_211 = arith.constant 0 : index
    %424 = vector.load %arg4[%c48_210, %c0_211] : memref<144x64xf32, #tpu.memory_space<vmem>>, vector<16x64xf32>
    %425 = arith.mulf %424, %422 : vector<16x64xf32>
    %c48_212 = arith.constant 48 : index
    %c0_213 = arith.constant 0 : index
    %426 = vector.load %arg5[%c48_212, %c0_213] : memref<144x64xf32, #tpu.memory_space<vmem>>, vector<16x64xf32>
    %427 = arith.addf %425, %426 : vector<16x64xf32>
    %c48_214 = arith.constant 48 : index
    %c0_215 = arith.constant 0 : index
    %428 = vector.load %arg6[%c48_214, %c0_215] : memref<144x64xf32, #tpu.memory_space<vmem>>, vector<16x64xf32>
    tpu.vector_store %arg6[%c48_214, %c0_215], %427 {strides = array<i32>} : memref<144x64xf32, #tpu.memory_space<vmem>>, vector<16x64xf32>,
    %c64_216 = arith.constant 64 : index
    %c0_217 = arith.constant 0 : index
    %429 = vector.load %arg4[%c64_216, %c0_217] : memref<144x64xf32, #tpu.memory_space<vmem>>, vector<16x64xf32>
    %430 = arith.mulf %429, %427 : vector<16x64xf32>
    %c64_218 = arith.constant 64 : index
    %c0_219 = arith.constant 0 : index
    %431 = vector.load %arg5[%c64_218, %c0_219] : memref<144x64xf32, #tpu.memory_space<vmem>>, vector<16x64xf32>
    %432 = arith.addf %430, %431 : vector<16x64xf32>
    %c64_220 = arith.constant 64 : index
    %c0_221 = arith.constant 0 : index
    %433 = vector.load %arg6[%c64_220, %c0_221] : memref<144x64xf32, #tpu.memory_space<vmem>>, vector<16x64xf32>
    tpu.vector_store %arg6[%c64_220, %c0_221], %432 {strides = array<i32>} : memref<144x64xf32, #tpu.memory_space<vmem>>, vector<16x64xf32>,
    %c80_222 = arith.constant 80 : index
    %c0_223 = arith.constant 0 : index
    %434 = vector.load %arg4[%c80_222, %c0_223] : memref<144x64xf32, #tpu.memory_space<vmem>>, vector<16x64xf32>
    %435 = arith.mulf %434, %432 : vector<16x64xf32>
    %c80_224 = arith.constant 80 : index
    %c0_225 = arith.constant 0 : index
    %436 = vector.load %arg5[%c80_224, %c0_225] : memref<144x64xf32, #tpu.memory_space<vmem>>, vector<16x64xf32>
    %437 = arith.addf %435, %436 : vector<16x64xf32>
    %c80_226 = arith.constant 80 : index
    %c0_227 = arith.constant 0 : index
    %438 = vector.load %arg6[%c80_226, %c0_227] : memref<144x64xf32, #tpu.memory_space<vmem>>, vector<16x64xf32>
    tpu.vector_store %arg6[%c80_226, %c0_227], %437 {strides = array<i32>} : memref<144x64xf32, #tpu.memory_space<vmem>>, vector<16x64xf32>,
    %c96_228 = arith.constant 96 : index
    %c0_229 = arith.constant 0 : index
    %439 = vector.load %arg4[%c96_228, %c0_229] : memref<144x64xf32, #tpu.memory_space<vmem>>, vector<16x64xf32>
    %440 = arith.mulf %439, %437 : vector<16x64xf32>
    %c96_230 = arith.constant 96 : index
    %c0_231 = arith.constant 0 : index
    %441 = vector.load %arg5[%c96_230, %c0_231] : memref<144x64xf32, #tpu.memory_space<vmem>>, vector<16x64xf32>
    %442 = arith.addf %440, %441 : vector<16x64xf32>
    %c96_232 = arith.constant 96 : index
    %c0_233 = arith.constant 0 : index
    %443 = vector.load %arg6[%c96_232, %c0_233] : memref<144x64xf32, #tpu.memory_space<vmem>>, vector<16x64xf32>
    tpu.vector_store %arg6[%c96_232, %c0_233], %442 {strides = array<i32>} : memref<144x64xf32, #tpu.memory_space<vmem>>, vector<16x64xf32>,
    %c112_234 = arith.constant 112 : index
    %c0_235 = arith.constant 0 : index
    %444 = vector.load %arg4[%c112_234, %c0_235] : memref<144x64xf32, #tpu.memory_space<vmem>>, vector<16x64xf32>
    %445 = arith.mulf %444, %442 : vector<16x64xf32>
    %c112_236 = arith.constant 112 : index
    %c0_237 = arith.constant 0 : index
    %446 = vector.load %arg5[%c112_236, %c0_237] : memref<144x64xf32, #tpu.memory_space<vmem>>, vector<16x64xf32>
    %447 = arith.addf %445, %446 : vector<16x64xf32>
    %c112_238 = arith.constant 112 : index
    %c0_239 = arith.constant 0 : index
    %448 = vector.load %arg6[%c112_238, %c0_239] : memref<144x64xf32, #tpu.memory_space<vmem>>, vector<16x64xf32>
    tpu.vector_store %arg6[%c112_238, %c0_239], %447 {strides = array<i32>} : memref<144x64xf32, #tpu.memory_space<vmem>>, vector<16x64xf32>,
    %c128_240 = arith.constant 128 : index
    %c0_241 = arith.constant 0 : index
    %449 = vector.load %arg4[%c128_240, %c0_241] : memref<144x64xf32, #tpu.memory_space<vmem>>, vector<16x64xf32>
    %450 = arith.mulf %449, %447 : vector<16x64xf32>
    %c128_242 = arith.constant 128 : index
    %c0_243 = arith.constant 0 : index
    %451 = vector.load %arg5[%c128_242, %c0_243] : memref<144x64xf32, #tpu.memory_space<vmem>>, vector<16x64xf32>
    %452 = arith.addf %450, %451 : vector<16x64xf32>
    %c128_244 = arith.constant 128 : index
    %c0_245 = arith.constant 0 : index
    %453 = vector.load %arg6[%c128_244, %c0_245] : memref<144x64xf32, #tpu.memory_space<vmem>>, vector<16x64xf32>
    tpu.vector_store %arg6[%c128_244, %c0_245], %452 {strides = array<i32>} : memref<144x64xf32, #tpu.memory_space<vmem>>, vector<16x64xf32>,
    %454 = arith.truncf %388 : vector<18x8xf32> to vector<18x8xbf16>
    %cst_246 = arith.constant dense<0.000000e+00> : vector<144x8xf32>
    %455 = tpu.matmul %389, %454, %cst_246 {dimension_numbers = #tpu.dot_dimension_numbers<[1], [0], [0], [1], [0, 0, 1, 1], [], []>} : vector<144x18xbf16>, vector<18x8xbf16>, vector<144x8xf32> -> vector<144x8xf32>
    %456 = arith.mulf %455, %390 : vector<144x8xf32>
    %cst_247 = arith.constant dense<0.000000e+00> : vector<144xf32>
    %457 = vector.multi_reduction <add>, %456, %cst_247 [1] : vector<144x8xf32> to vector<144xf32>
    %458 = vector.shape_cast %457 : vector<144xf32> to vector<144x1xf32>
    %c0_248 = arith.constant 0 : index
    %c0_249 = arith.constant 0 : index
    %459 = vector.load %arg6[%c0_248, %c0_249] : memref<144x64xf32, #tpu.memory_space<vmem>>, vector<144x64xf32>
    %460 = vector.broadcast %458 : vector<144x1xf32> to vector<144x64xf32>
    %461 = arith.mulf %459, %460 : vector<144x64xf32>
    %c192_250 = arith.constant 192 : index
    %c0_251 = arith.constant 0 : index
    %462 = vector.load %arg1[%c192_250, %c0_251] : memref<816x144xbf16, #tpu.memory_space<vmem>>, vector<18x144xbf16>
    %463 = arith.truncf %461 : vector<144x64xf32> to vector<144x64xbf16>
    %cst_252 = arith.constant dense<0.000000e+00> : vector<18x64xf32>
    %464 = tpu.matmul %462, %463, %cst_252 {dimension_numbers = #tpu.dot_dimension_numbers<[1], [0], [0], [1], [0, 0, 1, 1], [], []>} : vector<18x144xbf16>, vector<144x64xbf16>, vector<18x64xf32> -> vector<18x64xf32>
    %c520 = arith.constant 520 : index
    %c0_253 = arith.constant 0 : index
    %465 = vector.load %arg2[%c520, %c0_253] : memref<688x96xf32, #tpu.memory_space<vmem>>, vector<1x64xf32>
    %466 = vector.broadcast %465 : vector<1x64xf32> to vector<18x64xf32>
    %467 = arith.mulf %466, %366 : vector<18x64xf32>
    %468 = arith.addf %464, %467 : vector<18x64xf32>
    %cst_254 = arith.constant 0.000000e+00 : f32
    %469 = vector.broadcast %cst_254 : f32 to vector<18x64xf32>
    %470 = arith.subf %469, %332 : vector<18x64xf32>
    %471 = math.exp %470 : vector<18x64xf32>
    %cst_255 = arith.constant 1.000000e+00 : f32
    %472 = vector.broadcast %cst_255 : f32 to vector<18x64xf32>
    %473 = arith.addf %472, %471 : vector<18x64xf32>
    %cst_256 = arith.constant 1.000000e+00 : f32
    %474 = vector.broadcast %cst_256 : f32 to vector<18x64xf32>
    %475 = arith.divf %474, %473 : vector<18x64xf32>
    %476 = arith.mulf %332, %475 : vector<18x64xf32>
    %477 = arith.mulf %468, %476 : vector<18x64xf32>
    %c752 = arith.constant 752 : index
    %c0_257 = arith.constant 0 : index
    %478 = vector.load %arg1[%c752, %c0_257] : memref<816x144xbf16, #tpu.memory_space<vmem>>, vector<64x32xbf16>
    %479 = arith.truncf %477 : vector<18x64xf32> to vector<18x64xbf16>
    %cst_258 = arith.constant dense<0.000000e+00> : vector<18x32xf32>
    %480 = tpu.matmul %479, %478, %cst_258 {dimension_numbers = #tpu.dot_dimension_numbers<[1], [0], [0], [1], [0, 0, 1, 1], [], []>} : vector<18x64xbf16>, vector<64x32xbf16>, vector<18x32xf32> -> vector<18x32xf32>
    %481 = arith.addf %327, %480 : vector<18x32xf32>
    %c672_259 = arith.constant 672 : index
    %c0_260 = arith.constant 0 : index
    %482 = vector.load %arg2[%c672_259, %c0_260] : memref<688x96xf32, #tpu.memory_space<vmem>>, vector<1x32xf32>
    %c680 = arith.constant 680 : index
    %c0_261 = arith.constant 0 : index
    %483 = vector.load %arg2[%c680, %c0_261] : memref<688x96xf32, #tpu.memory_space<vmem>>, vector<1x32xf32>
    %cst_262 = arith.constant dense<0.000000e+00> : vector<18xf32>
    %484 = vector.multi_reduction <add>, %481, %cst_262 [1] : vector<18x32xf32> to vector<18xf32>
    %485 = vector.shape_cast %484 : vector<18xf32> to vector<18x1xf32>
    %cst_263 = arith.constant 3.200000e+01 : f32
    %486 = vector.broadcast %cst_263 : f32 to vector<18x1xf32>
    %487 = arith.divf %485, %486 : vector<18x1xf32>
    %488 = vector.broadcast %487 : vector<18x1xf32> to vector<18x32xf32>
    %489 = arith.subf %481, %488 : vector<18x32xf32>
    %490 = arith.mulf %489, %489 : vector<18x32xf32>
    %cst_264 = arith.constant dense<0.000000e+00> : vector<18xf32>
    %491 = vector.multi_reduction <add>, %490, %cst_264 [1] : vector<18x32xf32> to vector<18xf32>
    %492 = vector.shape_cast %491 : vector<18xf32> to vector<18x1xf32>
    %cst_265 = arith.constant 3.200000e+01 : f32
    %493 = vector.broadcast %cst_265 : f32 to vector<18x1xf32>
    %494 = arith.divf %492, %493 : vector<18x1xf32>
    %495 = vector.broadcast %487 : vector<18x1xf32> to vector<18x32xf32>
    %496 = arith.subf %481, %495 : vector<18x32xf32>
    %cst_266 = arith.constant 9.99999974E-6 : f32
    %497 = vector.broadcast %cst_266 : f32 to vector<18x1xf32>
    %498 = arith.addf %494, %497 : vector<18x1xf32>
    %499 = math.rsqrt %498 : vector<18x1xf32>
    %500 = vector.broadcast %499 : vector<18x1xf32> to vector<18x32xf32>
    %501 = arith.mulf %496, %500 : vector<18x32xf32>
    %502 = vector.broadcast %482 : vector<1x32xf32> to vector<18x32xf32>
    %503 = arith.mulf %501, %502 : vector<18x32xf32>
    %504 = vector.broadcast %483 : vector<1x32xf32> to vector<18x32xf32>
    %505 = arith.addf %503, %504 : vector<18x32xf32>
    %c224 = arith.constant 224 : index
    %c0_267 = arith.constant 0 : index
    %506 = vector.load %arg1[%c224, %c0_267] : memref<816x144xbf16, #tpu.memory_space<vmem>>, vector<2x18xbf16>
    %507 = arith.truncf %505 : vector<18x32xf32> to vector<18x32xbf16>
    %cst_268 = arith.constant dense<0.000000e+00> : vector<2x32xf32>
    %508 = tpu.matmul %506, %507, %cst_268 {dimension_numbers = #tpu.dot_dimension_numbers<[1], [0], [0], [1], [0, 0, 1, 1], [], []>} : vector<2x18xbf16>, vector<18x32xbf16>, vector<2x32xf32> -> vector<2x32xf32>
    %c240 = arith.constant 240 : index
    %c0_269 = arith.constant 0 : index
    %509 = vector.load %arg1[%c240, %c0_269] : memref<816x144xbf16, #tpu.memory_space<vmem>>, vector<32x3xbf16>
    %510 = arith.truncf %508 : vector<2x32xf32> to vector<2x32xbf16>
    %cst_270 = arith.constant dense<0.000000e+00> : vector<2x3xf32>
    %511 = tpu.matmul %510, %509, %cst_270 {dimension_numbers = #tpu.dot_dimension_numbers<[1], [0], [0], [1], [0, 0, 1, 1], [], []>} : vector<2x32xbf16>, vector<32x3xbf16>, vector<2x3xf32> -> vector<2x3xf32>
    %c264 = arith.constant 264 : index
    %c0_271 = arith.constant 0 : index
    %512 = vector.load %arg2[%c264, %c0_271] : memref<688x96xf32, #tpu.memory_space<vmem>>, vector<1x3xf32>
    %513 = vector.broadcast %512 : vector<1x3xf32> to vector<2x3xf32>
    %514 = arith.addf %511, %513 : vector<2x3xf32>
    %cst_272 = arith.constant dense<0xFF800000> : vector<2xf32>
    %515 = vector.multi_reduction <maximumf>, %514, %cst_272 [1] : vector<2x3xf32> to vector<2xf32>
    %516 = vector.shape_cast %515 : vector<2xf32> to vector<2x1xf32>
    %517 = vector.broadcast %516 : vector<2x1xf32> to vector<2x3xf32>
    %518 = arith.subf %514, %517 : vector<2x3xf32>
    %519 = math.exp %518 : vector<2x3xf32>
    %cst_273 = arith.constant dense<0.000000e+00> : vector<2xf32>
    %520 = vector.multi_reduction <add>, %519, %cst_273 [1] : vector<2x3xf32> to vector<2xf32>
    %521 = vector.shape_cast %520 : vector<2xf32> to vector<2x1xf32>
    %522 = vector.broadcast %521 : vector<2x1xf32> to vector<2x3xf32>
    %523 = arith.divf %519, %522 : vector<2x3xf32>
    %c0_274 = arith.constant 0 : index
    %c0_275 = arith.constant 0 : index
    %524 = vector.load %arg3[%c0_274, %c0_275] : memref<2x3xf32, #tpu.memory_space<vmem>>, vector<2x3xf32>
    tpu.vector_store %arg3[%c0_274, %c0_275], %523 {strides = array<i32>} : memref<2x3xf32, #tpu.memory_space<vmem>>, vector<2x3xf32>,
    return
  }
}

</mosaic_0001>

<llo_original>
// kernel: tile.15
$region0: #{tile.15}
  #allocation0 [shape = 's32[1]{0}', space=sflag, size = 0x4, scoped, tag = 'scoped memory for tile.15']
  %s0 = inlined_call_operand.<no memory space> [shape: f32[], index: 0, kind: input, shape index: {}]
  %s1 = inlined_call_operand.vmem [shape: f32[16], index: 1, kind: output, shape index: {}]
  %v2 = vstv %s0
  %3 = vst [vmem:[%s1] sm:$0x1] %v2

// kernel: tile.19
$region0: #{tile.19}
  %s0 = inlined_call_operand.vmem [shape: f32[2,9,32], index: 0, kind: input, shape index: {}]
  %s1 = inlined_call_operand.vmem [shape: f32[18,32], index: 1, kind: output, shape index: {}]
  %v2 = vld [vmem:[%s0] sm:$0xff]
  %vm3 = vcmask 261120
  %4 = vst.msk [vmem:[%s1] sm:$0xff] %vm3, %v2
  %s5 = scalar_lea.vmem %s0, 8
  %s6 = smov 3
  %v7 = vld [vmem:[%s5] ss:$8 sm:%s6]
  %vm8 = vcmask 261120
  %s9 = scalar_lea.vmem %s1, 8
  %10 = vst.msk [vmem:[%s9] sm:$0x3] %vm8, %v7
  %s11 = scalar_lea.vmem %s0, 17
  %v12 = vld [vmem:[%s11] sm:$0xff]
  %vm13 = vcmask 261120
  %s14 = scalar_lea.vmem %s1, 10
  %15 = vst.msk [vmem:[%s14] sm:$0xff] %vm13, %v12

// kernel: _lambda_.1
$region0: #{_lambda_.1}
  #allocation0 [shape = 'u32[]', space=smem, size = 0x4, offset = 0x4, fixed_abs, tag = 'smem constant byte address 0x4 - core index']
  #allocation1 [shape = 'u32[144,128]{1,0:T(1,128)}', space=vmem, size = 0x12000, scoped, tag = 'internal scratch']
  #allocation2 [shape = 'f32[144,64]{1,0:T(8,128)}', space=vmem, size = 0x12000, scoped, tag = 'scratch operand']
  #allocation3 [shape = 'f32[144,64]{1,0:T(8,128)}', space=vmem, size = 0x12000, scoped, tag = 'scratch operand']
  #allocation4 [shape = 'f32[144,64]{1,0:T(8,128)}', space=vmem, size = 0x12000, scoped, tag = 'scratch operand']
  %s0 = inlined_call_operand.vmem [shape: f32[32,16], index: 0, kind: input, shape index: {}]
  %s1 = inlined_call_operand.vmem [shape: bf16[816,144], index: 1, kind: input, shape index: {}]
  %s2 = inlined_call_operand.vmem [shape: f32[688,96], index: 2, kind: input, shape index: {}]
  %s3 = inlined_call_operand.hbm [shape: f32[2,3], index: 3, kind: output, shape index: {}]
  %s4 = sld [smem:[#allocation0]]
  $region22: #{_lambda_.1} parent=0
    _
  %s6 = ssub.s32 1, %s4
  %s7 = scalar_select 0, %s6, %s4
  $region1: #{_lambda_.1} parent=0
    #allocation5 [shape = 'u8[1024]{0}', space=vmem, size = 0x400, scoped, tag = 'output window, operand 0, single buffered']
    #allocation6 [shape = 's32[1]{0}', space=sflag, size = 0x4, scoped, tag = 'scoped memory for _lambda_.1']
    %8 = vsyncpa [#allocation6], 0
    // Predicated region
    $region2: #{_lambda_.1} parent=1 // pred_check
      _
    $region3: #{_lambda_.1} parent=1 // pred_check_branch
      %10 = sbr.rel (0) target = $region5
    $region4: #{_lambda_.1} parent=1 // pred_region
      _
    $region5: #{_lambda_.1} parent=1 // pred_fallthru
      _
    // Predicated region
    $region6: #{_lambda_.1} parent=1 // pred_check
      _
    $region7: #{_lambda_.1} parent=1 // pred_check_branch
      %12 = sbr.rel (0) target = $region9
    $region8: #{_lambda_.1} parent=1 // pred_region
      _
    $region9: #{_lambda_.1} parent=1 // pred_fallthru
      _
    // Predicated region
    $region10: #{_lambda_.1} parent=1 // pred_check
      _
    $region11: #{_lambda_.1} parent=1 // pred_check_branch
      %14 = sbr.rel (0) target = $region13
    $region12: #{_lambda_.1} parent=1 // pred_region
      _
    $region13: #{_lambda_.1} parent=1 // pred_fallthru
      _
    %v16 = vld [vmem:[%s0] sm:$0xff]
    %v17 = vld [vmem:[%s0 + $0x8] sm:$0xff]
    %v18 = vld [vmem:[%s0 + $0x10] sm:$0xff]
    %v19 = vld [vmem:[%s0 + $0x18] sm:$0xff]
    %v20 = vld [vmem:[%s2] sm:$0xff]
    %v21 = vld [vmem:[%s2 + $0x8] sm:$0xff]
    %v22 = vld [vmem:[%s2 + $0x10] sm:$0xff]
    %v23 = vld [vmem:[%s2 + $0x18] sm:$0xff]
    %v24 = vmul.f32 %v16, %v20
    %v25 = vmul.f32 %v17, %v21
    %v26 = vmul.f32 %v18, %v22
    %v27 = vmul.f32 %v19, %v23
    %v28 = vld [vmem:[%s2 + $0x20] sm:$0xff]
    %v29 = vld [vmem:[%s2 + $0x28] sm:$0xff]
    %v30 = vld [vmem:[%s2 + $0x30] sm:$0xff]
    %v31 = vld [vmem:[%s2 + $0x38] sm:$0xff]
    %v32 = vadd.f32 %v24, %v28
    %v33 = vadd.f32 %v25, %v29
    %v34 = vadd.f32 %v26, %v30
    %v35 = vadd.f32 %v27, %v31
    %v36 = vld [vmem:[%s1] sm:$0xf]
    %v37 = vld [vmem:[%s1 + $0x8] sm:$0xf]
    %v38 = vpack.c.bf16 %v33, %v32
    %v39 = vpack.c.bf16 %v35, %v34
    %v40 = vld [vmem:[%s2 + $0x40] sm:$0x1]
    %v41 = vlaneseq
    %v42 = vshrl.u32 %v41, 7
    %v43 = vsub.s32 0, %v42
    %v44 = vrot.slane %v40, %v43
    %v47 = vunpack.c.l.b16 %v36
    %v48 = vunpack.c.l.b16 %v37
    %v49 = vpack.c.b16 %v48, %v47
    %vm51 = vcmask 130048
    %v53 = vsel %vm51, %v38, 0
    %v56 = vsel %vm51, %v39, 0
    %58 = vmatprep.subr.bf16.mxu0 0
    %59 = vmatpush1.bf16.msra.mxu0 %v49
    %60 = vmatprep.subr.bf16.mxu0 0
    %61 = vmatpush1.bf16.msra.mxu0 0
    %62 = vmatprep.subr.bf16.mxu0 0
    %63 = vmatpush1.bf16.msra.mxu0 0
    %64 = vmatprep.subr.bf16.mxu0 0
    %65 = vmatpush1.bf16.msra.mxu0 0
    %66 = vmatprep.subr.bf16.mxu0 0
    %67 = vmatpush1.bf16.msra.mxu0 0
    %68 = vmatprep.subr.bf16.mxu0 0
    %69 = vmatpush1.bf16.msra.mxu0 0
    %70 = vmatprep.subr.bf16.mxu0 0
    %71 = vmatpush1.bf16.msra.mxu0 0
    %72 = vmatprep.subr.bf16.mxu0 0
    %73 = vmatpush1.bf16.msra.mxu0 0
    %74 = vmatprep.subr.bf16.mxu0 0
    %75 = vmatpush1.bf16.msra.mxu0 0
    %76 = vmatprep.subr.bf16.mxu0 0
    %77 = vmatpush1.bf16.msra.mxu0 0
    %78 = vmatprep.subr.bf16.mxu0 0
    %79 = vmatpush1.bf16.msra.mxu0 0
    %80 = vmatprep.subr.bf16.mxu0 0
    %81 = vmatpush1.bf16.msra.mxu0 0
    %82 = vmatprep.subr.bf16.mxu0 0
    %83 = vmatpush1.bf16.msra.mxu0 0
    %84 = vmatprep.subr.bf16.mxu0 0
    %85 = vmatpush1.bf16.msra.mxu0 0
    %86 = vmatprep.subr.bf16.mxu0 0
    %87 = vmatpush1.bf16.msra.mxu0 0
    %88 = vmatprep.subr.bf16.mxu0 0
    %89 = vmatpush1.bf16.msra.mxu0 0
    %90 = vmatprep.mubr.bf16.mxu0 0
    %91 = vmatmul.mubr.bf16.gmra.mrb[0].mxu0 %v53
    %v92 = vpop.f32.mrb[0].mxu0
    %v93 = vadd.f32 %v44, %v92
    %v94 = vpop.f32.mrb[0].mxu0
    %v95 = vpop.f32.mrb[0].mxu0
    %v96 = vadd.f32 %v44, %v95
    %v97 = vpop.f32.mrb[0].mxu0
    %98 = vmatprep.mubr.bf16.mxu0 0
    %99 = vmatmul.mubr.bf16.gmra.mrb[0].mxu0 %v56
    %v100 = vpop.f32.mrb[0].mxu0
    %v101 = vadd.f32 %v44, %v100
    %v102 = vpop.f32.mrb[0].mxu0
    %v103 = vpop.f32.mrb[0].mxu0
    %v104 = vadd.f32 %v44, %v103
    %v105 = vpop.f32.mrb[0].mxu0
    %106 = vdwg.mxu0
    %v107 = vtanh.pop %v93
    %v108 = vtanh.pop %v96
    %v109 = vtanh.pop %v101
    %v110 = vtanh.pop %v104
    %v111 = vmul.f32 %v107, %v107
    %v112 = vmul.f32 %v108, %v108
    %v113 = vmul.f32 %v109, %v109
    %v114 = vmul.f32 %v110, %v110
    %v115 = vld [vmem:[%s1 + $0x10] sm:$0xf]
    %v116 = vld [vmem:[%s1 + $0x18] sm:$0xf]
    %v117 = vld [vmem:[%s1 + $0x20] sm:$0x1]
    %v118 = vpack.c.bf16 %v112, %v111
    %v119 = vpack.c.bf16 %v114, %v113
    %v123 = vunpack.c.l.b16 %v115
    %v124 = vunpack.c.l.b16 %v116
    %v125 = vunpack.c.l.b16 %v117
    %v126 = vpack.c.b16 %v124, %v123
    %v127 = vpack.c.b16 %v125, %v125
    %vm128 = vcmask 261120
    %v130 = vsel %vm128, %v126, 0
    %v133 = vsel %vm128, %v127, 0
    %135 = vmatprep.subr.bf16.mxu0 0
    %136 = vmatpush1.bf16.msra.mxu0 %v118
    %137 = vmatprep.subr.bf16.mxu0 0
    %138 = vmatpush1.bf16.msra.mxu0 %v119
    %139 = vmatprep.subr.bf16.mxu0 0
    %140 = vmatpush1.bf16.msra.mxu0 0
    %141 = vmatprep.subr.bf16.mxu0 0
    %142 = vmatpush1.bf16.msra.mxu0 0
    %143 = vmatprep.subr.bf16.mxu0 0
    %144 = vmatpush1.bf16.msra.mxu0 0
    %145 = vmatprep.subr.bf16.mxu0 0
    %146 = vmatpush1.bf16.msra.mxu0 0
    %147 = vmatprep.subr.bf16.mxu0 0
    %148 = vmatpush1.bf16.msra.mxu0 0
    %149 = vmatprep.subr.bf16.mxu0 0
    %150 = vmatpush1.bf16.msra.mxu0 0
    %151 = vmatprep.subr.bf16.mxu0 0
    %152 = vmatpush1.bf16.msra.mxu0 0
    %153 = vmatprep.subr.bf16.mxu0 0
    %154 = vmatpush1.bf16.msra.mxu0 0
    %155 = vmatprep.subr.bf16.mxu0 0
    %156 = vmatpush1.bf16.msra.mxu0 0
    %157 = vmatprep.subr.bf16.mxu0 0
    %158 = vmatpush1.bf16.msra.mxu0 0
    %159 = vmatprep.subr.bf16.mxu0 0
    %160 = vmatpush1.bf16.msra.mxu0 0
    %161 = vmatprep.subr.bf16.mxu0 0
    %162 = vmatpush1.bf16.msra.mxu0 0
    %163 = vmatprep.subr.bf16.mxu0 0
    %164 = vmatpush1.bf16.msra.mxu0 0
    %165 = vmatprep.subr.bf16.mxu0 0
    %166 = vmatpush1.bf16.msra.mxu0 0
    %167 = vmatprep.mubr.bf16.mxu0 0
    %168 = vmatmul.mubr.bf16.gmra.mrb[0].mxu0 %v130
    %v169 = vpop.f32.mrb[0].mxu0
    %v170 = vadd.f32 0.0, %v169
    %v171 = vpop.f32.mrb[0].mxu0
    %v172 = vpop.f32.mrb[0].mxu0
    %v173 = vadd.f32 0.0, %v172
    %v174 = vpop.f32.mrb[0].mxu0
    %175 = vmatprep.mubr.bf16.mxu0 0
    %176 = vmatmul.mubr.bf16.gmra.mrb[0].mxu0 %v133
    %v177 = vpop.f32.mrb[0].mxu0
    %v178 = vadd.f32 0.0, %v177
    %v179 = vpop.f32.mrb[0].mxu0
    %v180 = vpop.f32.mrb[0].mxu0
    %v181 = vpop.f32.mrb[0].mxu0
    %182 = vdwg.mxu0
    %v183 = vrsqrt.pop %v170
    %v184 = vmul.f32 %v170, %v183
    %vm185 = vcmp.eq.f32.partialorder %v170, inf
    %v186 = vsel %vm185, %v170, %v184
    %vm187 = vcmp.eq.f32.partialorder %v170, 0.0
    %v188 = vand.u32 %v170, 2147483648
    %v189 = vsel %vm187, %v188, %v186
    %v190 = vrsqrt.pop %v173
    %v191 = vmul.f32 %v173, %v190
    %vm192 = vcmp.eq.f32.partialorder %v173, inf
    %v193 = vsel %vm192, %v173, %v191
    %vm194 = vcmp.eq.f32.partialorder %v173, 0.0
    %v195 = vand.u32 %v173, 2147483648
    %v196 = vsel %vm194, %v195, %v193
    %v197 = vrsqrt.pop %v178
    %v198 = vmul.f32 %v178, %v197
    %vm199 = vcmp.eq.f32.partialorder %v178, inf
    %v200 = vsel %vm199, %v178, %v198
    %vm201 = vcmp.eq.f32.partialorder %v178, 0.0
    %v202 = vand.u32 %v178, 2147483648
    %v203 = vsel %vm201, %v202, %v200
    %207 = vrot.lane.b32.xlu0 %v189, 96
    %v208 = vpop.permute.xlu0 %207
    %209 = vrot.lane.b32.xlu0 %v196, 96
    %v210 = vpop.permute.xlu0 %209
    %211 = vrot.lane.b32.xlu0 %v203, 96
    %v212 = vpop.permute.xlu0 %211
    %v216 = vadd.f32 %v189, %v208
    %v217 = vadd.f32 %v196, %v210
    %v218 = vadd.f32 %v203, %v212
    %v219 = vld [vmem:[%s2 + $0x48] sm:$0xff]
    %v220 = vld [vmem:[%s2 + $0x50] sm:$0xff]
    %v221 = vld [vmem:[%s2 + $0x58] sm:$0x3]
    %v222 = vmax.f32 %v216, 0.0
    %v223 = vmax.f32 %v217, 0.0
    %v224 = vmax.f32 %v218, 0.0
    %v225 = vadd.f32 %v219, %v222
    %v226 = vadd.f32 %v220, %v223
    %v227 = vadd.f32 %v221, %v224
    %v228 = vld [vmem:[%s1 + $0x170] sm:$0xf]
    %v229 = vld [vmem:[%s1 + $0x178] sm:$0xf]
    %v230 = vld [vmem:[%s1 + $0x180] sm:$0xf]
    %v231 = vld [vmem:[%s1 + $0x188] sm:$0xf]
    %v232 = vpack.c.bf16 %v226, %v225
    %v233 = vpack.c.bf16 %v227, %v227
    %v238 = vunpack.c.l.b16 %v228
    %v239 = vunpack.c.l.b16 %v229
    %v240 = vunpack.c.l.b16 %v230
    %v241 = vunpack.c.l.b16 %v231
    %v242 = vpack.c.b16 %v239, %v238
    %v243 = vpack.c.b16 %v241, %v240
    %v247 = vsel %vm128, %v232, 0
    %v250 = vsel %vm128, %v233, 0
    %252 = vmatprep.subr.bf16.mxu0 0
    %253 = vmatpush1.bf16.msra.mxu0 %v242
    %254 = vmatprep.subr.bf16.mxu0 0
    %255 = vmatpush1.bf16.msra.mxu0 %v243
    %256 = vmatprep.subr.bf16.mxu0 0
    %257 = vmatpush1.bf16.msra.mxu0 0
    %258 = vmatprep.subr.bf16.mxu0 0
    %259 = vmatpush1.bf16.msra.mxu0 0
    %260 = vmatprep.subr.bf16.mxu0 0
    %261 = vmatpush1.bf16.msra.mxu0 0
    %262 = vmatprep.subr.bf16.mxu0 0
    %263 = vmatpush1.bf16.msra.mxu0 0
    %264 = vmatprep.subr.bf16.mxu0 0
    %265 = vmatpush1.bf16.msra.mxu0 0
    %266 = vmatprep.subr.bf16.mxu0 0
    %267 = vmatpush1.bf16.msra.mxu0 0
    %268 = vmatprep.subr.bf16.mxu0 0
    %269 = vmatpush1.bf16.msra.mxu0 0
    %270 = vmatprep.subr.bf16.mxu0 0
    %271 = vmatpush1.bf16.msra.mxu0 0
    %272 = vmatprep.subr.bf16.mxu0 0
    %273 = vmatpush1.bf16.msra.mxu0 0
    %274 = vmatprep.subr.bf16.mxu0 0
    %275 = vmatpush1.bf16.msra.mxu0 0
    %276 = vmatprep.subr.bf16.mxu0 0
    %277 = vmatpush1.bf16.msra.mxu0 0
    %278 = vmatprep.subr.bf16.mxu0 0
    %279 = vmatpush1.bf16.msra.mxu0 0
    %280 = vmatprep.subr.bf16.mxu0 0
    %281 = vmatpush1.bf16.msra.mxu0 0
    %282 = vmatprep.subr.bf16.mxu0 0
    %283 = vmatpush1.bf16.msra.mxu0 0
    %284 = vmatprep.mubr.bf16.mxu0 0
    %285 = vmatmul.mubr.bf16.gmra.mrb[0].mxu0 %v247
    %v286 = vpop.f32.mrb[0].mxu0
    %v287 = vadd.f32 0.0, %v286
    %v288 = vpop.f32.mrb[0].mxu0
    %v289 = vpop.f32.mrb[0].mxu0
    %v290 = vadd.f32 0.0, %v289
    %v291 = vpop.f32.mrb[0].mxu0
    %292 = vmatprep.mubr.bf16.mxu0 0
    %293 = vmatmul.mubr.bf16.gmra.mrb[0].mxu0 %v250
    %v294 = vpop.f32.mrb[0].mxu0
    %v295 = vadd.f32 0.0, %v294
    %v296 = vpop.f32.mrb[0].mxu0
    %v297 = vpop.f32.mrb[0].mxu0
    %v298 = vpop.f32.mrb[0].mxu0
    %299 = vdwg.mxu0
    %v300 = vld [vmem:[%s2 + $0x110] sm:$0xf]
    %v301 = vpack.c.bf16 %v290, %v287
    %v302 = vpack.c.bf16 %v295, %v295
    %v303 = vlaneseq
    %v304 = vshrl.u32 %v303, 7
    %v305 = vsub.s32 3, %v304
    %v306 = vrot.slane %v300, %v305
    %v307 = vmul.f32 %v287, %v306
    %v308 = vmul.f32 %v290, %v306
    %v309 = vmul.f32 %v295, %v306
    %v310 = vld [vmem:[%s1 + $0x110] sm:$0xf]
    %v311 = vld [vmem:[%s1 + $0x118] sm:$0xf]
    %v312 = vld [vmem:[%s1 + $0x120] sm:$0x1]
    %v316 = vunpack.c.l.b16 %v310
    %v317 = vunpack.c.l.b16 %v311
    %v318 = vunpack.c.l.b16 %v312
    %v319 = vpack.c.b16 %v317, %v316
    %v320 = vpack.c.b16 %v318, %v318
    %vm321 = vcmask 146432
    %v323 = vsel %vm321, %v319, 0
    %v326 = vsel %vm321, %v320, 0
    %vm328 = vcmask 1040384
    %v330 = vsel %vm328, %v302, 0
    %332 = vmatprep.subr.bf16.mxu0 0
    %333 = vmatpush1.bf16.msra.mxu0 %v301
    %334 = vmatprep.subr.bf16.mxu0 0
    %335 = vmatpush1.bf16.msra.mxu0 %v330
    %336 = vmatprep.subr.bf16.mxu0 0
    %337 = vmatpush1.bf16.msra.mxu0 0
    %338 = vmatprep.subr.bf16.mxu0 0
    %339 = vmatpush1.bf16.msra.mxu0 0
    %340 = vmatprep.subr.bf16.mxu0 0
    %341 = vmatpush1.bf16.msra.mxu0 0
    %342 = vmatprep.subr.bf16.mxu0 0
    %343 = vmatpush1.bf16.msra.mxu0 0
    %344 = vmatprep.subr.bf16.mxu0 0
    %345 = vmatpush1.bf16.msra.mxu0 0
    %346 = vmatprep.subr.bf16.mxu0 0
    %347 = vmatpush1.bf16.msra.mxu0 0
    %348 = vmatprep.subr.bf16.mxu0 0
    %349 = vmatpush1.bf16.msra.mxu0 0
    %350 = vmatprep.subr.bf16.mxu0 0
    %351 = vmatpush1.bf16.msra.mxu0 0
    %352 = vmatprep.subr.bf16.mxu0 0
    %353 = vmatpush1.bf16.msra.mxu0 0
    %354 = vmatprep.subr.bf16.mxu0 0
    %355 = vmatpush1.bf16.msra.mxu0 0
    %356 = vmatprep.subr.bf16.mxu0 0
    %357 = vmatpush1.bf16.msra.mxu0 0
    %358 = vmatprep.subr.bf16.mxu0 0
    %359 = vmatpush1.bf16.msra.mxu0 0
    %360 = vmatprep.subr.bf16.mxu0 0
    %361 = vmatpush1.bf16.msra.mxu0 0
    %362 = vmatprep.subr.bf16.mxu0 0
    %363 = vmatpush1.bf16.msra.mxu0 0
    %364 = vmatprep.mubr.bf16.mxu0 0
    %365 = vmatmul.mubr.bf16.gmra.mrb[0].mxu0 %v323
    %v366 = vpop.f32.mrb[0].mxu0
    %v367 = vadd.f32 0.0, %v366
    %v368 = vpop.f32.mrb[0].mxu0
    %v369 = vpop.f32.mrb[0].mxu0
    %v370 = vadd.f32 0.0, %v369
    %v371 = vpop.f32.mrb[0].mxu0
    %372 = vmatprep.mubr.bf16.mxu0 0
    %373 = vmatmul.mubr.bf16.gmra.mrb[0].mxu0 %v326
    %v374 = vpop.f32.mrb[0].mxu0
    %v375 = vadd.f32 0.0, %v374
    %v376 = vpop.f32.mrb[0].mxu0
    %v377 = vpop.f32.mrb[0].mxu0
    %v378 = vpop.f32.mrb[0].mxu0
    %379 = vdwg.mxu0
    %v380 = vlaneseq
    %v381 = vshrl.u32 %v380, 7
    %v382 = vsub.s32 2, %v381
    %v383 = vrot.slane %v300, %v382
    %v384 = vmul.f32 %v367, %v383
    %v385 = vmul.f32 %v370, %v383
    %v386 = vmul.f32 %v375, %v383
    %v387 = vadd.f32 %v307, %v384
    %v388 = vadd.f32 %v308, %v385
    %v389 = vadd.f32 %v309, %v386
    %v390 = vld [vmem:[%s1 + $0x130] sm:$0xf]
    %v391 = vld [vmem:[%s1 + $0x138] sm:$0xf]
    %v392 = vld [vmem:[%s1 + $0x140] sm:$0x1]
    %v396 = vunpack.c.l.b16 %v390
    %v397 = vunpack.c.l.b16 %v391
    %v398 = vunpack.c.l.b16 %v392
    %v399 = vpack.c.b16 %v397, %v396
    %v400 = vpack.c.b16 %v398, %v398
    %v402 = vsel %vm321, %v399, 0
    %v405 = vsel %vm321, %v400, 0
    %407 = vmatprep.subr.bf16.mxu0 0
    %408 = vmatpush1.bf16.msra.mxu0 %v301
    %409 = vmatprep.subr.bf16.mxu0 0
    %410 = vmatpush1.bf16.msra.mxu0 %v330
    %411 = vmatprep.subr.bf16.mxu0 0
    %412 = vmatpush1.bf16.msra.mxu0 0
    %413 = vmatprep.subr.bf16.mxu0 0
    %414 = vmatpush1.bf16.msra.mxu0 0
    %415 = vmatprep.subr.bf16.mxu0 0
    %416 = vmatpush1.bf16.msra.mxu0 0
    %417 = vmatprep.subr.bf16.mxu0 0
    %418 = vmatpush1.bf16.msra.mxu0 0
    %419 = vmatprep.subr.bf16.mxu0 0
    %420 = vmatpush1.bf16.msra.mxu0 0
    %421 = vmatprep.subr.bf16.mxu0 0
    %422 = vmatpush1.bf16.msra.mxu0 0
    %423 = vmatprep.subr.bf16.mxu0 0
    %424 = vmatpush1.bf16.msra.mxu0 0
    %425 = vmatprep.subr.bf16.mxu0 0
    %426 = vmatpush1.bf16.msra.mxu0 0
    %427 = vmatprep.subr.bf16.mxu0 0
    %428 = vmatpush1.bf16.msra.mxu0 0
    %429 = vmatprep.subr.bf16.mxu0 0
    %430 = vmatpush1.bf16.msra.mxu0 0
    %431 = vmatprep.subr.bf16.mxu0 0
    %432 = vmatpush1.bf16.msra.mxu0 0
    %433 = vmatprep.subr.bf16.mxu0 0
    %434 = vmatpush1.bf16.msra.mxu0 0
    %435 = vmatprep.subr.bf16.mxu0 0
    %436 = vmatpush1.bf16.msra.mxu0 0
    %437 = vmatprep.subr.bf16.mxu0 0
    %438 = vmatpush1.bf16.msra.mxu0 0
    %439 = vmatprep.mubr.bf16.mxu0 0
    %440 = vmatmul.mubr.bf16.gmra.mrb[0].mxu0 %v402
    %v441 = vpop.f32.mrb[0].mxu0
    %v442 = vadd.f32 0.0, %v441
    %v443 = vpop.f32.mrb[0].mxu0
    %v444 = vpop.f32.mrb[0].mxu0
    %v445 = vadd.f32 0.0, %v444
    %v446 = vpop.f32.mrb[0].mxu0
    %447 = vmatprep.mubr.bf16.mxu0 0
    %448 = vmatmul.mubr.bf16.gmra.mrb[0].mxu0 %v405
    %v449 = vpop.f32.mrb[0].mxu0
    %v450 = vadd.f32 0.0, %v449
    %v451 = vpop.f32.mrb[0].mxu0
    %v452 = vpop.f32.mrb[0].mxu0
    %v453 = vpop.f32.mrb[0].mxu0
    %454 = vdwg.mxu0
    %v455 = vlaneseq
    %v456 = vshrl.u32 %v455, 7
    %v457 = vsub.s32 1, %v456
    %v458 = vrot.slane %v300, %v457
    %v459 = vmul.f32 %v442, %v458
    %v460 = vmul.f32 %v445, %v458
    %v461 = vmul.f32 %v450, %v458
    %v462 = vadd.f32 %v387, %v459
    %v463 = vadd.f32 %v388, %v460
    %v464 = vadd.f32 %v389, %v461
    %v465 = vld [vmem:[%s1 + $0x150] sm:$0xf]
    %v466 = vld [vmem:[%s1 + $0x158] sm:$0xf]
    %v467 = vld [vmem:[%s1 + $0x160] sm:$0x1]
    %v471 = vunpack.c.l.b16 %v465
    %v472 = vunpack.c.l.b16 %v466
    %v473 = vunpack.c.l.b16 %v467
    %v474 = vpack.c.b16 %v472, %v471
    %v475 = vpack.c.b16 %v473, %v473
    %v477 = vsel %vm321, %v474, 0
    %v480 = vsel %vm321, %v475, 0
    %482 = vmatprep.subr.bf16.mxu0 0
    %483 = vmatpush1.bf16.msra.mxu0 %v301
    %484 = vmatprep.subr.bf16.mxu0 0
    %485 = vmatpush1.bf16.msra.mxu0 %v330
    %486 = vmatprep.subr.bf16.mxu0 0
    %487 = vmatpush1.bf16.msra.mxu0 0
    %488 = vmatprep.subr.bf16.mxu0 0
    %489 = vmatpush1.bf16.msra.mxu0 0
    %490 = vmatprep.subr.bf16.mxu0 0
    %491 = vmatpush1.bf16.msra.mxu0 0
    %492 = vmatprep.subr.bf16.mxu0 0
    %493 = vmatpush1.bf16.msra.mxu0 0
    %494 = vmatprep.subr.bf16.mxu0 0
    %495 = vmatpush1.bf16.msra.mxu0 0
    %496 = vmatprep.subr.bf16.mxu0 0
    %497 = vmatpush1.bf16.msra.mxu0 0
    %498 = vmatprep.subr.bf16.mxu0 0
    %499 = vmatpush1.bf16.msra.mxu0 0
    %500 = vmatprep.subr.bf16.mxu0 0
    %501 = vmatpush1.bf16.msra.mxu0 0
    %502 = vmatprep.subr.bf16.mxu0 0
    %503 = vmatpush1.bf16.msra.mxu0 0
    %504 = vmatprep.subr.bf16.mxu0 0
    %505 = vmatpush1.bf16.msra.mxu0 0
    %506 = vmatprep.subr.bf16.mxu0 0
    %507 = vmatpush1.bf16.msra.mxu0 0
    %508 = vmatprep.subr.bf16.mxu0 0
    %509 = vmatpush1.bf16.msra.mxu0 0
    %510 = vmatprep.subr.bf16.mxu0 0
    %511 = vmatpush1.bf16.msra.mxu0 0
    %512 = vmatprep.subr.bf16.mxu0 0
    %513 = vmatpush1.bf16.msra.mxu0 0
    %514 = vmatprep.mubr.bf16.mxu0 0
    %515 = vmatmul.mubr.bf16.gmra.mrb[0].mxu0 %v477
    %v516 = vpop.f32.mrb[0].mxu0
    %v517 = vadd.f32 0.0, %v516
    %v518 = vpop.f32.mrb[0].mxu0
    %v519 = vpop.f32.mrb[0].mxu0
    %v520 = vadd.f32 0.0, %v519
    %v521 = vpop.f32.mrb[0].mxu0
    %522 = vmatprep.mubr.bf16.mxu0 0
    %523 = vmatmul.mubr.bf16.gmra.mrb[0].mxu0 %v480
    %v524 = vpop.f32.mrb[0].mxu0
    %v525 = vadd.f32 0.0, %v524
    %v526 = vpop.f32.mrb[0].mxu0
    %v527 = vpop.f32.mrb[0].mxu0
    %v528 = vpop.f32.mrb[0].mxu0
    %529 = vdwg.mxu0
    %v530 = vlaneseq
    %v531 = vshrl.u32 %v530, 7
    %v532 = vsub.s32 0, %v531
    %v533 = vrot.slane %v300, %v532
    %v534 = vmul.f32 %v517, %v533
    %v535 = vmul.f32 %v520, %v533
    %v536 = vmul.f32 %v525, %v533
    %v537 = vadd.f32 %v462, %v534
    %v538 = vadd.f32 %v463, %v535
    %v539 = vadd.f32 %v464, %v536
    %v540 = vld [vmem:[%s2 + $0x118] sm:$0x1]
    %v541 = vlaneseq
    %v542 = vshrl.u32 %v541, 7
    %v543 = vsub.s32 0, %v542
    %v544 = vrot.slane %v540, %v543
    %v545 = vadd.f32 %v537, %v544
    %v546 = vadd.f32 %v538, %v544
    %v547 = vadd.f32 %v539, %v544
    %v548 = vsub.f32 0.0, %v545
    %v549 = vsub.f32 0.0, %v546
    %v550 = vsub.f32 0.0, %v547
    %v551 = vmul.f32 %v548, 1.442695
    %v552 = vpow.pop %v551
    %v553 = vmul.f32 %v549, 1.442695
    %v554 = vpow.pop %v553
    %v555 = vmul.f32 %v550, 1.442695
    %v556 = vpow.pop %v555
    %v557 = vadd.f32 %v552, 1.0
    %v558 = vadd.f32 %v554, 1.0
    %v559 = vadd.f32 %v556, 1.0
    %v560 = vrcp.pop %v557
    %v561 = vmul.f32 1.0, %v560
    %v562 = vrcp.pop %v558
    %v563 = vmul.f32 1.0, %v562
    %v564 = vrcp.pop %v559
    %v565 = vmul.f32 1.0, %v564
    %v566 = vmul.f32 %v545, %v561
    %v567 = vmul.f32 %v546, %v563
    %v568 = vmul.f32 %v547, %v565
    %v569 = vld [vmem:[%s1 + $0x190] sm:$0xf]
    %v570 = vld [vmem:[%s1 + $0x198] sm:$0xf]
    %v571 = vld [vmem:[%s1 + $0x1a0] sm:$0xf]
    %v572 = vld [vmem:[%s1 + $0x1a8] sm:$0xf]
    %v573 = vld [vmem:[%s1 + $0x1b0] sm:$0xf]
    %v574 = vld [vmem:[%s1 + $0x1b8] sm:$0xf]
    %v575 = vld [vmem:[%s1 + $0x1c0] sm:$0xf]
    %v576 = vld [vmem:[%s1 + $0x1c8] sm:$0xf]
    %v577 = vpack.c.bf16 %v567, %v566
    %v578 = vpack.c.bf16 %v568, %v568
    %v587 = vunpack.c.l.b16 %v569
    %v588 = vunpack.c.l.b16 %v570
    %v589 = vunpack.c.l.b16 %v571
    %v590 = vunpack.c.l.b16 %v572
    %v591 = vunpack.c.l.b16 %v573
    %v592 = vunpack.c.l.b16 %v574
    %v593 = vunpack.c.l.b16 %v575
    %v594 = vunpack.c.l.b16 %v576
    %v595 = vpack.c.b16 %v588, %v587
    %v596 = vpack.c.b16 %v590, %v589
    %v597 = vpack.c.b16 %v592, %v591
    %v598 = vpack.c.b16 %v594, %v593
    %vm603 = vcmask 523264
    %v605 = vsel %vm603, %v577, 0
    %v608 = vsel %vm603, %v578, 0
    %610 = vmatprep.subr.bf16.mxu0 0
    %611 = vmatpush1.bf16.msra.mxu0 %v595
    %612 = vmatprep.subr.bf16.mxu0 0
    %613 = vmatpush1.bf16.msra.mxu0 %v596
    %614 = vmatprep.subr.bf16.mxu0 0
    %615 = vmatpush1.bf16.msra.mxu0 %v597
    %616 = vmatprep.subr.bf16.mxu0 0
    %617 = vmatpush1.bf16.msra.mxu0 %v598
    %618 = vmatprep.subr.bf16.mxu0 0
    %619 = vmatpush1.bf16.msra.mxu0 0
    %620 = vmatprep.subr.bf16.mxu0 0
    %621 = vmatpush1.bf16.msra.mxu0 0
    %622 = vmatprep.subr.bf16.mxu0 0
    %623 = vmatpush1.bf16.msra.mxu0 0
    %624 = vmatprep.subr.bf16.mxu0 0
    %625 = vmatpush1.bf16.msra.mxu0 0
    %626 = vmatprep.subr.bf16.mxu0 0
    %627 = vmatpush1.bf16.msra.mxu0 0
    %628 = vmatprep.subr.bf16.mxu0 0
    %629 = vmatpush1.bf16.msra.mxu0 0
    %630 = vmatprep.subr.bf16.mxu0 0
    %631 = vmatpush1.bf16.msra.mxu0 0
    %632 = vmatprep.subr.bf16.mxu0 0
    %633 = vmatpush1.bf16.msra.mxu0 0
    %634 = vmatprep.subr.bf16.mxu0 0
    %635 = vmatpush1.bf16.msra.mxu0 0
    %636 = vmatprep.subr.bf16.mxu0 0
    %637 = vmatpush1.bf16.msra.mxu0 0
    %638 = vmatprep.subr.bf16.mxu0 0
    %639 = vmatpush1.bf16.msra.mxu0 0
    %640 = vmatprep.subr.bf16.mxu0 0
    %641 = vmatpush1.bf16.msra.mxu0 0
    %642 = vmatprep.mubr.bf16.mxu0 0
    %643 = vmatmul.mubr.bf16.gmra.mrb[0].mxu0 %v605
    %v644 = vpop.f32.mrb[0].mxu0
    %v645 = vadd.f32 0.0, %v644
    %v646 = vpop.f32.mrb[0].mxu0
    %v647 = vpop.f32.mrb[0].mxu0
    %v648 = vadd.f32 0.0, %v647
    %v649 = vpop.f32.mrb[0].mxu0
    %650 = vmatprep.mubr.bf16.mxu0 0
    %651 = vmatmul.mubr.bf16.gmra.mrb[0].mxu0 %v608
    %v652 = vpop.f32.mrb[0].mxu0
    %v653 = vadd.f32 0.0, %v652
    %v654 = vpop.f32.mrb[0].mxu0
    %v655 = vpop.f32.mrb[0].mxu0
    %v656 = vpop.f32.mrb[0].mxu0
    %657 = vdwg.mxu0
    %v658 = vld [vmem:[%s1 + $0x1d0] sm:$0x1]
    %v659 = vpack.c.bf16 %v648, %v645
    %v660 = vpack.c.bf16 %v653, %v653
    %v661 = vld [vmem:[%s2 + $0x120] sm:$0x1]
    %v662 = vlaneseq
    %v663 = vshrl.u32 %v662, 7
    %v664 = vsub.s32 0, %v663
    %v665 = vrot.slane %v661, %v664
    %vm666 = vcmask 15360
    %v668 = vsel %vm666, %v659, 0
    %v671 = vsel %vm666, %v660, 0
    %v674 = vsel %vm328, %v658, 0
    %676 = vmatprep.subr.bf16.mxu0 0
    %677 = vmatpush1.bf16.msra.mxu0 %v674
    %678 = vmatprep.subr.bf16.mxu0 0
    %679 = vmatpush1.bf16.msra.mxu0 0
    %680 = vmatprep.subr.bf16.mxu0 0
    %681 = vmatpush1.bf16.msra.mxu0 0
    %682 = vmatprep.subr.bf16.mxu0 0
    %683 = vmatpush1.bf16.msra.mxu0 0
    %684 = vmatprep.subr.bf16.mxu0 0
    %685 = vmatpush1.bf16.msra.mxu0 0
    %686 = vmatprep.subr.bf16.mxu0 0
    %687 = vmatpush1.bf16.msra.mxu0 0
    %688 = vmatprep.subr.bf16.mxu0 0
    %689 = vmatpush1.bf16.msra.mxu0 0
    %690 = vmatprep.subr.bf16.mxu0 0
    %691 = vmatpush1.bf16.msra.mxu0 0
    %692 = vmatprep.subr.bf16.mxu0 0
    %693 = vmatpush1.bf16.msra.mxu0 0
    %694 = vmatprep.subr.bf16.mxu0 0
    %695 = vmatpush1.bf16.msra.mxu0 0
    %696 = vmatprep.subr.bf16.mxu0 0
    %697 = vmatpush1.bf16.msra.mxu0 0
    %698 = vmatprep.subr.bf16.mxu0 0
    %699 = vmatpush1.bf16.msra.mxu0 0
    %700 = vmatprep.subr.bf16.mxu0 0
    %701 = vmatpush1.bf16.msra.mxu0 0
    %702 = vmatprep.subr.bf16.mxu0 0
    %703 = vmatpush1.bf16.msra.mxu0 0
    %704 = vmatprep.subr.bf16.mxu0 0
    %705 = vmatpush1.bf16.msra.mxu0 0
    %706 = vmatprep.subr.bf16.mxu0 0
    %707 = vmatpush1.bf16.msra.mxu0 0
    %708 = vmatprep.mubr.bf16.mxu0 0
    %709 = vmatmul.mubr.bf16.gmra.mrb[0].mxu0 %v668
    %v710 = vpop.f32.mrb[0].mxu0
    %v711 = vadd.f32 %v665, %v710
    %v712 = vpop.f32.mrb[0].mxu0
    %v713 = vpop.f32.mrb[0].mxu0
    %v714 = vadd.f32 %v665, %v713
    %v715 = vpop.f32.mrb[0].mxu0
    %716 = vmatprep.mubr.bf16.mxu0 0
    %717 = vmatmul.mubr.bf16.gmra.mrb[0].mxu0 %v671
    %v718 = vpop.f32.mrb[0].mxu0
    %v719 = vadd.f32 %v665, %v718
    %v720 = vpop.f32.mrb[0].mxu0
    %v721 = vpop.f32.mrb[0].mxu0
    %v722 = vpop.f32.mrb[0].mxu0
    %723 = vdwg.mxu0
    %v724 = vmax.f32 %v711, 0.0
    %v725 = vmax.f32 %v714, 0.0
    %v726 = vmax.f32 %v719, 0.0
    %v727 = vand.u32 2147483647, %v711
    %v728 = vand.u32 2147483647, %v714
    %v729 = vand.u32 2147483647, %v719
    %v730 = vsub.f32 0.0, %v727
    %v731 = vsub.f32 0.0, %v728
    %v732 = vsub.f32 0.0, %v729
    %v733 = vmul.f32 %v730, 1.442695
    %v734 = vpow.pop %v733
    %v735 = vmul.f32 %v731, 1.442695
    %v736 = vpow.pop %v735
    %v737 = vmul.f32 %v732, 1.442695
    %v738 = vpow.pop %v737
    %v739 = vadd.f32 %v734, 1.0
    %v740 = vadd.f32 %v736, 1.0
    %v741 = vadd.f32 %v738, 1.0
    %v742 = vlog2.pop %v739
    %v743 = vmul.f32 %v742, 0.6931472
    %v744 = vlog2.pop %v740
    %v745 = vmul.f32 %v744, 0.6931472
    %v746 = vlog2.pop %v741
    %v747 = vmul.f32 %v746, 0.6931472
    %v748 = vadd.f32 %v724, %v743
    %v749 = vadd.f32 %v725, %v745
    %v750 = vadd.f32 %v726, %v747
    %v751 = vld [vmem:[%s1 + $0x30] sm:$0xf]
    %v752 = vld [vmem:[%s1 + $0x38] sm:$0xf]
    %v753 = vld [vmem:[%s1 + $0x40] sm:$0xf]
    %v754 = vld [vmem:[%s1 + $0x48] sm:$0xf]
    %v755 = vld [vmem:[%s1 + $0x50] sm:$0xf]
    %v756 = vld [vmem:[%s1 + $0x58] sm:$0xf]
    %v757 = vld [vmem:[%s1 + $0x60] sm:$0xf]
    %v758 = vld [vmem:[%s1 + $0x68] sm:$0xf]
    %v759 = vld [vmem:[%s1 + $0x70] sm:$0xf]
    %v760 = vld [vmem:[%s1 + $0x78] sm:$0xf]
    %v761 = vld [vmem:[%s1 + $0x80] sm:$0xf]
    %v762 = vld [vmem:[%s1 + $0x88] sm:$0xf]
    %v763 = vld [vmem:[%s1 + $0x90] sm:$0xf]
    %v764 = vld [vmem:[%s1 + $0x98] sm:$0xf]
    %v765 = vld [vmem:[%s1 + $0xa0] sm:$0xf]
    %v766 = vld [vmem:[%s1 + $0xa8] sm:$0xf]
    %v767 = vld [vmem:[%s1 + $0xb0] sm:$0xf]
    %v768 = vld [vmem:[%s1 + $0xb8] sm:$0xf]
    %v769 = vld [vmem:[%s2 + $0x78] sm:$0xff]
    %v770 = vld [vmem:[%s2 + $0x80] sm:$0xff]
    %v771 = vld [vmem:[%s2 + $0x88] sm:$0xff]
    %v772 = vld [vmem:[%s2 + $0x90] sm:$0xff]
    %v773 = vld [vmem:[%s2 + $0x98] sm:$0xff]
    %v774 = vld [vmem:[%s2 + $0xa0] sm:$0xff]
    %v775 = vld [vmem:[%s2 + $0xa8] sm:$0xff]
    %v776 = vld [vmem:[%s2 + $0xb0] sm:$0xff]
    %v777 = vld [vmem:[%s2 + $0xb8] sm:$0xff]
    %v778 = vld [vmem:[%s2 + $0xc0] sm:$0xff]
    %v779 = vld [vmem:[%s2 + $0xc8] sm:$0xff]
    %v780 = vld [vmem:[%s2 + $0xd0] sm:$0xff]
    %v781 = vld [vmem:[%s2 + $0xd8] sm:$0xff]
    %v782 = vld [vmem:[%s2 + $0xe0] sm:$0xff]
    %v783 = vld [vmem:[%s2 + $0xe8] sm:$0xff]
    %v784 = vld [vmem:[%s2 + $0xf0] sm:$0xff]
    %v785 = vld [vmem:[%s2 + $0xf8] sm:$0xff]
    %v786 = vld [vmem:[%s2 + $0x100] sm:$0xff]
    %v787 = vpack.c.bf16 %v749, %v748
    %v788 = vpack.c.bf16 %v750, %v750
    %v807 = vunpack.c.l.b16 %v751
    %v808 = vunpack.c.l.b16 %v752
    %v809 = vunpack.c.l.b16 %v753
    %v810 = vunpack.c.l.b16 %v754
    %v811 = vunpack.c.l.b16 %v755
    %v812 = vunpack.c.l.b16 %v756
    %v813 = vunpack.c.l.b16 %v757
    %v814 = vunpack.c.l.b16 %v758
    %v815 = vunpack.c.l.b16 %v759
    %v816 = vunpack.c.l.b16 %v760
    %v817 = vunpack.c.l.b16 %v761
    %v818 = vunpack.c.l.b16 %v762
    %v819 = vunpack.c.l.b16 %v763
    %v820 = vunpack.c.l.b16 %v764
    %v821 = vunpack.c.l.b16 %v765
    %v822 = vunpack.c.l.b16 %v766
    %v823 = vunpack.c.l.b16 %v767
    %v824 = vunpack.c.l.b16 %v768
    %v825 = vpack.c.b16 %v808, %v807
    %v826 = vpack.c.b16 %v810, %v809
    %v827 = vpack.c.b16 %v812, %v811
    %v828 = vpack.c.b16 %v814, %v813
    %v829 = vpack.c.b16 %v816, %v815
    %v830 = vpack.c.b16 %v818, %v817
    %v831 = vpack.c.b16 %v820, %v819
    %v832 = vpack.c.b16 %v822, %v821
    %v833 = vpack.c.b16 %v824, %v823
    %v835 = vsel %vm321, %v825, 0
    %v838 = vsel %vm321, %v826, 0
    %v841 = vsel %vm321, %v827, 0
    %v844 = vsel %vm321, %v828, 0
    %v847 = vsel %vm321, %v829, 0
    %v850 = vsel %vm321, %v830, 0
    %v853 = vsel %vm321, %v831, 0
    %v856 = vsel %vm321, %v832, 0
    %v859 = vsel %vm321, %v833, 0
    %v862 = vsel %vm328, %v788, 0
    %864 = vmatprep.subr.bf16.mxu0 0
    %865 = vmatpush1.bf16.msra.mxu0 %v787
    %866 = vmatprep.subr.bf16.mxu0 0
    %867 = vmatpush1.bf16.msra.mxu0 %v862
    %868 = vmatprep.subr.bf16.mxu0 0
    %869 = vmatpush1.bf16.msra.mxu0 0
    %870 = vmatprep.subr.bf16.mxu0 0
    %871 = vmatpush1.bf16.msra.mxu0 0
    %872 = vmatprep.subr.bf16.mxu0 0
    %873 = vmatpush1.bf16.msra.mxu0 0
    %874 = vmatprep.subr.bf16.mxu0 0
    %875 = vmatpush1.bf16.msra.mxu0 0
    %876 = vmatprep.subr.bf16.mxu0 0
    %877 = vmatpush1.bf16.msra.mxu0 0
    %878 = vmatprep.subr.bf16.mxu0 0
    %879 = vmatpush1.bf16.msra.mxu0 0
    %880 = vmatprep.subr.bf16.mxu0 0
    %881 = vmatpush1.bf16.msra.mxu0 0
    %882 = vmatprep.subr.bf16.mxu0 0
    %883 = vmatpush1.bf16.msra.mxu0 0
    %884 = vmatprep.subr.bf16.mxu0 0
    %885 = vmatpush1.bf16.msra.mxu0 0
    %886 = vmatprep.subr.bf16.mxu0 0
    %887 = vmatpush1.bf16.msra.mxu0 0
    %888 = vmatprep.subr.bf16.mxu0 0
    %889 = vmatpush1.bf16.msra.mxu0 0
    %890 = vmatprep.subr.bf16.mxu0 0
    %891 = vmatpush1.bf16.msra.mxu0 0
    %892 = vmatprep.subr.bf16.mxu0 0
    %893 = vmatpush1.bf16.msra.mxu0 0
    %894 = vmatprep.subr.bf16.mxu0 0
    %895 = vmatpush1.bf16.msra.mxu0 0
    %896 = vmatprep.mubr.bf16.mxu0 0
    %897 = vmatmul.mubr.bf16.gmra.mrb[0].mxu0 %v835
    %v898 = vpop.f32.mrb[0].mxu0
    %v899 = vadd.f32 0.0, %v898
    %v900 = vpop.f32.mrb[0].mxu0
    %v901 = vpop.f32.mrb[0].mxu0
    %v902 = vadd.f32 0.0, %v901
    %v903 = vpop.f32.mrb[0].mxu0
    %904 = vmatprep.mubr.bf16.mxu0 0
    %905 = vmatmul.mubr.bf16.gmra.mrb[0].mxu0 %v838
    %v906 = vpop.f32.mrb[0].mxu0
    %v907 = vadd.f32 0.0, %v906
    %v908 = vpop.f32.mrb[0].mxu0
    %v909 = vpop.f32.mrb[0].mxu0
    %v910 = vadd.f32 0.0, %v909
    %v911 = vpop.f32.mrb[0].mxu0
    %912 = vmatprep.mubr.bf16.mxu0 0
    %913 = vmatmul.mubr.bf16.gmra.mrb[0].mxu0 %v841
    %v914 = vpop.f32.mrb[0].mxu0
    %v915 = vadd.f32 0.0, %v914
    %v916 = vpop.f32.mrb[0].mxu0
    %v917 = vpop.f32.mrb[0].mxu0
    %v918 = vadd.f32 0.0, %v917
    %v919 = vpop.f32.mrb[0].mxu0
    %920 = vmatprep.mubr.bf16.mxu0 0
    %921 = vmatmul.mubr.bf16.gmra.mrb[0].mxu0 %v844
    %v922 = vpop.f32.mrb[0].mxu0
    %v923 = vadd.f32 0.0, %v922
    %v924 = vpop.f32.mrb[0].mxu0
    %v925 = vpop.f32.mrb[0].mxu0
    %v926 = vadd.f32 0.0, %v925
    %v927 = vpop.f32.mrb[0].mxu0
    %928 = vmatprep.mubr.bf16.mxu0 0
    %929 = vmatmul.mubr.bf16.gmra.mrb[0].mxu0 %v847
    %v930 = vpop.f32.mrb[0].mxu0
    %v931 = vadd.f32 0.0, %v930
    %v932 = vpop.f32.mrb[0].mxu0
    %v933 = vpop.f32.mrb[0].mxu0
    %v934 = vadd.f32 0.0, %v933
    %v935 = vpop.f32.mrb[0].mxu0
    %936 = vmatprep.mubr.bf16.mxu0 0
    %937 = vmatmul.mubr.bf16.gmra.mrb[0].mxu0 %v850
    %v938 = vpop.f32.mrb[0].mxu0
    %v939 = vadd.f32 0.0, %v938
    %v940 = vpop.f32.mrb[0].mxu0
    %v941 = vpop.f32.mrb[0].mxu0
    %v942 = vadd.f32 0.0, %v941
    %v943 = vpop.f32.mrb[0].mxu0
    %944 = vmatprep.mubr.bf16.mxu0 0
    %945 = vmatmul.mubr.bf16.gmra.mrb[0].mxu0 %v853
    %v946 = vpop.f32.mrb[0].mxu0
    %v947 = vadd.f32 0.0, %v946
    %v948 = vpop.f32.mrb[0].mxu0
    %v949 = vpop.f32.mrb[0].mxu0
    %v950 = vadd.f32 0.0, %v949
    %v951 = vpop.f32.mrb[0].mxu0
    %952 = vmatprep.mubr.bf16.mxu0 0
    %953 = vmatmul.mubr.bf16.gmra.mrb[0].mxu0 %v856
    %v954 = vpop.f32.mrb[0].mxu0
    %v955 = vadd.f32 0.0, %v954
    %v956 = vpop.f32.mrb[0].mxu0
    %v957 = vpop.f32.mrb[0].mxu0
    %v958 = vadd.f32 0.0, %v957
    %v959 = vpop.f32.mrb[0].mxu0
    %960 = vmatprep.mubr.bf16.mxu0 0
    %961 = vmatmul.mubr.bf16.gmra.mrb[0].mxu0 %v859
    %v962 = vpop.f32.mrb[0].mxu0
    %v963 = vadd.f32 0.0, %v962
    %v964 = vpop.f32.mrb[0].mxu0
    %v965 = vpop.f32.mrb[0].mxu0
    %v966 = vadd.f32 0.0, %v965
    %v967 = vpop.f32.mrb[0].mxu0
    %968 = vdwg.mxu0
    %v969 = vmul.f32 %v748, %v566
    %v970 = vmul.f32 %v749, %v567
    %v971 = vmul.f32 %v750, %v568
    %v972 = vpack.c.bf16 %v970, %v969
    %v973 = vpack.c.bf16 %v971, %v971
    %v975 = vsel %vm328, %v973, 0
    %977 = vmatprep.subr.bf16.mxu0 0
    %978 = vmatpush1.bf16.msra.mxu0 %v972
    %979 = vmatprep.subr.bf16.mxu0 0
    %980 = vmatpush1.bf16.msra.mxu0 %v975
    %981 = vmatprep.subr.bf16.mxu0 0
    %982 = vmatpush1.bf16.msra.mxu0 0
    %983 = vmatprep.subr.bf16.mxu0 0
    %984 = vmatpush1.bf16.msra.mxu0 0
    %985 = vmatprep.subr.bf16.mxu0 0
    %986 = vmatpush1.bf16.msra.mxu0 0
    %987 = vmatprep.subr.bf16.mxu0 0
    %988 = vmatpush1.bf16.msra.mxu0 0
    %989 = vmatprep.subr.bf16.mxu0 0
    %990 = vmatpush1.bf16.msra.mxu0 0
    %991 = vmatprep.subr.bf16.mxu0 0
    %992 = vmatpush1.bf16.msra.mxu0 0
    %993 = vmatprep.subr.bf16.mxu0 0
    %994 = vmatpush1.bf16.msra.mxu0 0
    %995 = vmatprep.subr.bf16.mxu0 0
    %996 = vmatpush1.bf16.msra.mxu0 0
    %997 = vmatprep.subr.bf16.mxu0 0
    %998 = vmatpush1.bf16.msra.mxu0 0
    %999 = vmatprep.subr.bf16.mxu0 0
    %1000 = vmatpush1.bf16.msra.mxu0 0
    %1001 = vmatprep.subr.bf16.mxu0 0
    %1002 = vmatpush1.bf16.msra.mxu0 0
    %1003 = vmatprep.subr.bf16.mxu0 0
    %1004 = vmatpush1.bf16.msra.mxu0 0
    %1005 = vmatprep.subr.bf16.mxu0 0
    %1006 = vmatpush1.bf16.msra.mxu0 0
    %1007 = vmatprep.subr.bf16.mxu0 0
    %1008 = vmatpush1.bf16.msra.mxu0 0
    %1009 = vmatprep.mubr.bf16.mxu0 0
    %1010 = vmatmul.mubr.bf16.gmra.mrb[0].mxu0 %v835
    %v1011 = vpop.f32.mrb[0].mxu0
    %v1012 = vadd.f32 0.0, %v1011
    %v1013 = vpop.f32.mrb[0].mxu0
    %v1014 = vpop.f32.mrb[0].mxu0
    %v1015 = vadd.f32 0.0, %v1014
    %v1016 = vpop.f32.mrb[0].mxu0
    %1017 = vmatprep.mubr.bf16.mxu0 0
    %1018 = vmatmul.mubr.bf16.gmra.mrb[0].mxu0 %v838
    %v1019 = vpop.f32.mrb[0].mxu0
    %v1020 = vadd.f32 0.0, %v1019
    %v1021 = vpop.f32.mrb[0].mxu0
    %v1022 = vpop.f32.mrb[0].mxu0
    %v1023 = vadd.f32 0.0, %v1022
    %v1024 = vpop.f32.mrb[0].mxu0
    %1025 = vmatprep.mubr.bf16.mxu0 0
    %1026 = vmatmul.mubr.bf16.gmra.mrb[0].mxu0 %v841
    %v1027 = vpop.f32.mrb[0].mxu0
    %v1028 = vadd.f32 0.0, %v1027
    %v1029 = vpop.f32.mrb[0].mxu0
    %v1030 = vpop.f32.mrb[0].mxu0
    %v1031 = vadd.f32 0.0, %v1030
    %v1032 = vpop.f32.mrb[0].mxu0
    %1033 = vmatprep.mubr.bf16.mxu0 0
    %1034 = vmatmul.mubr.bf16.gmra.mrb[0].mxu0 %v844
    %v1035 = vpop.f32.mrb[0].mxu0
    %v1036 = vadd.f32 0.0, %v1035
    %v1037 = vpop.f32.mrb[0].mxu0
    %v1038 = vpop.f32.mrb[0].mxu0
    %v1039 = vadd.f32 0.0, %v1038
    %v1040 = vpop.f32.mrb[0].mxu0
    %1041 = vmatprep.mubr.bf16.mxu0 0
    %1042 = vmatmul.mubr.bf16.gmra.mrb[0].mxu0 %v847
    %v1043 = vpop.f32.mrb[0].mxu0
    %v1044 = vadd.f32 0.0, %v1043
    %v1045 = vpop.f32.mrb[0].mxu0
    %v1046 = vpop.f32.mrb[0].mxu0
    %v1047 = vadd.f32 0.0, %v1046
    %v1048 = vpop.f32.mrb[0].mxu0
    %1049 = vmatprep.mubr.bf16.mxu0 0
    %1050 = vmatmul.mubr.bf16.gmra.mrb[0].mxu0 %v850
    %v1051 = vpop.f32.mrb[0].mxu0
    %v1052 = vadd.f32 0.0, %v1051
    %v1053 = vpop.f32.mrb[0].mxu0
    %v1054 = vpop.f32.mrb[0].mxu0
    %v1055 = vadd.f32 0.0, %v1054
    %v1056 = vpop.f32.mrb[0].mxu0
    %1057 = vmatprep.mubr.bf16.mxu0 0
    %1058 = vmatmul.mubr.bf16.gmra.mrb[0].mxu0 %v853
    %v1059 = vpop.f32.mrb[0].mxu0
    %v1060 = vadd.f32 0.0, %v1059
    %v1061 = vpop.f32.mrb[0].mxu0
    %v1062 = vpop.f32.mrb[0].mxu0
    %v1063 = vadd.f32 0.0, %v1062
    %v1064 = vpop.f32.mrb[0].mxu0
    %1065 = vmatprep.mubr.bf16.mxu0 0
    %1066 = vmatmul.mubr.bf16.gmra.mrb[0].mxu0 %v856
    %v1067 = vpop.f32.mrb[0].mxu0
    %v1068 = vadd.f32 0.0, %v1067
    %v1069 = vpop.f32.mrb[0].mxu0
    %v1070 = vpop.f32.mrb[0].mxu0
    %v1071 = vadd.f32 0.0, %v1070
    %v1072 = vpop.f32.mrb[0].mxu0
    %1073 = vmatprep.mubr.bf16.mxu0 0
    %1074 = vmatmul.mubr.bf16.gmra.mrb[0].mxu0 %v859
    %v1075 = vpop.f32.mrb[0].mxu0
    %v1076 = vadd.f32 0.0, %v1075
    %v1077 = vpop.f32.mrb[0].mxu0
    %v1078 = vpop.f32.mrb[0].mxu0
    %v1079 = vadd.f32 0.0, %v1078
    %v1080 = vpop.f32.mrb[0].mxu0
    %1081 = vdwg.mxu0
    %1084 = vrot.lane.b32.xlu0 %v659, 126
    %v1085 = vpop.permute.xlu0 %1084
    %1086 = vrot.lane.b32.xlu0 %v660, 126
    %v1087 = vpop.permute.xlu0 %1086
    %v1090 = vsel %vm328, %v1087, 0
    %1092 = vmatprep.subr.bf16.mxu0 0
    %1093 = vmatpush1.bf16.msra.mxu0 %v1085
    %1094 = vmatprep.subr.bf16.mxu0 0
    %1095 = vmatpush1.bf16.msra.mxu0 %v1090
    %1096 = vmatprep.subr.bf16.mxu0 0
    %1097 = vmatpush1.bf16.msra.mxu0 0
    %1098 = vmatprep.subr.bf16.mxu0 0
    %1099 = vmatpush1.bf16.msra.mxu0 0
    %1100 = vmatprep.subr.bf16.mxu0 0
    %1101 = vmatpush1.bf16.msra.mxu0 0
    %1102 = vmatprep.subr.bf16.mxu0 0
    %1103 = vmatpush1.bf16.msra.mxu0 0
    %1104 = vmatprep.subr.bf16.mxu0 0
    %1105 = vmatpush1.bf16.msra.mxu0 0
    %1106 = vmatprep.subr.bf16.mxu0 0
    %1107 = vmatpush1.bf16.msra.mxu0 0
    %1108 = vmatprep.subr.bf16.mxu0 0
    %1109 = vmatpush1.bf16.msra.mxu0 0
    %1110 = vmatprep.subr.bf16.mxu0 0
    %1111 = vmatpush1.bf16.msra.mxu0 0
    %1112 = vmatprep.subr.bf16.mxu0 0
    %1113 = vmatpush1.bf16.msra.mxu0 0
    %1114 = vmatprep.subr.bf16.mxu0 0
    %1115 = vmatpush1.bf16.msra.mxu0 0
    %1116 = vmatprep.subr.bf16.mxu0 0
    %1117 = vmatpush1.bf16.msra.mxu0 0
    %1118 = vmatprep.subr.bf16.mxu0 0
    %1119 = vmatpush1.bf16.msra.mxu0 0
    %1120 = vmatprep.subr.bf16.mxu0 0
    %1121 = vmatpush1.bf16.msra.mxu0 0
    %1122 = vmatprep.subr.bf16.mxu0 0
    %1123 = vmatpush1.bf16.msra.mxu0 0
    %1124 = vmatprep.mubr.bf16.mxu0 0
    %1125 = vmatmul.mubr.bf16.gmra.mrb[0].mxu0 %v835
    %v1126 = vpop.f32.mrb[0].mxu0
    %v1127 = vadd.f32 0.0, %v1126
    %v1128 = vpop.f32.mrb[0].mxu0
    %v1129 = vpop.f32.mrb[0].mxu0
    %v1130 = vadd.f32 0.0, %v1129
    %v1131 = vpop.f32.mrb[0].mxu0
    %1132 = vmatprep.mubr.bf16.mxu0 0
    %1133 = vmatmul.mubr.bf16.gmra.mrb[0].mxu0 %v838
    %v1134 = vpop.f32.mrb[0].mxu0
    %v1135 = vadd.f32 0.0, %v1134
    %v1136 = vpop.f32.mrb[0].mxu0
    %v1137 = vpop.f32.mrb[0].mxu0
    %v1138 = vadd.f32 0.0, %v1137
    %v1139 = vpop.f32.mrb[0].mxu0
    %1140 = vmatprep.mubr.bf16.mxu0 0
    %1141 = vmatmul.mubr.bf16.gmra.mrb[0].mxu0 %v841
    %v1142 = vpop.f32.mrb[0].mxu0
    %v1143 = vadd.f32 0.0, %v1142
    %v1144 = vpop.f32.mrb[0].mxu0
    %v1145 = vpop.f32.mrb[0].mxu0
    %v1146 = vadd.f32 0.0, %v1145
    %v1147 = vpop.f32.mrb[0].mxu0
    %1148 = vmatprep.mubr.bf16.mxu0 0
    %1149 = vmatmul.mubr.bf16.gmra.mrb[0].mxu0 %v844
    %v1150 = vpop.f32.mrb[0].mxu0
    %v1151 = vadd.f32 0.0, %v1150
    %v1152 = vpop.f32.mrb[0].mxu0
    %v1153 = vpop.f32.mrb[0].mxu0
    %v1154 = vadd.f32 0.0, %v1153
    %v1155 = vpop.f32.mrb[0].mxu0
    %1156 = vmatprep.mubr.bf16.mxu0 0
    %1157 = vmatmul.mubr.bf16.gmra.mrb[0].mxu0 %v847
    %v1158 = vpop.f32.mrb[0].mxu0
    %v1159 = vadd.f32 0.0, %v1158
    %v1160 = vpop.f32.mrb[0].mxu0
    %v1161 = vpop.f32.mrb[0].mxu0
    %v1162 = vadd.f32 0.0, %v1161
    %v1163 = vpop.f32.mrb[0].mxu0
    %1164 = vmatprep.mubr.bf16.mxu0 0
    %1165 = vmatmul.mubr.bf16.gmra.mrb[0].mxu0 %v850
    %v1166 = vpop.f32.mrb[0].mxu0
    %v1167 = vadd.f32 0.0, %v1166
    %v1168 = vpop.f32.mrb[0].mxu0
    %v1169 = vpop.f32.mrb[0].mxu0
    %v1170 = vadd.f32 0.0, %v1169
    %v1171 = vpop.f32.mrb[0].mxu0
    %1172 = vmatprep.mubr.bf16.mxu0 0
    %1173 = vmatmul.mubr.bf16.gmra.mrb[0].mxu0 %v853
    %v1174 = vpop.f32.mrb[0].mxu0
    %v1175 = vadd.f32 0.0, %v1174
    %v1176 = vpop.f32.mrb[0].mxu0
    %v1177 = vpop.f32.mrb[0].mxu0
    %v1178 = vadd.f32 0.0, %v1177
    %v1179 = vpop.f32.mrb[0].mxu0
    %1180 = vmatprep.mubr.bf16.mxu0 0
    %1181 = vmatmul.mubr.bf16.gmra.mrb[0].mxu0 %v856
    %v1182 = vpop.f32.mrb[0].mxu0
    %v1183 = vadd.f32 0.0, %v1182
    %v1184 = vpop.f32.mrb[0].mxu0
    %v1185 = vpop.f32.mrb[0].mxu0
    %v1186 = vadd.f32 0.0, %v1185
    %v1187 = vpop.f32.mrb[0].mxu0
    %1188 = vmatprep.mubr.bf16.mxu0 0
    %1189 = vmatmul.mubr.bf16.gmra.mrb[0].mxu0 %v859
    %v1190 = vpop.f32.mrb[0].mxu0
    %v1191 = vadd.f32 0.0, %v1190
    %v1192 = vpop.f32.mrb[0].mxu0
    %v1193 = vpop.f32.mrb[0].mxu0
    %v1194 = vadd.f32 0.0, %v1193
    %v1195 = vpop.f32.mrb[0].mxu0
    %1196 = vdwg.mxu0
    %v1197 = vmul.f32 %v1127, %v769
    %v1198 = vmul.f32 %v1130, %v770
    %v1199 = vmul.f32 %v1135, %v771
    %v1200 = vmul.f32 %v1138, %v772
    %v1201 = vmul.f32 %v1143, %v773
    %v1202 = vmul.f32 %v1146, %v774
    %v1203 = vmul.f32 %v1151, %v775
    %v1204 = vmul.f32 %v1154, %v776
    %v1205 = vmul.f32 %v1159, %v777
    %v1206 = vmul.f32 %v1162, %v778
    %v1207 = vmul.f32 %v1167, %v779
    %v1208 = vmul.f32 %v1170, %v780
    %v1209 = vmul.f32 %v1175, %v781
    %v1210 = vmul.f32 %v1178, %v782
    %v1211 = vmul.f32 %v1183, %v783
    %v1212 = vmul.f32 %v1186, %v784
    %v1213 = vmul.f32 %v1191, %v785
    %v1214 = vmul.f32 %v1194, %v786
    %vm1215 = vcmask 64512
    %v1216 = vsel %vm1215, %v1197, 0.0
    %1217 = vadd.xlane.f32.xlu0 %v1216
    %v1218 = vpop.xlane.xlu0 %1217
    %v1219 = vsel %vm1215, %v1198, 0.0
    %1220 = vadd.xlane.f32.xlu0 %v1219
    %v1221 = vpop.xlane.xlu0 %1220
    %v1222 = vsel %vm1215, %v1199, 0.0
    %1223 = vadd.xlane.f32.xlu0 %v1222
    %v1224 = vpop.xlane.xlu0 %1223
    %v1225 = vsel %vm1215, %v1200, 0.0
    %1226 = vadd.xlane.f32.xlu0 %v1225
    %v1227 = vpop.xlane.xlu0 %1226
    %v1228 = vsel %vm1215, %v1201, 0.0
    %1229 = vadd.xlane.f32.xlu0 %v1228
    %v1230 = vpop.xlane.xlu0 %1229
    %v1231 = vsel %vm1215, %v1202, 0.0
    %1232 = vadd.xlane.f32.xlu0 %v1231
    %v1233 = vpop.xlane.xlu0 %1232
    %v1234 = vsel %vm1215, %v1203, 0.0
    %1235 = vadd.xlane.f32.xlu0 %v1234
    %v1236 = vpop.xlane.xlu0 %1235
    %v1237 = vsel %vm1215, %v1204, 0.0
    %1238 = vadd.xlane.f32.xlu0 %v1237
    %v1239 = vpop.xlane.xlu0 %1238
    %v1240 = vsel %vm1215, %v1205, 0.0
    %1241 = vadd.xlane.f32.xlu0 %v1240
    %v1242 = vpop.xlane.xlu0 %1241
    %v1243 = vsel %vm1215, %v1206, 0.0
    %1244 = vadd.xlane.f32.xlu0 %v1243
    %v1245 = vpop.xlane.xlu0 %1244
    %v1246 = vsel %vm1215, %v1207, 0.0
    %1247 = vadd.xlane.f32.xlu0 %v1246
    %v1248 = vpop.xlane.xlu0 %1247
    %v1249 = vsel %vm1215, %v1208, 0.0
    %1250 = vadd.xlane.f32.xlu0 %v1249
    %v1251 = vpop.xlane.xlu0 %1250
    %v1252 = vsel %vm1215, %v1209, 0.0
    %1253 = vadd.xlane.f32.xlu0 %v1252
    %v1254 = vpop.xlane.xlu0 %1253
    %v1255 = vsel %vm1215, %v1210, 0.0
    %1256 = vadd.xlane.f32.xlu0 %v1255
    %v1257 = vpop.xlane.xlu0 %1256
    %v1258 = vsel %vm1215, %v1211, 0.0
    %1259 = vadd.xlane.f32.xlu0 %v1258
    %v1260 = vpop.xlane.xlu0 %1259
    %v1261 = vsel %vm1215, %v1212, 0.0
    %1262 = vadd.xlane.f32.xlu0 %v1261
    %v1263 = vpop.xlane.xlu0 %1262
    %v1264 = vsel %vm1215, %v1213, 0.0
    %1265 = vadd.xlane.f32.xlu0 %v1264
    %v1266 = vpop.xlane.xlu0 %1265
    %v1267 = vsel %vm1215, %v1214, 0.0
    %1268 = vadd.xlane.f32.xlu0 %v1267
    %v1269 = vpop.xlane.xlu0 %1268
    %v1270 = vld [vmem:[%s2 + $0x130] sm:$0xff]
    %v1271 = vld [vmem:[%s2 + $0x138] sm:$0xff]
    %v1272 = vld [vmem:[%s2 + $0x140] sm:$0xff]
    %v1273 = vld [vmem:[%s2 + $0x148] sm:$0xff]
    %v1274 = vld [vmem:[%s2 + $0x150] sm:$0xff]
    %v1275 = vld [vmem:[%s2 + $0x158] sm:$0xff]
    %v1276 = vld [vmem:[%s2 + $0x160] sm:$0xff]
    %v1277 = vld [vmem:[%s2 + $0x168] sm:$0xff]
    %v1278 = vld [vmem:[%s2 + $0x170] sm:$0xff]
    %v1279 = vld [vmem:[%s2 + $0x178] sm:$0xff]
    %v1280 = vld [vmem:[%s2 + $0x180] sm:$0xff]
    %v1281 = vld [vmem:[%s2 + $0x188] sm:$0xff]
    %v1282 = vld [vmem:[%s2 + $0x190] sm:$0xff]
    %v1283 = vld [vmem:[%s2 + $0x198] sm:$0xff]
    %v1284 = vld [vmem:[%s2 + $0x1a0] sm:$0xff]
    %v1285 = vld [vmem:[%s2 + $0x1a8] sm:$0xff]
    %v1286 = vld [vmem:[%s2 + $0x1b0] sm:$0xff]
    %v1287 = vld [vmem:[%s2 + $0x1b8] sm:$0xff]
    %v1288 = vmul.f32 %v899, %v1270
    %v1289 = vmul.f32 %v902, %v1271
    %v1290 = vmul.f32 %v907, %v1272
    %v1291 = vmul.f32 %v910, %v1273
    %v1292 = vmul.f32 %v915, %v1274
    %v1293 = vmul.f32 %v918, %v1275
    %v1294 = vmul.f32 %v923, %v1276
    %v1295 = vmul.f32 %v926, %v1277
    %v1296 = vmul.f32 %v931, %v1278
    %v1297 = vmul.f32 %v934, %v1279
    %v1298 = vmul.f32 %v939, %v1280
    %v1299 = vmul.f32 %v942, %v1281
    %v1300 = vmul.f32 %v947, %v1282
    %v1301 = vmul.f32 %v950, %v1283
    %v1302 = vmul.f32 %v955, %v1284
    %v1303 = vmul.f32 %v958, %v1285
    %v1304 = vmul.f32 %v963, %v1286
    %v1305 = vmul.f32 %v966, %v1287
    %v1306 = vmul.f32 %v1288, 1.442695
    %v1307 = vpow.pop %v1306
    %v1308 = vmul.f32 %v1289, 1.442695
    %v1309 = vpow.pop %v1308
    %v1310 = vmul.f32 %v1290, 1.442695
    %v1311 = vpow.pop %v1310
    %v1312 = vmul.f32 %v1291, 1.442695
    %v1313 = vpow.pop %v1312
    %v1314 = vmul.f32 %v1292, 1.442695
    %v1315 = vpow.pop %v1314
    %v1316 = vmul.f32 %v1293, 1.442695
    %v1317 = vpow.pop %v1316
    %v1318 = vmul.f32 %v1294, 1.442695
    %v1319 = vpow.pop %v1318
    %v1320 = vmul.f32 %v1295, 1.442695
    %v1321 = vpow.pop %v1320
    %v1322 = vmul.f32 %v1296, 1.442695
    %v1323 = vpow.pop %v1322
    %v1324 = vmul.f32 %v1297, 1.442695
    %v1325 = vpow.pop %v1324
    %v1326 = vmul.f32 %v1298, 1.442695
    %v1327 = vpow.pop %v1326
    %v1328 = vmul.f32 %v1299, 1.442695
    %v1329 = vpow.pop %v1328
    %v1330 = vmul.f32 %v1300, 1.442695
    %v1331 = vpow.pop %v1330
    %v1332 = vmul.f32 %v1301, 1.442695
    %v1333 = vpow.pop %v1332
    %v1334 = vmul.f32 %v1302, 1.442695
    %v1335 = vpow.pop %v1334
    %v1336 = vmul.f32 %v1303, 1.442695
    %v1337 = vpow.pop %v1336
    %v1338 = vmul.f32 %v1304, 1.442695
    %v1339 = vpow.pop %v1338
    %v1340 = vmul.f32 %v1305, 1.442695
    %v1341 = vpow.pop %v1340
    %1342 = vst.msk [vmem:[#allocation2] sm:$0xff] %vm603, %v1307
    %1343 = vst.msk [vmem:[#allocation2 + $0x8] sm:$0xff] %vm603, %v1309
    %1344 = vst.msk [vmem:[#allocation2 + $0x10] sm:$0xff] %vm603, %v1311
    %1345 = vst.msk [vmem:[#allocation2 + $0x18] sm:$0xff] %vm603, %v1313
    %1346 = vst.msk [vmem:[#allocation2 + $0x20] sm:$0xff] %vm603, %v1315
    %1347 = vst.msk [vmem:[#allocation2 + $0x28] sm:$0xff] %vm603, %v1317
    %1348 = vst.msk [vmem:[#allocation2 + $0x30] sm:$0xff] %vm603, %v1319
    %1349 = vst.msk [vmem:[#allocation2 + $0x38] sm:$0xff] %vm603, %v1321
    %1350 = vst.msk [vmem:[#allocation2 + $0x40] sm:$0xff] %vm603, %v1323
    %1351 = vst.msk [vmem:[#allocation2 + $0x48] sm:$0xff] %vm603, %v1325
    %1352 = vst.msk [vmem:[#allocation2 + $0x50] sm:$0xff] %vm603, %v1327
    %1353 = vst.msk [vmem:[#allocation2 + $0x58] sm:$0xff] %vm603, %v1329
    %1354 = vst.msk [vmem:[#allocation2 + $0x60] sm:$0xff] %vm603, %v1331
    %1355 = vst.msk [vmem:[#allocation2 + $0x68] sm:$0xff] %vm603, %v1333
    %1356 = vst.msk [vmem:[#allocation2 + $0x70] sm:$0xff] %vm603, %v1335
    %1357 = vst.msk [vmem:[#allocation2 + $0x78] sm:$0xff] %vm603, %v1337
    %1358 = vst.msk [vmem:[#allocation2 + $0x80] sm:$0xff] %vm603, %v1339
    %1359 = vst.msk [vmem:[#allocation2 + $0x88] sm:$0xff] %vm603, %v1341
    %v1360 = vmul.f32 %v1012, %v1218
    %v1361 = vmul.f32 %v1015, %v1221
    %v1362 = vmul.f32 %v1020, %v1224
    %v1363 = vmul.f32 %v1023, %v1227
    %v1364 = vmul.f32 %v1028, %v1230
    %v1365 = vmul.f32 %v1031, %v1233
    %v1366 = vmul.f32 %v1036, %v1236
    %v1367 = vmul.f32 %v1039, %v1239
    %v1368 = vmul.f32 %v1044, %v1242
    %v1369 = vmul.f32 %v1047, %v1245
    %v1370 = vmul.f32 %v1052, %v1248
    %v1371 = vmul.f32 %v1055, %v1251
    %v1372 = vmul.f32 %v1060, %v1254
    %v1373 = vmul.f32 %v1063, %v1257
    %v1374 = vmul.f32 %v1068, %v1260
    %v1375 = vmul.f32 %v1071, %v1263
    %v1376 = vmul.f32 %v1076, %v1266
    %v1377 = vmul.f32 %v1079, %v1269
    %1378 = vst.msk [vmem:[#allocation3] sm:$0xff] %vm603, %v1360
    %1379 = vst.msk [vmem:[#allocation3 + $0x8] sm:$0xff] %vm603, %v1361
    %1380 = vst.msk [vmem:[#allocation3 + $0x10] sm:$0xff] %vm603, %v1362
    %1381 = vst.msk [vmem:[#allocation3 + $0x18] sm:$0xff] %vm603, %v1363
    %1382 = vst.msk [vmem:[#allocation3 + $0x20] sm:$0xff] %vm603, %v1364
    %1383 = vst.msk [vmem:[#allocation3 + $0x28] sm:$0xff] %vm603, %v1365
    %1384 = vst.msk [vmem:[#allocation3 + $0x30] sm:$0xff] %vm603, %v1366
    %1385 = vst.msk [vmem:[#allocation3 + $0x38] sm:$0xff] %vm603, %v1367
    %1386 = vst.msk [vmem:[#allocation3 + $0x40] sm:$0xff] %vm603, %v1368
    %1387 = vst.msk [vmem:[#allocation3 + $0x48] sm:$0xff] %vm603, %v1369
    %1388 = vst.msk [vmem:[#allocation3 + $0x50] sm:$0xff] %vm603, %v1370
    %1389 = vst.msk [vmem:[#allocation3 + $0x58] sm:$0xff] %vm603, %v1371
    %1390 = vst.msk [vmem:[#allocation3 + $0x60] sm:$0xff] %vm603, %v1372
    %1391 = vst.msk [vmem:[#allocation3 + $0x68] sm:$0xff] %vm603, %v1373
    %1392 = vst.msk [vmem:[#allocation3 + $0x70] sm:$0xff] %vm603, %v1374
    %1393 = vst.msk [vmem:[#allocation3 + $0x78] sm:$0xff] %vm603, %v1375
    %1394 = vst.msk [vmem:[#allocation3 + $0x80] sm:$0xff] %vm603, %v1376
    %1395 = vst.msk [vmem:[#allocation3 + $0x88] sm:$0xff] %vm603, %v1377
    %v1396 = vld [vmem:[#allocation2] sm:$0xff]
    %v1397 = vld [vmem:[#allocation2 + $0x8] sm:$0xff]
    %v1398 = vmul.f32 %v1396, 0.0
    %v1399 = vmul.f32 %v1397, 0.0
    %v1400 = vld [vmem:[#allocation3] sm:$0xff]
    %v1401 = vld [vmem:[#allocation3 + $0x8] sm:$0xff]
    %v1402 = vadd.f32 %v1398, %v1400
    %v1403 = vadd.f32 %v1399, %v1401
    %1404 = vst.msk [vmem:[#allocation4] sm:$0xff] %vm603, %v1402
    %1405 = vst.msk [vmem:[#allocation4 + $0x8] sm:$0xff] %vm603, %v1403
    %v1406 = vld [vmem:[#allocation2 + $0x10] sm:$0xff]
    %v1407 = vld [vmem:[#allocation2 + $0x18] sm:$0xff]
    %v1408 = vmul.f32 %v1406, %v1402
    %v1409 = vmul.f32 %v1407, %v1403
    %v1410 = vld [vmem:[#allocation3 + $0x10] sm:$0xff]
    %v1411 = vld [vmem:[#allocation3 + $0x18] sm:$0xff]
    %v1412 = vadd.f32 %v1408, %v1410
    %v1413 = vadd.f32 %v1409, %v1411
    %1414 = vst.msk [vmem:[#allocation4 + $0x10] sm:$0xff] %vm603, %v1412
    %1415 = vst.msk [vmem:[#allocation4 + $0x18] sm:$0xff] %vm603, %v1413
    %v1416 = vld [vmem:[#allocation2 + $0x20] sm:$0xff]
    %v1417 = vld [vmem:[#allocation2 + $0x28] sm:$0xff]
    %v1418 = vmul.f32 %v1416, %v1412
    %v1419 = vmul.f32 %v1417, %v1413
    %v1420 = vld [vmem:[#allocation3 + $0x20] sm:$0xff]
    %v1421 = vld [vmem:[#allocation3 + $0x28] sm:$0xff]
    %v1422 = vadd.f32 %v1418, %v1420
    %v1423 = vadd.f32 %v1419, %v1421
    %1424 = vst.msk [vmem:[#allocation4 + $0x20] sm:$0xff] %vm603, %v1422
    %1425 = vst.msk [vmem:[#allocation4 + $0x28] sm:$0xff] %vm603, %v1423
    %v1426 = vld [vmem:[#allocation2 + $0x30] sm:$0xff]
    %v1427 = vld [vmem:[#allocation2 + $0x38] sm:$0xff]
    %v1428 = vmul.f32 %v1426, %v1422
    %v1429 = vmul.f32 %v1427, %v1423
    %v1430 = vld [vmem:[#allocation3 + $0x30] sm:$0xff]
    %v1431 = vld [vmem:[#allocation3 + $0x38] sm:$0xff]
    %v1432 = vadd.f32 %v1428, %v1430
    %v1433 = vadd.f32 %v1429, %v1431
    %1434 = vst.msk [vmem:[#allocation4 + $0x30] sm:$0xff] %vm603, %v1432
    %1435 = vst.msk [vmem:[#allocation4 + $0x38] sm:$0xff] %vm603, %v1433
    %v1436 = vld [vmem:[#allocation2 + $0x40] sm:$0xff]
    %v1437 = vld [vmem:[#allocation2 + $0x48] sm:$0xff]
    %v1438 = vmul.f32 %v1436, %v1432
    %v1439 = vmul.f32 %v1437, %v1433
    %v1440 = vld [vmem:[#allocation3 + $0x40] sm:$0xff]
    %v1441 = vld [vmem:[#allocation3 + $0x48] sm:$0xff]
    %v1442 = vadd.f32 %v1438, %v1440
    %v1443 = vadd.f32 %v1439, %v1441
    %1444 = vst.msk [vmem:[#allocation4 + $0x40] sm:$0xff] %vm603, %v1442
    %1445 = vst.msk [vmem:[#allocation4 + $0x48] sm:$0xff] %vm603, %v1443
    %v1446 = vld [vmem:[#allocation2 + $0x50] sm:$0xff]
    %v1447 = vld [vmem:[#allocation2 + $0x58] sm:$0xff]
    %v1448 = vmul.f32 %v1446, %v1442
    %v1449 = vmul.f32 %v1447, %v1443
    %v1450 = vld [vmem:[#allocation3 + $0x50] sm:$0xff]
    %v1451 = vld [vmem:[#allocation3 + $0x58] sm:$0xff]
    %v1452 = vadd.f32 %v1448, %v1450
    %v1453 = vadd.f32 %v1449, %v1451
    %1454 = vst.msk [vmem:[#allocation4 + $0x50] sm:$0xff] %vm603, %v1452
    %1455 = vst.msk [vmem:[#allocation4 + $0x58] sm:$0xff] %vm603, %v1453
    %v1456 = vld [vmem:[#allocation2 + $0x60] sm:$0xff]
    %v1457 = vld [vmem:[#allocation2 + $0x68] sm:$0xff]
    %v1458 = vmul.f32 %v1456, %v1452
    %v1459 = vmul.f32 %v1457, %v1453
    %v1460 = vld [vmem:[#allocation3 + $0x60] sm:$0xff]
    %v1461 = vld [vmem:[#allocation3 + $0x68] sm:$0xff]
    %v1462 = vadd.f32 %v1458, %v1460
    %v1463 = vadd.f32 %v1459, %v1461
    %1464 = vst.msk [vmem:[#allocation4 + $0x60] sm:$0xff] %vm603, %v1462
    %1465 = vst.msk [vmem:[#allocation4 + $0x68] sm:$0xff] %vm603, %v1463
    %v1466 = vld [vmem:[#allocation2 + $0x70] sm:$0xff]
    %v1467 = vld [vmem:[#allocation2 + $0x78] sm:$0xff]
    %v1468 = vmul.f32 %v1466, %v1462
    %v1469 = vmul.f32 %v1467, %v1463
    %v1470 = vld [vmem:[#allocation3 + $0x70] sm:$0xff]
    %v1471 = vld [vmem:[#allocation3 + $0x78] sm:$0xff]
    %v1472 = vadd.f32 %v1468, %v1470
    %v1473 = vadd.f32 %v1469, %v1471
    %1474 = vst.msk [vmem:[#allocation4 + $0x70] sm:$0xff] %vm603, %v1472
    %1475 = vst.msk [vmem:[#allocation4 + $0x78] sm:$0xff] %vm603, %v1473
    %v1476 = vld [vmem:[#allocation2 + $0x80] sm:$0xff]
    %v1477 = vld [vmem:[#allocation2 + $0x88] sm:$0xff]
    %v1478 = vmul.f32 %v1476, %v1472
    %v1479 = vmul.f32 %v1477, %v1473
    %v1480 = vld [vmem:[#allocation3 + $0x80] sm:$0xff]
    %v1481 = vld [vmem:[#allocation3 + $0x88] sm:$0xff]
    %v1482 = vadd.f32 %v1478, %v1480
    %v1483 = vadd.f32 %v1479, %v1481
    %1484 = vst.msk [vmem:[#allocation4 + $0x80] sm:$0xff] %vm603, %v1482
    %1485 = vst.msk [vmem:[#allocation4 + $0x88] sm:$0xff] %vm603, %v1483
    %1486 = vrot.lane.b32.xlu0 %v659, 118
    %v1487 = vpop.permute.xlu0 %1486
    %1488 = vrot.lane.b32.xlu0 %v660, 118
    %v1489 = vpop.permute.xlu0 %1488
    %v1492 = vsel %vm328, %v1489, 0
    %1494 = vmatprep.subr.bf16.mxu0 0
    %1495 = vmatpush1.bf16.msra.mxu0 %v1487
    %1496 = vmatprep.subr.bf16.mxu0 0
    %1497 = vmatpush1.bf16.msra.mxu0 %v1492
    %1498 = vmatprep.subr.bf16.mxu0 0
    %1499 = vmatpush1.bf16.msra.mxu0 0
    %1500 = vmatprep.subr.bf16.mxu0 0
    %1501 = vmatpush1.bf16.msra.mxu0 0
    %1502 = vmatprep.subr.bf16.mxu0 0
    %1503 = vmatpush1.bf16.msra.mxu0 0
    %1504 = vmatprep.subr.bf16.mxu0 0
    %1505 = vmatpush1.bf16.msra.mxu0 0
    %1506 = vmatprep.subr.bf16.mxu0 0
    %1507 = vmatpush1.bf16.msra.mxu0 0
    %1508 = vmatprep.subr.bf16.mxu0 0
    %1509 = vmatpush1.bf16.msra.mxu0 0
    %1510 = vmatprep.subr.bf16.mxu0 0
    %1511 = vmatpush1.bf16.msra.mxu0 0
    %1512 = vmatprep.subr.bf16.mxu0 0
    %1513 = vmatpush1.bf16.msra.mxu0 0
    %1514 = vmatprep.subr.bf16.mxu0 0
    %1515 = vmatpush1.bf16.msra.mxu0 0
    %1516 = vmatprep.subr.bf16.mxu0 0
    %1517 = vmatpush1.bf16.msra.mxu0 0
    %1518 = vmatprep.subr.bf16.mxu0 0
    %1519 = vmatpush1.bf16.msra.mxu0 0
    %1520 = vmatprep.subr.bf16.mxu0 0
    %1521 = vmatpush1.bf16.msra.mxu0 0
    %1522 = vmatprep.subr.bf16.mxu0 0
    %1523 = vmatpush1.bf16.msra.mxu0 0
    %1524 = vmatprep.subr.bf16.mxu0 0
    %1525 = vmatpush1.bf16.msra.mxu0 0
    %1526 = vmatprep.mubr.bf16.mxu0 0
    %1527 = vmatmul.mubr.bf16.gmra.mrb[0].mxu0 %v835
    %v1528 = vpop.f32.mrb[0].mxu0
    %v1529 = vadd.f32 0.0, %v1528
    %v1530 = vpop.f32.mrb[0].mxu0
    %v1531 = vpop.f32.mrb[0].mxu0
    %v1532 = vadd.f32 0.0, %v1531
    %v1533 = vpop.f32.mrb[0].mxu0
    %1534 = vmatprep.mubr.bf16.mxu0 0
    %1535 = vmatmul.mubr.bf16.gmra.mrb[0].mxu0 %v838
    %v1536 = vpop.f32.mrb[0].mxu0
    %v1537 = vadd.f32 0.0, %v1536
    %v1538 = vpop.f32.mrb[0].mxu0
    %v1539 = vpop.f32.mrb[0].mxu0
    %v1540 = vadd.f32 0.0, %v1539
    %v1541 = vpop.f32.mrb[0].mxu0
    %1542 = vmatprep.mubr.bf16.mxu0 0
    %1543 = vmatmul.mubr.bf16.gmra.mrb[0].mxu0 %v841
    %v1544 = vpop.f32.mrb[0].mxu0
    %v1545 = vadd.f32 0.0, %v1544
    %v1546 = vpop.f32.mrb[0].mxu0
    %v1547 = vpop.f32.mrb[0].mxu0
    %v1548 = vadd.f32 0.0, %v1547
    %v1549 = vpop.f32.mrb[0].mxu0
    %1550 = vmatprep.mubr.bf16.mxu0 0
    %1551 = vmatmul.mubr.bf16.gmra.mrb[0].mxu0 %v844
    %v1552 = vpop.f32.mrb[0].mxu0
    %v1553 = vadd.f32 0.0, %v1552
    %v1554 = vpop.f32.mrb[0].mxu0
    %v1555 = vpop.f32.mrb[0].mxu0
    %v1556 = vadd.f32 0.0, %v1555
    %v1557 = vpop.f32.mrb[0].mxu0
    %1558 = vmatprep.mubr.bf16.mxu0 0
    %1559 = vmatmul.mubr.bf16.gmra.mrb[0].mxu0 %v847
    %v1560 = vpop.f32.mrb[0].mxu0
    %v1561 = vadd.f32 0.0, %v1560
    %v1562 = vpop.f32.mrb[0].mxu0
    %v1563 = vpop.f32.mrb[0].mxu0
    %v1564 = vadd.f32 0.0, %v1563
    %v1565 = vpop.f32.mrb[0].mxu0
    %1566 = vmatprep.mubr.bf16.mxu0 0
    %1567 = vmatmul.mubr.bf16.gmra.mrb[0].mxu0 %v850
    %v1568 = vpop.f32.mrb[0].mxu0
    %v1569 = vadd.f32 0.0, %v1568
    %v1570 = vpop.f32.mrb[0].mxu0
    %v1571 = vpop.f32.mrb[0].mxu0
    %v1572 = vadd.f32 0.0, %v1571
    %v1573 = vpop.f32.mrb[0].mxu0
    %1574 = vmatprep.mubr.bf16.mxu0 0
    %1575 = vmatmul.mubr.bf16.gmra.mrb[0].mxu0 %v853
    %v1576 = vpop.f32.mrb[0].mxu0
    %v1577 = vadd.f32 0.0, %v1576
    %v1578 = vpop.f32.mrb[0].mxu0
    %v1579 = vpop.f32.mrb[0].mxu0
    %v1580 = vadd.f32 0.0, %v1579
    %v1581 = vpop.f32.mrb[0].mxu0
    %1582 = vmatprep.mubr.bf16.mxu0 0
    %1583 = vmatmul.mubr.bf16.gmra.mrb[0].mxu0 %v856
    %v1584 = vpop.f32.mrb[0].mxu0
    %v1585 = vadd.f32 0.0, %v1584
    %v1586 = vpop.f32.mrb[0].mxu0
    %v1587 = vpop.f32.mrb[0].mxu0
    %v1588 = vadd.f32 0.0, %v1587
    %v1589 = vpop.f32.mrb[0].mxu0
    %1590 = vmatprep.mubr.bf16.mxu0 0
    %1591 = vmatmul.mubr.bf16.gmra.mrb[0].mxu0 %v859
    %v1592 = vpop.f32.mrb[0].mxu0
    %v1593 = vadd.f32 0.0, %v1592
    %v1594 = vpop.f32.mrb[0].mxu0
    %v1595 = vpop.f32.mrb[0].mxu0
    %v1596 = vadd.f32 0.0, %v1595
    %v1597 = vpop.f32.mrb[0].mxu0
    %1598 = vdwg.mxu0
    %v1599 = vmul.f32 %v1529, %v769
    %v1600 = vmul.f32 %v1532, %v770
    %v1601 = vmul.f32 %v1537, %v771
    %v1602 = vmul.f32 %v1540, %v772
    %v1603 = vmul.f32 %v1545, %v773
    %v1604 = vmul.f32 %v1548, %v774
    %v1605 = vmul.f32 %v1553, %v775
    %v1606 = vmul.f32 %v1556, %v776
    %v1607 = vmul.f32 %v1561, %v777
    %v1608 = vmul.f32 %v1564, %v778
    %v1609 = vmul.f32 %v1569, %v779
    %v1610 = vmul.f32 %v1572, %v780
    %v1611 = vmul.f32 %v1577, %v781
    %v1612 = vmul.f32 %v1580, %v782
    %v1613 = vmul.f32 %v1585, %v783
    %v1614 = vmul.f32 %v1588, %v784
    %v1615 = vmul.f32 %v1593, %v785
    %v1616 = vmul.f32 %v1596, %v786
    %v1617 = vsel %vm1215, %v1599, 0.0
    %1618 = vadd.xlane.f32.xlu0 %v1617
    %v1619 = vpop.xlane.xlu0 %1618
    %v1620 = vsel %vm1215, %v1600, 0.0
    %1621 = vadd.xlane.f32.xlu0 %v1620
    %v1622 = vpop.xlane.xlu0 %1621
    %v1623 = vsel %vm1215, %v1601, 0.0
    %1624 = vadd.xlane.f32.xlu0 %v1623
    %v1625 = vpop.xlane.xlu0 %1624
    %v1626 = vsel %vm1215, %v1602, 0.0
    %1627 = vadd.xlane.f32.xlu0 %v1626
    %v1628 = vpop.xlane.xlu0 %1627
    %v1629 = vsel %vm1215, %v1603, 0.0
    %1630 = vadd.xlane.f32.xlu0 %v1629
    %v1631 = vpop.xlane.xlu0 %1630
    %v1632 = vsel %vm1215, %v1604, 0.0
    %1633 = vadd.xlane.f32.xlu0 %v1632
    %v1634 = vpop.xlane.xlu0 %1633
    %v1635 = vsel %vm1215, %v1605, 0.0
    %1636 = vadd.xlane.f32.xlu0 %v1635
    %v1637 = vpop.xlane.xlu0 %1636
    %v1638 = vsel %vm1215, %v1606, 0.0
    %1639 = vadd.xlane.f32.xlu0 %v1638
    %v1640 = vpop.xlane.xlu0 %1639
    %v1641 = vsel %vm1215, %v1607, 0.0
    %1642 = vadd.xlane.f32.xlu0 %v1641
    %v1643 = vpop.xlane.xlu0 %1642
    %v1644 = vsel %vm1215, %v1608, 0.0
    %1645 = vadd.xlane.f32.xlu0 %v1644
    %v1646 = vpop.xlane.xlu0 %1645
    %v1647 = vsel %vm1215, %v1609, 0.0
    %1648 = vadd.xlane.f32.xlu0 %v1647
    %v1649 = vpop.xlane.xlu0 %1648
    %v1650 = vsel %vm1215, %v1610, 0.0
    %1651 = vadd.xlane.f32.xlu0 %v1650
    %v1652 = vpop.xlane.xlu0 %1651
    %v1653 = vsel %vm1215, %v1611, 0.0
    %1654 = vadd.xlane.f32.xlu0 %v1653
    %v1655 = vpop.xlane.xlu0 %1654
    %v1656 = vsel %vm1215, %v1612, 0.0
    %1657 = vadd.xlane.f32.xlu0 %v1656
    %v1658 = vpop.xlane.xlu0 %1657
    %v1659 = vsel %vm1215, %v1613, 0.0
    %1660 = vadd.xlane.f32.xlu0 %v1659
    %v1661 = vpop.xlane.xlu0 %1660
    %v1662 = vsel %vm1215, %v1614, 0.0
    %1663 = vadd.xlane.f32.xlu0 %v1662
    %v1664 = vpop.xlane.xlu0 %1663
    %v1665 = vsel %vm1215, %v1615, 0.0
    %1666 = vadd.xlane.f32.xlu0 %v1665
    %v1667 = vpop.xlane.xlu0 %1666
    %v1668 = vsel %vm1215, %v1616, 0.0
    %1669 = vadd.xlane.f32.xlu0 %v1668
    %v1670 = vpop.xlane.xlu0 %1669
    %v1671 = vld [vmem:[#allocation4] sm:$0xff]
    %v1672 = vld [vmem:[#allocation4 + $0x8] sm:$0xff]
    %v1673 = vld [vmem:[#allocation4 + $0x10] sm:$0xff]
    %v1674 = vld [vmem:[#allocation4 + $0x18] sm:$0xff]
    %v1675 = vld [vmem:[#allocation4 + $0x20] sm:$0xff]
    %v1676 = vld [vmem:[#allocation4 + $0x28] sm:$0xff]
    %v1677 = vld [vmem:[#allocation4 + $0x30] sm:$0xff]
    %v1678 = vld [vmem:[#allocation4 + $0x38] sm:$0xff]
    %v1679 = vld [vmem:[#allocation4 + $0x40] sm:$0xff]
    %v1680 = vld [vmem:[#allocation4 + $0x48] sm:$0xff]
    %v1681 = vld [vmem:[#allocation4 + $0x50] sm:$0xff]
    %v1682 = vld [vmem:[#allocation4 + $0x58] sm:$0xff]
    %v1683 = vld [vmem:[#allocation4 + $0x60] sm:$0xff]
    %v1684 = vld [vmem:[#allocation4 + $0x68] sm:$0xff]
    %v1685 = vld [vmem:[#allocation4 + $0x70] sm:$0xff]
    %v1686 = vld [vmem:[#allocation4 + $0x78] sm:$0xff]
    %v1687 = vld [vmem:[#allocation4 + $0x80] sm:$0xff]
    %v1688 = vld [vmem:[#allocation4 + $0x88] sm:$0xff]
    %v1689 = vmul.f32 %v1671, %v1619
    %v1690 = vmul.f32 %v1672, %v1622
    %v1691 = vmul.f32 %v1673, %v1625
    %v1692 = vmul.f32 %v1674, %v1628
    %v1693 = vmul.f32 %v1675, %v1631
    %v1694 = vmul.f32 %v1676, %v1634
    %v1695 = vmul.f32 %v1677, %v1637
    %v1696 = vmul.f32 %v1678, %v1640
    %v1697 = vmul.f32 %v1679, %v1643
    %v1698 = vmul.f32 %v1680, %v1646
    %v1699 = vmul.f32 %v1681, %v1649
    %v1700 = vmul.f32 %v1682, %v1652
    %v1701 = vmul.f32 %v1683, %v1655
    %v1702 = vmul.f32 %v1684, %v1658
    %v1703 = vmul.f32 %v1685, %v1661
    %v1704 = vmul.f32 %v1686, %v1664
    %v1705 = vmul.f32 %v1687, %v1667
    %v1706 = vmul.f32 %v1688, %v1670
    %v1707 = vld [vmem:[%s1 + $0xc0] sm:$0xff]
    %v1708 = vld [vmem:[%s1 + $0xc8] sm:$0xff]
    %v1709 = vld [vmem:[%s1 + $0xd0] sm:$0x11]
    %v1710 = vpack.c.bf16 %v1690, %v1689
    %v1711 = vpack.c.bf16 %v1692, %v1691
    %v1712 = vpack.c.bf16 %v1694, %v1693
    %v1713 = vpack.c.bf16 %v1696, %v1695
    %v1714 = vpack.c.bf16 %v1698, %v1697
    %v1715 = vpack.c.bf16 %v1700, %v1699
    %v1716 = vpack.c.bf16 %v1702, %v1701
    %v1717 = vpack.c.bf16 %v1704, %v1703
    %v1718 = vpack.c.bf16 %v1706, %v1705
    %v1719 = vld [vmem:[%s2 + $0x128] sm:$0x1]
    %v1720 = vlaneseq
    %v1721 = vshrl.u32 %v1720, 7
    %v1722 = vsub.s32 0, %v1721
    %v1723 = vrot.slane %v1719, %v1722
    %v1724 = vmul.f32 %v1723, %v566
    %v1725 = vmul.f32 %v1723, %v567
    %v1726 = vmul.f32 %v1723, %v568
    %v1730 = vunpack.c.l.b16 %v1707
    %v1731 = vunpack.c.h.b16 %v1707
    %v1732 = vunpack.c.l.b16 %v1708
    %v1733 = vunpack.c.h.b16 %v1708
    %v1734 = vunpack.c.l.b16 %v1709
    %v1735 = vunpack.c.h.b16 %v1709
    %v1736 = vpack.c.b16 %v1732, %v1730
    %v1737 = vpack.c.b16 %v1733, %v1731
    %v1738 = vpack.c.b16 %v1734, %v1734
    %v1739 = vpack.c.b16 %v1735, %v1735
    %v1743 = vsel %vm51, %v1737, 0
    %v1746 = vsel %vm51, %v1739, 0
    %1748 = vmatprep.subr.bf16.mxu0 0
    %1749 = vmatpush1.bf16.msra.mxu0 %v1710
    %1750 = vmatprep.subr.bf16.mxu0 0
    %1751 = vmatpush1.bf16.msra.mxu0 %v1711
    %1752 = vmatprep.subr.bf16.mxu0 0
    %1753 = vmatpush1.bf16.msra.mxu0 %v1712
    %1754 = vmatprep.subr.bf16.mxu0 0
    %1755 = vmatpush1.bf16.msra.mxu0 %v1713
    %1756 = vmatprep.subr.bf16.mxu0 0
    %1757 = vmatpush1.bf16.msra.mxu0 %v1714
    %1758 = vmatprep.subr.bf16.mxu0 0
    %1759 = vmatpush1.bf16.msra.mxu0 %v1715
    %1760 = vmatprep.subr.bf16.mxu0 0
    %1761 = vmatpush1.bf16.msra.mxu0 %v1716
    %1762 = vmatprep.subr.bf16.mxu0 0
    %1763 = vmatpush1.bf16.msra.mxu0 %v1717
    %1764 = vmatprep.subr.bf16.mxu0 0
    %1765 = vmatpush1.bf16.msra.mxu0 %v1718
    %1766 = vmatprep.subr.bf16.mxu0 0
    %1767 = vmatpush1.bf16.msra.mxu0 0
    %1768 = vmatprep.subr.bf16.mxu0 0
    %1769 = vmatpush1.bf16.msra.mxu0 0
    %1770 = vmatprep.subr.bf16.mxu0 0
    %1771 = vmatpush1.bf16.msra.mxu0 0
    %1772 = vmatprep.subr.bf16.mxu0 0
    %1773 = vmatpush1.bf16.msra.mxu0 0
    %1774 = vmatprep.subr.bf16.mxu0 0
    %1775 = vmatpush1.bf16.msra.mxu0 0
    %1776 = vmatprep.subr.bf16.mxu0 0
    %1777 = vmatpush1.bf16.msra.mxu0 0
    %1778 = vmatprep.subr.bf16.mxu0 0
    %1779 = vmatpush1.bf16.msra.mxu0 0
    %1780 = vmatprep.mubr.bf16.mxu0 %v1743
    %1781 = vmatmul.mubr.bf16.gmra.mrb[0].mxu0 %v1736
    %v1782 = vpop.f32.mrb[0].mxu0
    %v1783 = vadd.f32 %v1724, %v1782
    %v1784 = vpop.f32.mrb[0].mxu0
    %v1785 = vpop.f32.mrb[0].mxu0
    %v1786 = vadd.f32 %v1725, %v1785
    %v1787 = vpop.f32.mrb[0].mxu0
    %1788 = vmatprep.mubr.bf16.mxu0 %v1746
    %1789 = vmatmul.mubr.bf16.gmra.mrb[0].mxu0 %v1738
    %v1790 = vpop.f32.mrb[0].mxu0
    %v1791 = vadd.f32 %v1726, %v1790
    %v1792 = vpop.f32.mrb[0].mxu0
    %v1793 = vpop.f32.mrb[0].mxu0
    %v1794 = vpop.f32.mrb[0].mxu0
    %1795 = vdwg.mxu0
    %v1796 = vsub.f32 0.0, %v287
    %v1797 = vsub.f32 0.0, %v290
    %v1798 = vsub.f32 0.0, %v295
    %v1799 = vmul.f32 %v1796, 1.442695
    %v1800 = vpow.pop %v1799
    %v1801 = vmul.f32 %v1797, 1.442695
    %v1802 = vpow.pop %v1801
    %v1803 = vmul.f32 %v1798, 1.442695
    %v1804 = vpow.pop %v1803
    %v1805 = vadd.f32 %v1800, 1.0
    %v1806 = vadd.f32 %v1802, 1.0
    %v1807 = vadd.f32 %v1804, 1.0
    %v1808 = vrcp.pop %v1805
    %v1809 = vmul.f32 1.0, %v1808
    %v1810 = vrcp.pop %v1806
    %v1811 = vmul.f32 1.0, %v1810
    %v1812 = vrcp.pop %v1807
    %v1813 = vmul.f32 1.0, %v1812
    %v1814 = vmul.f32 %v287, %v1809
    %v1815 = vmul.f32 %v290, %v1811
    %v1816 = vmul.f32 %v295, %v1813
    %1820 = vrot.lane.b32.xlu0 %v1814, 64
    %v1821 = vpop.permute.xlu0 %1820
    %1822 = vrot.lane.b32.xlu0 %v1815, 64
    %v1823 = vpop.permute.xlu0 %1822
    %1824 = vrot.lane.b32.xlu0 %v1816, 64
    %v1825 = vpop.permute.xlu0 %1824
    %v1829 = vmul.f32 %v1783, %v1821
    %v1830 = vmul.f32 %v1786, %v1823
    %v1831 = vmul.f32 %v1791, %v1825
    %v1832 = vld [vmem:[%s1 + $0x1e0] sm:$0xf]
    %v1833 = vld [vmem:[%s1 + $0x1e8] sm:$0xf]
    %v1834 = vld [vmem:[%s1 + $0x1f0] sm:$0xf]
    %v1835 = vld [vmem:[%s1 + $0x1f8] sm:$0xf]
    %v1836 = vld [vmem:[%s1 + $0x200] sm:$0xf]
    %v1837 = vld [vmem:[%s1 + $0x208] sm:$0xf]
    %v1838 = vld [vmem:[%s1 + $0x210] sm:$0xf]
    %v1839 = vld [vmem:[%s1 + $0x218] sm:$0xf]
    %v1840 = vpack.c.bf16 %v1830, %v1829
    %v1841 = vpack.c.bf16 %v1831, %v1831
    %v1850 = vunpack.c.l.b16 %v1832
    %v1851 = vunpack.c.l.b16 %v1833
    %v1852 = vunpack.c.l.b16 %v1834
    %v1853 = vunpack.c.l.b16 %v1835
    %v1854 = vunpack.c.l.b16 %v1836
    %v1855 = vunpack.c.l.b16 %v1837
    %v1856 = vunpack.c.l.b16 %v1838
    %v1857 = vunpack.c.l.b16 %v1839
    %v1858 = vpack.c.b16 %v1851, %v1850
    %v1859 = vpack.c.b16 %v1853, %v1852
    %v1860 = vpack.c.b16 %v1855, %v1854
    %v1861 = vpack.c.b16 %v1857, %v1856
    %v1867 = vsel %vm603, %v1840, 0
    %v1870 = vsel %vm603, %v1841, 0
    %1872 = vmatprep.subr.bf16.mxu0 0
    %1873 = vmatpush1.bf16.msra.mxu0 %v1858
    %1874 = vmatprep.subr.bf16.mxu0 0
    %1875 = vmatpush1.bf16.msra.mxu0 %v1859
    %1876 = vmatprep.subr.bf16.mxu0 0
    %1877 = vmatpush1.bf16.msra.mxu0 %v1860
    %1878 = vmatprep.subr.bf16.mxu0 0
    %1879 = vmatpush1.bf16.msra.mxu0 %v1861
    %1880 = vmatprep.subr.bf16.mxu0 0
    %1881 = vmatpush1.bf16.msra.mxu0 0
    %1882 = vmatprep.subr.bf16.mxu0 0
    %1883 = vmatpush1.bf16.msra.mxu0 0
    %1884 = vmatprep.subr.bf16.mxu0 0
    %1885 = vmatpush1.bf16.msra.mxu0 0
    %1886 = vmatprep.subr.bf16.mxu0 0
    %1887 = vmatpush1.bf16.msra.mxu0 0
    %1888 = vmatprep.subr.bf16.mxu0 0
    %1889 = vmatpush1.bf16.msra.mxu0 0
    %1890 = vmatprep.subr.bf16.mxu0 0
    %1891 = vmatpush1.bf16.msra.mxu0 0
    %1892 = vmatprep.subr.bf16.mxu0 0
    %1893 = vmatpush1.bf16.msra.mxu0 0
    %1894 = vmatprep.subr.bf16.mxu0 0
    %1895 = vmatpush1.bf16.msra.mxu0 0
    %1896 = vmatprep.subr.bf16.mxu0 0
    %1897 = vmatpush1.bf16.msra.mxu0 0
    %1898 = vmatprep.subr.bf16.mxu0 0
    %1899 = vmatpush1.bf16.msra.mxu0 0
    %1900 = vmatprep.subr.bf16.mxu0 0
    %1901 = vmatpush1.bf16.msra.mxu0 0
    %1902 = vmatprep.subr.bf16.mxu0 0
    %1903 = vmatpush1.bf16.msra.mxu0 0
    %1904 = vmatprep.mubr.bf16.mxu0 0
    %1905 = vmatmul.mubr.bf16.gmra.mrb[0].mxu0 %v1867
    %v1906 = vpop.f32.mrb[0].mxu0
    %v1907 = vadd.f32 0.0, %v1906
    %v1908 = vpop.f32.mrb[0].mxu0
    %v1909 = vpop.f32.mrb[0].mxu0
    %v1910 = vadd.f32 0.0, %v1909
    %v1911 = vpop.f32.mrb[0].mxu0
    %1912 = vmatprep.mubr.bf16.mxu0 0
    %1913 = vmatmul.mubr.bf16.gmra.mrb[0].mxu0 %v1870
    %v1914 = vpop.f32.mrb[0].mxu0
    %v1915 = vadd.f32 0.0, %v1914
    %v1916 = vpop.f32.mrb[0].mxu0
    %v1917 = vpop.f32.mrb[0].mxu0
    %v1918 = vpop.f32.mrb[0].mxu0
    %1919 = vdwg.mxu0
    %v1920 = vadd.f32 %v225, %v1907
    %v1921 = vadd.f32 %v226, %v1910
    %v1922 = vadd.f32 %v227, %v1915
    %v1923 = vld [vmem:[%s2 + $0x1c0] sm:$0x1]
    %v1924 = vld [vmem:[%s2 + $0x1c8] sm:$0x1]
    %v1925 = vsel %vm128, %v1920, 0.0
    %1926 = vadd.xlane.f32.xlu0 %v1925
    %v1927 = vpop.xlane.xlu0 %1926
    %v1928 = vsel %vm128, %v1921, 0.0
    %1929 = vadd.xlane.f32.xlu0 %v1928
    %v1930 = vpop.xlane.xlu0 %1929
    %vm1931 = vcmask 254976
    %v1932 = vsel %vm1931, %v1922, 0.0
    %1933 = vadd.xlane.f32.xlu0 %v1932
    %v1934 = vpop.xlane.xlu0 %1933
    %v1935 = vrcp.pop 32.0
    %v1936 = vmul.f32 %v1927, %v1935
    %v1937 = vmul.f32 %v1930, %v1935
    %v1938 = vmul.f32 %v1934, %v1935
    %v1939 = vsub.f32 %v1920, %v1936
    %v1940 = vsub.f32 %v1921, %v1937
    %v1941 = vsub.f32 %v1922, %v1938
    %v1942 = vmul.f32 %v1939, %v1939
    %v1943 = vmul.f32 %v1940, %v1940
    %v1944 = vmul.f32 %v1941, %v1941
    %v1945 = vsel %vm128, %v1942, 0.0
    %1946 = vadd.xlane.f32.xlu0 %v1945
    %v1947 = vpop.xlane.xlu0 %1946
    %v1948 = vsel %vm128, %v1943, 0.0
    %1949 = vadd.xlane.f32.xlu0 %v1948
    %v1950 = vpop.xlane.xlu0 %1949
    %v1951 = vsel %vm1931, %v1944, 0.0
    %1952 = vadd.xlane.f32.xlu0 %v1951
    %v1953 = vpop.xlane.xlu0 %1952
    %v1954 = vmul.f32 %v1947, %v1935
    %v1955 = vmul.f32 %v1950, %v1935
    %v1956 = vmul.f32 %v1953, %v1935
    %v1957 = vadd.f32 %v1954, 1e-05
    %v1958 = vadd.f32 %v1955, 1e-05
    %v1959 = vadd.f32 %v1956, 1e-05
    %v1960 = vrsqrt.pop %v1957
    %v1961 = vrsqrt.pop %v1958
    %v1962 = vrsqrt.pop %v1959
    %v1963 = vmul.f32 %v1939, %v1960
    %v1964 = vmul.f32 %v1940, %v1961
    %v1965 = vmul.f32 %v1941, %v1962
    %v1966 = vlaneseq
    %v1967 = vshrl.u32 %v1966, 7
    %v1968 = vsub.s32 0, %v1967
    %v1969 = vrot.slane %v1923, %v1968
    %v1970 = vmul.f32 %v1963, %v1969
    %v1971 = vmul.f32 %v1964, %v1969
    %v1972 = vmul.f32 %v1965, %v1969
    %v1973 = vlaneseq
    %v1974 = vshrl.u32 %v1973, 7
    %v1975 = vsub.s32 0, %v1974
    %v1976 = vrot.slane %v1924, %v1975
    %v1977 = vadd.f32 %v1970, %v1976
    %v1978 = vadd.f32 %v1971, %v1976
    %v1979 = vadd.f32 %v1972, %v1976
    %v1980 = vld [vmem:[%s1 + $0x220] sm:$0xf]
    %v1981 = vld [vmem:[%s1 + $0x228] sm:$0xf]
    %v1982 = vld [vmem:[%s1 + $0x230] sm:$0xf]
    %v1983 = vld [vmem:[%s1 + $0x238] sm:$0xf]
    %v1984 = vpack.c.bf16 %v1978, %v1977
    %v1985 = vpack.c.bf16 %v1979, %v1979
    %v1986 = vld [vmem:[%s2 + $0x1d0] sm:$0x1]
    %v1987 = vlaneseq
    %v1988 = vshrl.u32 %v1987, 7
    %v1989 = vsub.s32 0, %v1988
    %v1990 = vrot.slane %v1986, %v1989
    %v1995 = vunpack.c.l.b16 %v1980
    %v1996 = vunpack.c.l.b16 %v1981
    %v1997 = vunpack.c.l.b16 %v1982
    %v1998 = vunpack.c.l.b16 %v1983
    %v1999 = vpack.c.b16 %v1996, %v1995
    %v2000 = vpack.c.b16 %v1998, %v1997
    %v2004 = vsel %vm128, %v1984, 0
    %v2007 = vsel %vm128, %v1985, 0
    %2009 = vmatprep.subr.bf16.mxu0 0
    %2010 = vmatpush1.bf16.msra.mxu0 %v1999
    %2011 = vmatprep.subr.bf16.mxu0 0
    %2012 = vmatpush1.bf16.msra.mxu0 %v2000
    %2013 = vmatprep.subr.bf16.mxu0 0
    %2014 = vmatpush1.bf16.msra.mxu0 0
    %2015 = vmatprep.subr.bf16.mxu0 0
    %2016 = vmatpush1.bf16.msra.mxu0 0
    %2017 = vmatprep.subr.bf16.mxu0 0
    %2018 = vmatpush1.bf16.msra.mxu0 0
    %2019 = vmatprep.subr.bf16.mxu0 0
    %2020 = vmatpush1.bf16.msra.mxu0 0
    %2021 = vmatprep.subr.bf16.mxu0 0
    %2022 = vmatpush1.bf16.msra.mxu0 0
    %2023 = vmatprep.subr.bf16.mxu0 0
    %2024 = vmatpush1.bf16.msra.mxu0 0
    %2025 = vmatprep.subr.bf16.mxu0 0
    %2026 = vmatpush1.bf16.msra.mxu0 0
    %2027 = vmatprep.subr.bf16.mxu0 0
    %2028 = vmatpush1.bf16.msra.mxu0 0
    %2029 = vmatprep.subr.bf16.mxu0 0
    %2030 = vmatpush1.bf16.msra.mxu0 0
    %2031 = vmatprep.subr.bf16.mxu0 0
    %2032 = vmatpush1.bf16.msra.mxu0 0
    %2033 = vmatprep.subr.bf16.mxu0 0
    %2034 = vmatpush1.bf16.msra.mxu0 0
    %2035 = vmatprep.subr.bf16.mxu0 0
    %2036 = vmatpush1.bf16.msra.mxu0 0
    %2037 = vmatprep.subr.bf16.mxu0 0
    %2038 = vmatpush1.bf16.msra.mxu0 0
    %2039 = vmatprep.subr.bf16.mxu0 0
    %2040 = vmatpush1.bf16.msra.mxu0 0
    %2041 = vmatprep.mubr.bf16.mxu0 0
    %2042 = vmatmul.mubr.bf16.gmra.mrb[0].mxu0 %v2004
    %v2043 = vpop.f32.mrb[0].mxu0
    %v2044 = vadd.f32 %v1990, %v2043
    %v2045 = vpop.f32.mrb[0].mxu0
    %v2046 = vpop.f32.mrb[0].mxu0
    %v2047 = vadd.f32 %v1990, %v2046
    %v2048 = vpop.f32.mrb[0].mxu0
    %2049 = vmatprep.mubr.bf16.mxu0 0
    %2050 = vmatmul.mubr.bf16.gmra.mrb[0].mxu0 %v2007
    %v2051 = vpop.f32.mrb[0].mxu0
    %v2052 = vadd.f32 %v1990, %v2051
    %v2053 = vpop.f32.mrb[0].mxu0
    %v2054 = vpop.f32.mrb[0].mxu0
    %v2055 = vpop.f32.mrb[0].mxu0
    %2056 = vdwg.mxu0
    %v2057 = vld [vmem:[%s2 + $0x60] sm:$0xff]
    %v2058 = vld [vmem:[%s2 + $0x68] sm:$0xff]
    %v2059 = vld [vmem:[%s2 + $0x70] sm:$0x3]
    %v2060 = vpack.c.bf16 %v2047, %v2044
    %v2061 = vpack.c.bf16 %v2052, %v2052
    %2064 = vrot.lane.b32.xlu0 %v2060, 96
    %v2065 = vpop.permute.xlu0 %2064
    %2066 = vrot.lane.b32.xlu0 %v2061, 96
    %v2067 = vpop.permute.xlu0 %2066
    %v2069 = vsel %vm1215, %v2060, 0
    %v2072 = vsel %vm1215, %v2061, 0
    %v2075 = vsel %vm1215, %v2065, 0
    %v2078 = vsel %vm1215, %v2067, 0
    %2080 = vmatprep.subr.bf16.mxu0 0
    %2081 = vmatpush1.bf16.xpose.msra.mxu0 %v2075
    %2082 = vmatprep.subr.bf16.mxu0 0
    %2083 = vmatpush1.bf16.xpose.msra.mxu0 %v2078
    %2084 = vmatprep.subr.bf16.mxu0 0
    %2085 = vmatpush1.bf16.xpose.msra.mxu0 0
    %2086 = vmatprep.subr.bf16.mxu0 0
    %2087 = vmatpush1.bf16.xpose.msra.mxu0 0
    %2088 = vmatprep.subr.bf16.mxu0 0
    %2089 = vmatpush1.bf16.xpose.msra.mxu0 0
    %2090 = vmatprep.subr.bf16.mxu0 0
    %2091 = vmatpush1.bf16.xpose.msra.mxu0 0
    %2092 = vmatprep.subr.bf16.mxu0 0
    %2093 = vmatpush1.bf16.xpose.msra.mxu0 0
    %2094 = vmatprep.subr.bf16.mxu0 0
    %2095 = vmatpush1.bf16.xpose.msra.mxu0 0
    %2096 = vmatprep.subr.bf16.mxu0 0
    %2097 = vmatpush1.bf16.xpose.msra.mxu0 0
    %2098 = vmatprep.subr.bf16.mxu0 0
    %2099 = vmatpush1.bf16.xpose.msra.mxu0 0
    %2100 = vmatprep.subr.bf16.mxu0 0
    %2101 = vmatpush1.bf16.xpose.msra.mxu0 0
    %2102 = vmatprep.subr.bf16.mxu0 0
    %2103 = vmatpush1.bf16.xpose.msra.mxu0 0
    %2104 = vmatprep.subr.bf16.mxu0 0
    %2105 = vmatpush1.bf16.xpose.msra.mxu0 0
    %2106 = vmatprep.subr.bf16.mxu0 0
    %2107 = vmatpush1.bf16.xpose.msra.mxu0 0
    %2108 = vmatprep.subr.bf16.mxu0 0
    %2109 = vmatpush1.bf16.xpose.msra.mxu0 0
    %2110 = vmatprep.subr.bf16.mxu0 0
    %2111 = vmatpush1.bf16.xpose.msra.mxu0 0
    %2112 = vmatprep.mubr.bf16.mxu0 0
    %2113 = vmatmul.mubr.bf16.gmra.mrb[0].mxu0 %v2069
    %v2114 = vpop.f32.mrb[0].mxu0
    %v2115 = vadd.f32 %v2057, %v2114
    %v2116 = vpop.f32.mrb[0].mxu0
    %v2117 = vpop.f32.mrb[0].mxu0
    %v2118 = vadd.f32 %v2058, %v2117
    %v2119 = vpop.f32.mrb[0].mxu0
    %2120 = vmatprep.mubr.bf16.mxu0 0
    %2121 = vmatmul.mubr.bf16.gmra.mrb[0].mxu0 %v2072
    %v2122 = vpop.f32.mrb[0].mxu0
    %v2123 = vadd.f32 %v2059, %v2122
    %v2124 = vpop.f32.mrb[0].mxu0
    %v2125 = vpop.f32.mrb[0].mxu0
    %v2126 = vpop.f32.mrb[0].mxu0
    %2127 = vdwg.mxu0
    %v2128 = vsel %vm321, %v2115, -inf
    %2129 = vmax.xlane.f32.xlu0 %v2128
    %v2130 = vpop.xlane.xlu0 %2129
    %v2131 = vsel %vm321, %v2118, -inf
    %2132 = vmax.xlane.f32.xlu0 %v2131
    %v2133 = vpop.xlane.xlu0 %2132
    %vm2134 = vcmask 140288
    %v2135 = vsel %vm2134, %v2123, -inf
    %2136 = vmax.xlane.f32.xlu0 %v2135
    %v2137 = vpop.xlane.xlu0 %2136
    %v2138 = vsub.f32 %v2115, %v2130
    %v2139 = vsub.f32 %v2118, %v2133
    %v2140 = vsub.f32 %v2123, %v2137
    %v2141 = vmul.f32 %v2138, 1.442695
    %v2142 = vpow.pop %v2141
    %v2143 = vmul.f32 %v2139, 1.442695
    %v2144 = vpow.pop %v2143
    %v2145 = vmul.f32 %v2140, 1.442695
    %v2146 = vpow.pop %v2145
    %v2147 = vsel %vm321, %v2142, 0.0
    %2148 = vadd.xlane.f32.xlu0 %v2147
    %v2149 = vpop.xlane.xlu0 %2148
    %v2150 = vsel %vm321, %v2144, 0.0
    %2151 = vadd.xlane.f32.xlu0 %v2150
    %v2152 = vpop.xlane.xlu0 %2151
    %v2153 = vsel %vm2134, %v2146, 0.0
    %2154 = vadd.xlane.f32.xlu0 %v2153
    %v2155 = vpop.xlane.xlu0 %2154
    %v2156 = vrcp.pop %v2149
    %v2157 = vmul.f32 %v2142, %v2156
    %v2158 = vrcp.pop %v2152
    %v2159 = vmul.f32 %v2144, %v2158
    %v2160 = vrcp.pop %v2155
    %v2161 = vmul.f32 %v2146, %v2160
    %v2162 = vpack.c.bf16 %v2159, %v2157
    %v2163 = vpack.c.bf16 %v2161, %v2161
    %2164 = vrot.lane.b32.xlu0 %v2060, 64
    %v2165 = vpop.permute.xlu0 %2164
    %2166 = vrot.lane.b32.xlu0 %v2061, 64
    %v2167 = vpop.permute.xlu0 %2166
    %v2170 = vsel %vm321, %v2162, 0
    %v2173 = vsel %vm321, %v2163, 0
    %v2176 = vsel %vm328, %v2167, 0
    %2178 = vmatprep.subr.bf16.mxu0 0
    %2179 = vmatpush1.bf16.msra.mxu0 %v2165
    %2180 = vmatprep.subr.bf16.mxu0 0
    %2181 = vmatpush1.bf16.msra.mxu0 %v2176
    %2182 = vmatprep.subr.bf16.mxu0 0
    %2183 = vmatpush1.bf16.msra.mxu0 0
    %2184 = vmatprep.subr.bf16.mxu0 0
    %2185 = vmatpush1.bf16.msra.mxu0 0
    %2186 = vmatprep.subr.bf16.mxu0 0
    %2187 = vmatpush1.bf16.msra.mxu0 0
    %2188 = vmatprep.subr.bf16.mxu0 0
    %2189 = vmatpush1.bf16.msra.mxu0 0
    %2190 = vmatprep.subr.bf16.mxu0 0
    %2191 = vmatpush1.bf16.msra.mxu0 0
    %2192 = vmatprep.subr.bf16.mxu0 0
    %2193 = vmatpush1.bf16.msra.mxu0 0
    %2194 = vmatprep.subr.bf16.mxu0 0
    %2195 = vmatpush1.bf16.msra.mxu0 0
    %2196 = vmatprep.subr.bf16.mxu0 0
    %2197 = vmatpush1.bf16.msra.mxu0 0
    %2198 = vmatprep.subr.bf16.mxu0 0
    %2199 = vmatpush1.bf16.msra.mxu0 0
    %2200 = vmatprep.subr.bf16.mxu0 0
    %2201 = vmatpush1.bf16.msra.mxu0 0
    %2202 = vmatprep.subr.bf16.mxu0 0
    %2203 = vmatpush1.bf16.msra.mxu0 0
    %2204 = vmatprep.subr.bf16.mxu0 0
    %2205 = vmatpush1.bf16.msra.mxu0 0
    %2206 = vmatprep.subr.bf16.mxu0 0
    %2207 = vmatpush1.bf16.msra.mxu0 0
    %2208 = vmatprep.subr.bf16.mxu0 0
    %2209 = vmatpush1.bf16.msra.mxu0 0
    %2210 = vmatprep.mubr.bf16.mxu0 0
    %2211 = vmatmul.mubr.bf16.gmra.mrb[0].mxu0 %v2170
    %v2212 = vpop.f32.mrb[0].mxu0
    %v2213 = vadd.f32 0.0, %v2212
    %v2214 = vpop.f32.mrb[0].mxu0
    %v2215 = vpop.f32.mrb[0].mxu0
    %v2216 = vadd.f32 0.0, %v2215
    %v2217 = vpop.f32.mrb[0].mxu0
    %2218 = vmatprep.mubr.bf16.mxu0 0
    %2219 = vmatmul.mubr.bf16.gmra.mrb[0].mxu0 %v2173
    %v2220 = vpop.f32.mrb[0].mxu0
    %v2221 = vadd.f32 0.0, %v2220
    %v2222 = vpop.f32.mrb[0].mxu0
    %v2223 = vpop.f32.mrb[0].mxu0
    %v2224 = vpop.f32.mrb[0].mxu0
    %2225 = vdwg.mxu0
    %v2226 = vld [vmem:[%s1 + $0x240] sm:$0xf]
    %v2227 = vpack.c.bf16 %v2216, %v2213
    %v2228 = vpack.c.bf16 %v2221, %v2221
    %2229 = vrot.lane.b32.xlu0 %v2060, 120
    %v2230 = vpop.permute.xlu0 %2229
    %2231 = vrot.lane.b32.xlu0 %v2061, 120
    %v2232 = vpop.permute.xlu0 %2231
    %2233 = vrot.lane.b32.xlu0 %v2060, 88
    %v2234 = vpop.permute.xlu0 %2233
    %2235 = vrot.lane.b32.xlu0 %v2061, 88
    %v2236 = vpop.permute.xlu0 %2235
    %v2238 = vsel %vm1215, %v2230, 0
    %v2241 = vsel %vm1215, %v2232, 0
    %v2244 = vsel %vm1215, %v2234, 0
    %v2247 = vsel %vm1215, %v2236, 0
    %2249 = vmatprep.subr.bf16.mxu0 0
    %2250 = vmatpush1.bf16.xpose.msra.mxu0 %v2244
    %2251 = vmatprep.subr.bf16.mxu0 0
    %2252 = vmatpush1.bf16.xpose.msra.mxu0 %v2247
    %2253 = vmatprep.subr.bf16.mxu0 0
    %2254 = vmatpush1.bf16.xpose.msra.mxu0 0
    %2255 = vmatprep.subr.bf16.mxu0 0
    %2256 = vmatpush1.bf16.xpose.msra.mxu0 0
    %2257 = vmatprep.subr.bf16.mxu0 0
    %2258 = vmatpush1.bf16.xpose.msra.mxu0 0
    %2259 = vmatprep.subr.bf16.mxu0 0
    %2260 = vmatpush1.bf16.xpose.msra.mxu0 0
    %2261 = vmatprep.subr.bf16.mxu0 0
    %2262 = vmatpush1.bf16.xpose.msra.mxu0 0
    %2263 = vmatprep.subr.bf16.mxu0 0
    %2264 = vmatpush1.bf16.xpose.msra.mxu0 0
    %2265 = vmatprep.subr.bf16.mxu0 0
    %2266 = vmatpush1.bf16.xpose.msra.mxu0 0
    %2267 = vmatprep.subr.bf16.mxu0 0
    %2268 = vmatpush1.bf16.xpose.msra.mxu0 0
    %2269 = vmatprep.subr.bf16.mxu0 0
    %2270 = vmatpush1.bf16.xpose.msra.mxu0 0
    %2271 = vmatprep.subr.bf16.mxu0 0
    %2272 = vmatpush1.bf16.xpose.msra.mxu0 0
    %2273 = vmatprep.subr.bf16.mxu0 0
    %2274 = vmatpush1.bf16.xpose.msra.mxu0 0
    %2275 = vmatprep.subr.bf16.mxu0 0
    %2276 = vmatpush1.bf16.xpose.msra.mxu0 0
    %2277 = vmatprep.subr.bf16.mxu0 0
    %2278 = vmatpush1.bf16.xpose.msra.mxu0 0
    %2279 = vmatprep.subr.bf16.mxu0 0
    %2280 = vmatpush1.bf16.xpose.msra.mxu0 0
    %2281 = vmatprep.mubr.bf16.mxu0 0
    %2282 = vmatmul.mubr.bf16.gmra.mrb[0].mxu0 %v2238
    %v2283 = vpop.f32.mrb[0].mxu0
    %v2284 = vadd.f32 %v2057, %v2283
    %v2285 = vpop.f32.mrb[0].mxu0
    %v2286 = vpop.f32.mrb[0].mxu0
    %v2287 = vadd.f32 %v2058, %v2286
    %v2288 = vpop.f32.mrb[0].mxu0
    %2289 = vmatprep.mubr.bf16.mxu0 0
    %2290 = vmatmul.mubr.bf16.gmra.mrb[0].mxu0 %v2241
    %v2291 = vpop.f32.mrb[0].mxu0
    %v2292 = vadd.f32 %v2059, %v2291
    %v2293 = vpop.f32.mrb[0].mxu0
    %v2294 = vpop.f32.mrb[0].mxu0
    %v2295 = vpop.f32.mrb[0].mxu0
    %2296 = vdwg.mxu0
    %v2297 = vsel %vm321, %v2284, -inf
    %2298 = vmax.xlane.f32.xlu0 %v2297
    %v2299 = vpop.xlane.xlu0 %2298
    %v2300 = vsel %vm321, %v2287, -inf
    %2301 = vmax.xlane.f32.xlu0 %v2300
    %v2302 = vpop.xlane.xlu0 %2301
    %v2303 = vsel %vm2134, %v2292, -inf
    %2304 = vmax.xlane.f32.xlu0 %v2303
    %v2305 = vpop.xlane.xlu0 %2304
    %v2306 = vsub.f32 %v2284, %v2299
    %v2307 = vsub.f32 %v2287, %v2302
    %v2308 = vsub.f32 %v2292, %v2305
    %v2309 = vmul.f32 %v2306, 1.442695
    %v2310 = vpow.pop %v2309
    %v2311 = vmul.f32 %v2307, 1.442695
    %v2312 = vpow.pop %v2311
    %v2313 = vmul.f32 %v2308, 1.442695
    %v2314 = vpow.pop %v2313
    %v2315 = vsel %vm321, %v2310, 0.0
    %2316 = vadd.xlane.f32.xlu0 %v2315
    %v2317 = vpop.xlane.xlu0 %2316
    %v2318 = vsel %vm321, %v2312, 0.0
    %2319 = vadd.xlane.f32.xlu0 %v2318
    %v2320 = vpop.xlane.xlu0 %2319
    %v2321 = vsel %vm2134, %v2314, 0.0
    %2322 = vadd.xlane.f32.xlu0 %v2321
    %v2323 = vpop.xlane.xlu0 %2322
    %v2324 = vrcp.pop %v2317
    %v2325 = vmul.f32 %v2310, %v2324
    %v2326 = vrcp.pop %v2320
    %v2327 = vmul.f32 %v2312, %v2326
    %v2328 = vrcp.pop %v2323
    %v2329 = vmul.f32 %v2314, %v2328
    %v2330 = vpack.c.bf16 %v2327, %v2325
    %v2331 = vpack.c.bf16 %v2329, %v2329
    %2332 = vrot.lane.b32.xlu0 %v2060, 56
    %v2333 = vpop.permute.xlu0 %2332
    %2334 = vrot.lane.b32.xlu0 %v2061, 56
    %v2335 = vpop.permute.xlu0 %2334
    %v2338 = vsel %vm321, %v2330, 0
    %v2341 = vsel %vm321, %v2331, 0
    %v2344 = vsel %vm328, %v2335, 0
    %2346 = vmatprep.subr.bf16.mxu0 0
    %2347 = vmatpush1.bf16.msra.mxu0 %v2333
    %2348 = vmatprep.subr.bf16.mxu0 0
    %2349 = vmatpush1.bf16.msra.mxu0 %v2344
    %2350 = vmatprep.subr.bf16.mxu0 0
    %2351 = vmatpush1.bf16.msra.mxu0 0
    %2352 = vmatprep.subr.bf16.mxu0 0
    %2353 = vmatpush1.bf16.msra.mxu0 0
    %2354 = vmatprep.subr.bf16.mxu0 0
    %2355 = vmatpush1.bf16.msra.mxu0 0
    %2356 = vmatprep.subr.bf16.mxu0 0
    %2357 = vmatpush1.bf16.msra.mxu0 0
    %2358 = vmatprep.subr.bf16.mxu0 0
    %2359 = vmatpush1.bf16.msra.mxu0 0
    %2360 = vmatprep.subr.bf16.mxu0 0
    %2361 = vmatpush1.bf16.msra.mxu0 0
    %2362 = vmatprep.subr.bf16.mxu0 0
    %2363 = vmatpush1.bf16.msra.mxu0 0
    %2364 = vmatprep.subr.bf16.mxu0 0
    %2365 = vmatpush1.bf16.msra.mxu0 0
    %2366 = vmatprep.subr.bf16.mxu0 0
    %2367 = vmatpush1.bf16.msra.mxu0 0
    %2368 = vmatprep.subr.bf16.mxu0 0
    %2369 = vmatpush1.bf16.msra.mxu0 0
    %2370 = vmatprep.subr.bf16.mxu0 0
    %2371 = vmatpush1.bf16.msra.mxu0 0
    %2372 = vmatprep.subr.bf16.mxu0 0
    %2373 = vmatpush1.bf16.msra.mxu0 0
    %2374 = vmatprep.subr.bf16.mxu0 0
    %2375 = vmatpush1.bf16.msra.mxu0 0
    %2376 = vmatprep.subr.bf16.mxu0 0
    %2377 = vmatpush1.bf16.msra.mxu0 0
    %2378 = vmatprep.mubr.bf16.mxu0 0
    %2379 = vmatmul.mubr.bf16.gmra.mrb[0].mxu0 %v2338
    %v2380 = vpop.f32.mrb[0].mxu0
    %v2381 = vadd.f32 0.0, %v2380
    %v2382 = vpop.f32.mrb[0].mxu0
    %v2383 = vpop.f32.mrb[0].mxu0
    %v2384 = vadd.f32 0.0, %v2383
    %v2385 = vpop.f32.mrb[0].mxu0
    %2386 = vmatprep.mubr.bf16.mxu0 0
    %2387 = vmatmul.mubr.bf16.gmra.mrb[0].mxu0 %v2341
    %v2388 = vpop.f32.mrb[0].mxu0
    %v2389 = vadd.f32 0.0, %v2388
    %v2390 = vpop.f32.mrb[0].mxu0
    %v2391 = vpop.f32.mrb[0].mxu0
    %v2392 = vpop.f32.mrb[0].mxu0
    %2393 = vdwg.mxu0
    %v2394 = vld [vmem:[%s1 + $0x250] sm:$0xf]
    %v2395 = vpack.c.bf16 %v2384, %v2381
    %v2396 = vpack.c.bf16 %v2389, %v2389
    %v2398 = vsel %vm1215, %v2395, 0
    %v2401 = vsel %vm1215, %v2396, 0
    %vm2403 = vcmask 1043456
    %v2405 = vsel %vm2403, %v2394, 0
    %2407 = vmatprep.subr.bf16.mxu0 0
    %2408 = vmatpush1.bf16.msra.mxu0 %v2405
    %2409 = vmatprep.subr.bf16.mxu0 0
    %2410 = vmatpush1.bf16.msra.mxu0 0
    %2411 = vmatprep.subr.bf16.mxu0 0
    %2412 = vmatpush1.bf16.msra.mxu0 0
    %2413 = vmatprep.subr.bf16.mxu0 0
    %2414 = vmatpush1.bf16.msra.mxu0 0
    %2415 = vmatprep.subr.bf16.mxu0 0
    %2416 = vmatpush1.bf16.msra.mxu0 0
    %2417 = vmatprep.subr.bf16.mxu0 0
    %2418 = vmatpush1.bf16.msra.mxu0 0
    %2419 = vmatprep.subr.bf16.mxu0 0
    %2420 = vmatpush1.bf16.msra.mxu0 0
    %2421 = vmatprep.subr.bf16.mxu0 0
    %2422 = vmatpush1.bf16.msra.mxu0 0
    %2423 = vmatprep.subr.bf16.mxu0 0
    %2424 = vmatpush1.bf16.msra.mxu0 0
    %2425 = vmatprep.subr.bf16.mxu0 0
    %2426 = vmatpush1.bf16.msra.mxu0 0
    %2427 = vmatprep.subr.bf16.mxu0 0
    %2428 = vmatpush1.bf16.msra.mxu0 0
    %2429 = vmatprep.subr.bf16.mxu0 0
    %2430 = vmatpush1.bf16.msra.mxu0 0
    %2431 = vmatprep.subr.bf16.mxu0 0
    %2432 = vmatpush1.bf16.msra.mxu0 0
    %2433 = vmatprep.subr.bf16.mxu0 0
    %2434 = vmatpush1.bf16.msra.mxu0 0
    %2435 = vmatprep.subr.bf16.mxu0 0
    %2436 = vmatpush1.bf16.msra.mxu0 0
    %2437 = vmatprep.subr.bf16.mxu0 0
    %2438 = vmatpush1.bf16.msra.mxu0 0
    %2439 = vmatprep.mubr.bf16.mxu0 0
    %2440 = vmatmul.mubr.bf16.gmra.mrb[0].mxu0 %v2398
    %v2441 = vpop.f32.mrb[0].mxu0
    %v2442 = vadd.f32 0.0, %v2441
    %v2443 = vpop.f32.mrb[0].mxu0
    %v2444 = vpop.f32.mrb[0].mxu0
    %v2445 = vadd.f32 0.0, %v2444
    %v2446 = vpop.f32.mrb[0].mxu0
    %2447 = vmatprep.mubr.bf16.mxu0 0
    %2448 = vmatmul.mubr.bf16.gmra.mrb[0].mxu0 %v2401
    %v2449 = vpop.f32.mrb[0].mxu0
    %v2450 = vadd.f32 0.0, %v2449
    %v2451 = vpop.f32.mrb[0].mxu0
    %v2452 = vpop.f32.mrb[0].mxu0
    %v2453 = vpop.f32.mrb[0].mxu0
    %2454 = vdwg.mxu0
    %v2456 = vsel %vm1215, %v2227, 0
    %v2459 = vsel %vm1215, %v2228, 0
    %v2462 = vsel %vm2403, %v2226, 0
    %2464 = vmatprep.subr.bf16.mxu0 0
    %2465 = vmatpush1.bf16.msra.mxu0 %v2462
    %2466 = vmatprep.subr.bf16.mxu0 0
    %2467 = vmatpush1.bf16.msra.mxu0 0
    %2468 = vmatprep.subr.bf16.mxu0 0
    %2469 = vmatpush1.bf16.msra.mxu0 0
    %2470 = vmatprep.subr.bf16.mxu0 0
    %2471 = vmatpush1.bf16.msra.mxu0 0
    %2472 = vmatprep.subr.bf16.mxu0 0
    %2473 = vmatpush1.bf16.msra.mxu0 0
    %2474 = vmatprep.subr.bf16.mxu0 0
    %2475 = vmatpush1.bf16.msra.mxu0 0
    %2476 = vmatprep.subr.bf16.mxu0 0
    %2477 = vmatpush1.bf16.msra.mxu0 0
    %2478 = vmatprep.subr.bf16.mxu0 0
    %2479 = vmatpush1.bf16.msra.mxu0 0
    %2480 = vmatprep.subr.bf16.mxu0 0
    %2481 = vmatpush1.bf16.msra.mxu0 0
    %2482 = vmatprep.subr.bf16.mxu0 0
    %2483 = vmatpush1.bf16.msra.mxu0 0
    %2484 = vmatprep.subr.bf16.mxu0 0
    %2485 = vmatpush1.bf16.msra.mxu0 0
    %2486 = vmatprep.subr.bf16.mxu0 0
    %2487 = vmatpush1.bf16.msra.mxu0 0
    %2488 = vmatprep.subr.bf16.mxu0 0
    %2489 = vmatpush1.bf16.msra.mxu0 0
    %2490 = vmatprep.subr.bf16.mxu0 0
    %2491 = vmatpush1.bf16.msra.mxu0 0
    %2492 = vmatprep.subr.bf16.mxu0 0
    %2493 = vmatpush1.bf16.msra.mxu0 0
    %2494 = vmatprep.subr.bf16.mxu0 0
    %2495 = vmatpush1.bf16.msra.mxu0 0
    %2496 = vmatprep.mubr.bf16.mxu0 0
    %2497 = vmatmul.mubr.bf16.gmra.mrb[0].mxu0 %v2456
    %v2498 = vpop.f32.mrb[0].mxu0
    %v2499 = vadd.f32 %v2442, %v2498
    %v2500 = vpop.f32.mrb[0].mxu0
    %v2501 = vpop.f32.mrb[0].mxu0
    %v2502 = vadd.f32 %v2445, %v2501
    %v2503 = vpop.f32.mrb[0].mxu0
    %2504 = vmatprep.mubr.bf16.mxu0 0
    %2505 = vmatmul.mubr.bf16.gmra.mrb[0].mxu0 %v2459
    %v2506 = vpop.f32.mrb[0].mxu0
    %v2507 = vadd.f32 %v2450, %v2506
    %v2508 = vpop.f32.mrb[0].mxu0
    %v2509 = vpop.f32.mrb[0].mxu0
    %v2510 = vpop.f32.mrb[0].mxu0
    %2511 = vdwg.mxu0
    %2512 = vrot.lane.b32.xlu0 %v2060, 112
    %v2513 = vpop.permute.xlu0 %2512
    %2514 = vrot.lane.b32.xlu0 %v2061, 112
    %v2515 = vpop.permute.xlu0 %2514
    %2516 = vrot.lane.b32.xlu0 %v2060, 80
    %v2517 = vpop.permute.xlu0 %2516
    %2518 = vrot.lane.b32.xlu0 %v2061, 80
    %v2519 = vpop.permute.xlu0 %2518
    %v2521 = vsel %vm1215, %v2513, 0
    %v2524 = vsel %vm1215, %v2515, 0
    %v2527 = vsel %vm1215, %v2517, 0
    %v2530 = vsel %vm1215, %v2519, 0
    %2532 = vmatprep.subr.bf16.mxu0 0
    %2533 = vmatpush1.bf16.xpose.msra.mxu0 %v2527
    %2534 = vmatprep.subr.bf16.mxu0 0
    %2535 = vmatpush1.bf16.xpose.msra.mxu0 %v2530
    %2536 = vmatprep.subr.bf16.mxu0 0
    %2537 = vmatpush1.bf16.xpose.msra.mxu0 0
    %2538 = vmatprep.subr.bf16.mxu0 0
    %2539 = vmatpush1.bf16.xpose.msra.mxu0 0
    %2540 = vmatprep.subr.bf16.mxu0 0
    %2541 = vmatpush1.bf16.xpose.msra.mxu0 0
    %2542 = vmatprep.subr.bf16.mxu0 0
    %2543 = vmatpush1.bf16.xpose.msra.mxu0 0
    %2544 = vmatprep.subr.bf16.mxu0 0
    %2545 = vmatpush1.bf16.xpose.msra.mxu0 0
    %2546 = vmatprep.subr.bf16.mxu0 0
    %2547 = vmatpush1.bf16.xpose.msra.mxu0 0
    %2548 = vmatprep.subr.bf16.mxu0 0
    %2549 = vmatpush1.bf16.xpose.msra.mxu0 0
    %2550 = vmatprep.subr.bf16.mxu0 0
    %2551 = vmatpush1.bf16.xpose.msra.mxu0 0
    %2552 = vmatprep.subr.bf16.mxu0 0
    %2553 = vmatpush1.bf16.xpose.msra.mxu0 0
    %2554 = vmatprep.subr.bf16.mxu0 0
    %2555 = vmatpush1.bf16.xpose.msra.mxu0 0
    %2556 = vmatprep.subr.bf16.mxu0 0
    %2557 = vmatpush1.bf16.xpose.msra.mxu0 0
    %2558 = vmatprep.subr.bf16.mxu0 0
    %2559 = vmatpush1.bf16.xpose.msra.mxu0 0
    %2560 = vmatprep.subr.bf16.mxu0 0
    %2561 = vmatpush1.bf16.xpose.msra.mxu0 0
    %2562 = vmatprep.subr.bf16.mxu0 0
    %2563 = vmatpush1.bf16.xpose.msra.mxu0 0
    %2564 = vmatprep.mubr.bf16.mxu0 0
    %2565 = vmatmul.mubr.bf16.gmra.mrb[0].mxu0 %v2521
    %v2566 = vpop.f32.mrb[0].mxu0
    %v2567 = vadd.f32 %v2057, %v2566
    %v2568 = vpop.f32.mrb[0].mxu0
    %v2569 = vpop.f32.mrb[0].mxu0
    %v2570 = vadd.f32 %v2058, %v2569
    %v2571 = vpop.f32.mrb[0].mxu0
    %2572 = vmatprep.mubr.bf16.mxu0 0
    %2573 = vmatmul.mubr.bf16.gmra.mrb[0].mxu0 %v2524
    %v2574 = vpop.f32.mrb[0].mxu0
    %v2575 = vadd.f32 %v2059, %v2574
    %v2576 = vpop.f32.mrb[0].mxu0
    %v2577 = vpop.f32.mrb[0].mxu0
    %v2578 = vpop.f32.mrb[0].mxu0
    %2579 = vdwg.mxu0
    %v2580 = vsel %vm321, %v2567, -inf
    %2581 = vmax.xlane.f32.xlu0 %v2580
    %v2582 = vpop.xlane.xlu0 %2581
    %v2583 = vsel %vm321, %v2570, -inf
    %2584 = vmax.xlane.f32.xlu0 %v2583
    %v2585 = vpop.xlane.xlu0 %2584
    %v2586 = vsel %vm2134, %v2575, -inf
    %2587 = vmax.xlane.f32.xlu0 %v2586
    %v2588 = vpop.xlane.xlu0 %2587
    %v2589 = vsub.f32 %v2567, %v2582
    %v2590 = vsub.f32 %v2570, %v2585
    %v2591 = vsub.f32 %v2575, %v2588
    %v2592 = vmul.f32 %v2589, 1.442695
    %v2593 = vpow.pop %v2592
    %v2594 = vmul.f32 %v2590, 1.442695
    %v2595 = vpow.pop %v2594
    %v2596 = vmul.f32 %v2591, 1.442695
    %v2597 = vpow.pop %v2596
    %v2598 = vsel %vm321, %v2593, 0.0
    %2599 = vadd.xlane.f32.xlu0 %v2598
    %v2600 = vpop.xlane.xlu0 %2599
    %v2601 = vsel %vm321, %v2595, 0.0
    %2602 = vadd.xlane.f32.xlu0 %v2601
    %v2603 = vpop.xlane.xlu0 %2602
    %v2604 = vsel %vm2134, %v2597, 0.0
    %2605 = vadd.xlane.f32.xlu0 %v2604
    %v2606 = vpop.xlane.xlu0 %2605
    %v2607 = vrcp.pop %v2600
    %v2608 = vmul.f32 %v2593, %v2607
    %v2609 = vrcp.pop %v2603
    %v2610 = vmul.f32 %v2595, %v2609
    %v2611 = vrcp.pop %v2606
    %v2612 = vmul.f32 %v2597, %v2611
    %v2613 = vpack.c.bf16 %v2610, %v2608
    %v2614 = vpack.c.bf16 %v2612, %v2612
    %2615 = vrot.lane.b32.xlu0 %v2060, 48
    %v2616 = vpop.permute.xlu0 %2615
    %2617 = vrot.lane.b32.xlu0 %v2061, 48
    %v2618 = vpop.permute.xlu0 %2617
    %v2621 = vsel %vm321, %v2613, 0
    %v2624 = vsel %vm321, %v2614, 0
    %v2627 = vsel %vm328, %v2618, 0
    %2629 = vmatprep.subr.bf16.mxu0 0
    %2630 = vmatpush1.bf16.msra.mxu0 %v2616
    %2631 = vmatprep.subr.bf16.mxu0 0
    %2632 = vmatpush1.bf16.msra.mxu0 %v2627
    %2633 = vmatprep.subr.bf16.mxu0 0
    %2634 = vmatpush1.bf16.msra.mxu0 0
    %2635 = vmatprep.subr.bf16.mxu0 0
    %2636 = vmatpush1.bf16.msra.mxu0 0
    %2637 = vmatprep.subr.bf16.mxu0 0
    %2638 = vmatpush1.bf16.msra.mxu0 0
    %2639 = vmatprep.subr.bf16.mxu0 0
    %2640 = vmatpush1.bf16.msra.mxu0 0
    %2641 = vmatprep.subr.bf16.mxu0 0
    %2642 = vmatpush1.bf16.msra.mxu0 0
    %2643 = vmatprep.subr.bf16.mxu0 0
    %2644 = vmatpush1.bf16.msra.mxu0 0
    %2645 = vmatprep.subr.bf16.mxu0 0
    %2646 = vmatpush1.bf16.msra.mxu0 0
    %2647 = vmatprep.subr.bf16.mxu0 0
    %2648 = vmatpush1.bf16.msra.mxu0 0
    %2649 = vmatprep.subr.bf16.mxu0 0
    %2650 = vmatpush1.bf16.msra.mxu0 0
    %2651 = vmatprep.subr.bf16.mxu0 0
    %2652 = vmatpush1.bf16.msra.mxu0 0
    %2653 = vmatprep.subr.bf16.mxu0 0
    %2654 = vmatpush1.bf16.msra.mxu0 0
    %2655 = vmatprep.subr.bf16.mxu0 0
    %2656 = vmatpush1.bf16.msra.mxu0 0
    %2657 = vmatprep.subr.bf16.mxu0 0
    %2658 = vmatpush1.bf16.msra.mxu0 0
    %2659 = vmatprep.subr.bf16.mxu0 0
    %2660 = vmatpush1.bf16.msra.mxu0 0
    %2661 = vmatprep.mubr.bf16.mxu0 0
    %2662 = vmatmul.mubr.bf16.gmra.mrb[0].mxu0 %v2621
    %v2663 = vpop.f32.mrb[0].mxu0
    %v2664 = vadd.f32 0.0, %v2663
    %v2665 = vpop.f32.mrb[0].mxu0
    %v2666 = vpop.f32.mrb[0].mxu0
    %v2667 = vadd.f32 0.0, %v2666
    %v2668 = vpop.f32.mrb[0].mxu0
    %2669 = vmatprep.mubr.bf16.mxu0 0
    %2670 = vmatmul.mubr.bf16.gmra.mrb[0].mxu0 %v2624
    %v2671 = vpop.f32.mrb[0].mxu0
    %v2672 = vadd.f32 0.0, %v2671
    %v2673 = vpop.f32.mrb[0].mxu0
    %v2674 = vpop.f32.mrb[0].mxu0
    %v2675 = vpop.f32.mrb[0].mxu0
    %2676 = vdwg.mxu0
    %v2677 = vld [vmem:[%s1 + $0x260] sm:$0xf]
    %v2678 = vpack.c.bf16 %v2667, %v2664
    %v2679 = vpack.c.bf16 %v2672, %v2672
    %v2681 = vsel %vm1215, %v2678, 0
    %v2684 = vsel %vm1215, %v2679, 0
    %v2687 = vsel %vm2403, %v2677, 0
    %2689 = vmatprep.subr.bf16.mxu0 0
    %2690 = vmatpush1.bf16.msra.mxu0 %v2687
    %2691 = vmatprep.subr.bf16.mxu0 0
    %2692 = vmatpush1.bf16.msra.mxu0 0
    %2693 = vmatprep.subr.bf16.mxu0 0
    %2694 = vmatpush1.bf16.msra.mxu0 0
    %2695 = vmatprep.subr.bf16.mxu0 0
    %2696 = vmatpush1.bf16.msra.mxu0 0
    %2697 = vmatprep.subr.bf16.mxu0 0
    %2698 = vmatpush1.bf16.msra.mxu0 0
    %2699 = vmatprep.subr.bf16.mxu0 0
    %2700 = vmatpush1.bf16.msra.mxu0 0
    %2701 = vmatprep.subr.bf16.mxu0 0
    %2702 = vmatpush1.bf16.msra.mxu0 0
    %2703 = vmatprep.subr.bf16.mxu0 0
    %2704 = vmatpush1.bf16.msra.mxu0 0
    %2705 = vmatprep.subr.bf16.mxu0 0
    %2706 = vmatpush1.bf16.msra.mxu0 0
    %2707 = vmatprep.subr.bf16.mxu0 0
    %2708 = vmatpush1.bf16.msra.mxu0 0
    %2709 = vmatprep.subr.bf16.mxu0 0
    %2710 = vmatpush1.bf16.msra.mxu0 0
    %2711 = vmatprep.subr.bf16.mxu0 0
    %2712 = vmatpush1.bf16.msra.mxu0 0
    %2713 = vmatprep.subr.bf16.mxu0 0
    %2714 = vmatpush1.bf16.msra.mxu0 0
    %2715 = vmatprep.subr.bf16.mxu0 0
    %2716 = vmatpush1.bf16.msra.mxu0 0
    %2717 = vmatprep.subr.bf16.mxu0 0
    %2718 = vmatpush1.bf16.msra.mxu0 0
    %2719 = vmatprep.subr.bf16.mxu0 0
    %2720 = vmatpush1.bf16.msra.mxu0 0
    %2721 = vmatprep.mubr.bf16.mxu0 0
    %2722 = vmatmul.mubr.bf16.gmra.mrb[0].mxu0 %v2681
    %v2723 = vpop.f32.mrb[0].mxu0
    %v2724 = vadd.f32 0.0, %v2723
    %v2725 = vpop.f32.mrb[0].mxu0
    %v2726 = vpop.f32.mrb[0].mxu0
    %v2727 = vadd.f32 0.0, %v2726
    %v2728 = vpop.f32.mrb[0].mxu0
    %2729 = vmatprep.mubr.bf16.mxu0 0
    %2730 = vmatmul.mubr.bf16.gmra.mrb[0].mxu0 %v2684
    %v2731 = vpop.f32.mrb[0].mxu0
    %v2732 = vadd.f32 0.0, %v2731
    %v2733 = vpop.f32.mrb[0].mxu0
    %v2734 = vpop.f32.mrb[0].mxu0
    %v2735 = vpop.f32.mrb[0].mxu0
    %2736 = vdwg.mxu0
    %v2737 = vadd.f32 %v2499, %v2724
    %v2738 = vadd.f32 %v2502, %v2727
    %v2739 = vadd.f32 %v2507, %v2732
    %2740 = vrot.lane.b32.xlu0 %v2060, 104
    %v2741 = vpop.permute.xlu0 %2740
    %2742 = vrot.lane.b32.xlu0 %v2061, 104
    %v2743 = vpop.permute.xlu0 %2742
    %2744 = vrot.lane.b32.xlu0 %v2060, 72
    %v2745 = vpop.permute.xlu0 %2744
    %2746 = vrot.lane.b32.xlu0 %v2061, 72
    %v2747 = vpop.permute.xlu0 %2746
    %v2749 = vsel %vm1215, %v2741, 0
    %v2752 = vsel %vm1215, %v2743, 0
    %v2755 = vsel %vm1215, %v2745, 0
    %v2758 = vsel %vm1215, %v2747, 0
    %2760 = vmatprep.subr.bf16.mxu0 0
    %2761 = vmatpush1.bf16.xpose.msra.mxu0 %v2755
    %2762 = vmatprep.subr.bf16.mxu0 0
    %2763 = vmatpush1.bf16.xpose.msra.mxu0 %v2758
    %2764 = vmatprep.subr.bf16.mxu0 0
    %2765 = vmatpush1.bf16.xpose.msra.mxu0 0
    %2766 = vmatprep.subr.bf16.mxu0 0
    %2767 = vmatpush1.bf16.xpose.msra.mxu0 0
    %2768 = vmatprep.subr.bf16.mxu0 0
    %2769 = vmatpush1.bf16.xpose.msra.mxu0 0
    %2770 = vmatprep.subr.bf16.mxu0 0
    %2771 = vmatpush1.bf16.xpose.msra.mxu0 0
    %2772 = vmatprep.subr.bf16.mxu0 0
    %2773 = vmatpush1.bf16.xpose.msra.mxu0 0
    %2774 = vmatprep.subr.bf16.mxu0 0
    %2775 = vmatpush1.bf16.xpose.msra.mxu0 0
    %2776 = vmatprep.subr.bf16.mxu0 0
    %2777 = vmatpush1.bf16.xpose.msra.mxu0 0
    %2778 = vmatprep.subr.bf16.mxu0 0
    %2779 = vmatpush1.bf16.xpose.msra.mxu0 0
    %2780 = vmatprep.subr.bf16.mxu0 0
    %2781 = vmatpush1.bf16.xpose.msra.mxu0 0
    %2782 = vmatprep.subr.bf16.mxu0 0
    %2783 = vmatpush1.bf16.xpose.msra.mxu0 0
    %2784 = vmatprep.subr.bf16.mxu0 0
    %2785 = vmatpush1.bf16.xpose.msra.mxu0 0
    %2786 = vmatprep.subr.bf16.mxu0 0
    %2787 = vmatpush1.bf16.xpose.msra.mxu0 0
    %2788 = vmatprep.subr.bf16.mxu0 0
    %2789 = vmatpush1.bf16.xpose.msra.mxu0 0
    %2790 = vmatprep.subr.bf16.mxu0 0
    %2791 = vmatpush1.bf16.xpose.msra.mxu0 0
    %2792 = vmatprep.mubr.bf16.mxu0 0
    %2793 = vmatmul.mubr.bf16.gmra.mrb[0].mxu0 %v2749
    %v2794 = vpop.f32.mrb[0].mxu0
    %v2795 = vadd.f32 %v2057, %v2794
    %v2796 = vpop.f32.mrb[0].mxu0
    %v2797 = vpop.f32.mrb[0].mxu0
    %v2798 = vadd.f32 %v2058, %v2797
    %v2799 = vpop.f32.mrb[0].mxu0
    %2800 = vmatprep.mubr.bf16.mxu0 0
    %2801 = vmatmul.mubr.bf16.gmra.mrb[0].mxu0 %v2752
    %v2802 = vpop.f32.mrb[0].mxu0
    %v2803 = vadd.f32 %v2059, %v2802
    %v2804 = vpop.f32.mrb[0].mxu0
    %v2805 = vpop.f32.mrb[0].mxu0
    %v2806 = vpop.f32.mrb[0].mxu0
    %2807 = vdwg.mxu0
    %v2808 = vsel %vm321, %v2795, -inf
    %2809 = vmax.xlane.f32.xlu0 %v2808
    %v2810 = vpop.xlane.xlu0 %2809
    %v2811 = vsel %vm321, %v2798, -inf
    %2812 = vmax.xlane.f32.xlu0 %v2811
    %v2813 = vpop.xlane.xlu0 %2812
    %v2814 = vsel %vm2134, %v2803, -inf
    %2815 = vmax.xlane.f32.xlu0 %v2814
    %v2816 = vpop.xlane.xlu0 %2815
    %v2817 = vsub.f32 %v2795, %v2810
    %v2818 = vsub.f32 %v2798, %v2813
    %v2819 = vsub.f32 %v2803, %v2816
    %v2820 = vmul.f32 %v2817, 1.442695
    %v2821 = vpow.pop %v2820
    %v2822 = vmul.f32 %v2818, 1.442695
    %v2823 = vpow.pop %v2822
    %v2824 = vmul.f32 %v2819, 1.442695
    %v2825 = vpow.pop %v2824
    %v2826 = vsel %vm321, %v2821, 0.0
    %2827 = vadd.xlane.f32.xlu0 %v2826
    %v2828 = vpop.xlane.xlu0 %2827
    %v2829 = vsel %vm321, %v2823, 0.0
    %2830 = vadd.xlane.f32.xlu0 %v2829
    %v2831 = vpop.xlane.xlu0 %2830
    %v2832 = vsel %vm2134, %v2825, 0.0
    %2833 = vadd.xlane.f32.xlu0 %v2832
    %v2834 = vpop.xlane.xlu0 %2833
    %v2835 = vrcp.pop %v2828
    %v2836 = vmul.f32 %v2821, %v2835
    %v2837 = vrcp.pop %v2831
    %v2838 = vmul.f32 %v2823, %v2837
    %v2839 = vrcp.pop %v2834
    %v2840 = vmul.f32 %v2825, %v2839
    %v2841 = vpack.c.bf16 %v2838, %v2836
    %v2842 = vpack.c.bf16 %v2840, %v2840
    %2843 = vrot.lane.b32.xlu0 %v2060, 40
    %v2844 = vpop.permute.xlu0 %2843
    %2845 = vrot.lane.b32.xlu0 %v2061, 40
    %v2846 = vpop.permute.xlu0 %2845
    %v2849 = vsel %vm321, %v2841, 0
    %v2852 = vsel %vm321, %v2842, 0
    %v2855 = vsel %vm328, %v2846, 0
    %2857 = vmatprep.subr.bf16.mxu0 0
    %2858 = vmatpush1.bf16.msra.mxu0 %v2844
    %2859 = vmatprep.subr.bf16.mxu0 0
    %2860 = vmatpush1.bf16.msra.mxu0 %v2855
    %2861 = vmatprep.subr.bf16.mxu0 0
    %2862 = vmatpush1.bf16.msra.mxu0 0
    %2863 = vmatprep.subr.bf16.mxu0 0
    %2864 = vmatpush1.bf16.msra.mxu0 0
    %2865 = vmatprep.subr.bf16.mxu0 0
    %2866 = vmatpush1.bf16.msra.mxu0 0
    %2867 = vmatprep.subr.bf16.mxu0 0
    %2868 = vmatpush1.bf16.msra.mxu0 0
    %2869 = vmatprep.subr.bf16.mxu0 0
    %2870 = vmatpush1.bf16.msra.mxu0 0
    %2871 = vmatprep.subr.bf16.mxu0 0
    %2872 = vmatpush1.bf16.msra.mxu0 0
    %2873 = vmatprep.subr.bf16.mxu0 0
    %2874 = vmatpush1.bf16.msra.mxu0 0
    %2875 = vmatprep.subr.bf16.mxu0 0
    %2876 = vmatpush1.bf16.msra.mxu0 0
    %2877 = vmatprep.subr.bf16.mxu0 0
    %2878 = vmatpush1.bf16.msra.mxu0 0
    %2879 = vmatprep.subr.bf16.mxu0 0
    %2880 = vmatpush1.bf16.msra.mxu0 0
    %2881 = vmatprep.subr.bf16.mxu0 0
    %2882 = vmatpush1.bf16.msra.mxu0 0
    %2883 = vmatprep.subr.bf16.mxu0 0
    %2884 = vmatpush1.bf16.msra.mxu0 0
    %2885 = vmatprep.subr.bf16.mxu0 0
    %2886 = vmatpush1.bf16.msra.mxu0 0
    %2887 = vmatprep.subr.bf16.mxu0 0
    %2888 = vmatpush1.bf16.msra.mxu0 0
    %2889 = vmatprep.mubr.bf16.mxu0 0
    %2890 = vmatmul.mubr.bf16.gmra.mrb[0].mxu0 %v2849
    %v2891 = vpop.f32.mrb[0].mxu0
    %v2892 = vadd.f32 0.0, %v2891
    %v2893 = vpop.f32.mrb[0].mxu0
    %v2894 = vpop.f32.mrb[0].mxu0
    %v2895 = vadd.f32 0.0, %v2894
    %v2896 = vpop.f32.mrb[0].mxu0
    %2897 = vmatprep.mubr.bf16.mxu0 0
    %2898 = vmatmul.mubr.bf16.gmra.mrb[0].mxu0 %v2852
    %v2899 = vpop.f32.mrb[0].mxu0
    %v2900 = vadd.f32 0.0, %v2899
    %v2901 = vpop.f32.mrb[0].mxu0
    %v2902 = vpop.f32.mrb[0].mxu0
    %v2903 = vpop.f32.mrb[0].mxu0
    %2904 = vdwg.mxu0
    %v2905 = vld [vmem:[%s1 + $0x270] sm:$0xf]
    %v2906 = vpack.c.bf16 %v2895, %v2892
    %v2907 = vpack.c.bf16 %v2900, %v2900
    %v2909 = vsel %vm1215, %v2906, 0
    %v2912 = vsel %vm1215, %v2907, 0
    %v2915 = vsel %vm2403, %v2905, 0
    %2917 = vmatprep.subr.bf16.mxu0 0
    %2918 = vmatpush1.bf16.msra.mxu0 %v2915
    %2919 = vmatprep.subr.bf16.mxu0 0
    %2920 = vmatpush1.bf16.msra.mxu0 0
    %2921 = vmatprep.subr.bf16.mxu0 0
    %2922 = vmatpush1.bf16.msra.mxu0 0
    %2923 = vmatprep.subr.bf16.mxu0 0
    %2924 = vmatpush1.bf16.msra.mxu0 0
    %2925 = vmatprep.subr.bf16.mxu0 0
    %2926 = vmatpush1.bf16.msra.mxu0 0
    %2927 = vmatprep.subr.bf16.mxu0 0
    %2928 = vmatpush1.bf16.msra.mxu0 0
    %2929 = vmatprep.subr.bf16.mxu0 0
    %2930 = vmatpush1.bf16.msra.mxu0 0
    %2931 = vmatprep.subr.bf16.mxu0 0
    %2932 = vmatpush1.bf16.msra.mxu0 0
    %2933 = vmatprep.subr.bf16.mxu0 0
    %2934 = vmatpush1.bf16.msra.mxu0 0
    %2935 = vmatprep.subr.bf16.mxu0 0
    %2936 = vmatpush1.bf16.msra.mxu0 0
    %2937 = vmatprep.subr.bf16.mxu0 0
    %2938 = vmatpush1.bf16.msra.mxu0 0
    %2939 = vmatprep.subr.bf16.mxu0 0
    %2940 = vmatpush1.bf16.msra.mxu0 0
    %2941 = vmatprep.subr.bf16.mxu0 0
    %2942 = vmatpush1.bf16.msra.mxu0 0
    %2943 = vmatprep.subr.bf16.mxu0 0
    %2944 = vmatpush1.bf16.msra.mxu0 0
    %2945 = vmatprep.subr.bf16.mxu0 0
    %2946 = vmatpush1.bf16.msra.mxu0 0
    %2947 = vmatprep.subr.bf16.mxu0 0
    %2948 = vmatpush1.bf16.msra.mxu0 0
    %2949 = vmatprep.mubr.bf16.mxu0 0
    %2950 = vmatmul.mubr.bf16.gmra.mrb[0].mxu0 %v2909
    %v2951 = vpop.f32.mrb[0].mxu0
    %v2952 = vadd.f32 0.0, %v2951
    %v2953 = vpop.f32.mrb[0].mxu0
    %v2954 = vpop.f32.mrb[0].mxu0
    %v2955 = vadd.f32 0.0, %v2954
    %v2956 = vpop.f32.mrb[0].mxu0
    %2957 = vmatprep.mubr.bf16.mxu0 0
    %2958 = vmatmul.mubr.bf16.gmra.mrb[0].mxu0 %v2912
    %v2959 = vpop.f32.mrb[0].mxu0
    %v2960 = vadd.f32 0.0, %v2959
    %v2961 = vpop.f32.mrb[0].mxu0
    %v2962 = vpop.f32.mrb[0].mxu0
    %v2963 = vpop.f32.mrb[0].mxu0
    %2964 = vdwg.mxu0
    %v2965 = vadd.f32 %v2737, %v2952
    %v2966 = vadd.f32 %v2738, %v2955
    %v2967 = vadd.f32 %v2739, %v2960
    %v2968 = vadd.f32 %v1977, %v2965
    %v2969 = vadd.f32 %v1978, %v2966
    %v2970 = vadd.f32 %v1979, %v2967
    %v2971 = vld [vmem:[%s2 + $0x1d8] sm:$0x1]
    %v2972 = vlaneseq
    %v2973 = vshrl.u32 %v2972, 7
    %v2974 = vsub.s32 0, %v2973
    %v2975 = vrot.slane %v2971, %v2974
    %v2976 = vadd.f32 %v2968, %v2975
    %v2977 = vadd.f32 %v2969, %v2975
    %v2978 = vadd.f32 %v2970, %v2975
    %v2979 = vld [vmem:[%s2 + $0x1e0] sm:$0x1]
    %v2980 = vld [vmem:[%s2 + $0x1e8] sm:$0x1]
    %v2981 = vsel %vm128, %v2976, 0.0
    %2982 = vadd.xlane.f32.xlu0 %v2981
    %v2983 = vpop.xlane.xlu0 %2982
    %v2984 = vsel %vm128, %v2977, 0.0
    %2985 = vadd.xlane.f32.xlu0 %v2984
    %v2986 = vpop.xlane.xlu0 %2985
    %v2987 = vsel %vm1931, %v2978, 0.0
    %2988 = vadd.xlane.f32.xlu0 %v2987
    %v2989 = vpop.xlane.xlu0 %2988
    %v2990 = vmul.f32 %v2983, %v1935
    %v2991 = vmul.f32 %v2986, %v1935
    %v2992 = vmul.f32 %v2989, %v1935
    %v2993 = vsub.f32 %v2976, %v2990
    %v2994 = vsub.f32 %v2977, %v2991
    %v2995 = vsub.f32 %v2978, %v2992
    %v2996 = vmul.f32 %v2993, %v2993
    %v2997 = vmul.f32 %v2994, %v2994
    %v2998 = vmul.f32 %v2995, %v2995
    %v2999 = vsel %vm128, %v2996, 0.0
    %3000 = vadd.xlane.f32.xlu0 %v2999
    %v3001 = vpop.xlane.xlu0 %3000
    %v3002 = vsel %vm128, %v2997, 0.0
    %3003 = vadd.xlane.f32.xlu0 %v3002
    %v3004 = vpop.xlane.xlu0 %3003
    %v3005 = vsel %vm1931, %v2998, 0.0
    %3006 = vadd.xlane.f32.xlu0 %v3005
    %v3007 = vpop.xlane.xlu0 %3006
    %v3008 = vmul.f32 %v3001, %v1935
    %v3009 = vmul.f32 %v3004, %v1935
    %v3010 = vmul.f32 %v3007, %v1935
    %v3011 = vadd.f32 %v3008, 1e-05
    %v3012 = vadd.f32 %v3009, 1e-05
    %v3013 = vadd.f32 %v3010, 1e-05
    %v3014 = vrsqrt.pop %v3011
    %v3015 = vrsqrt.pop %v3012
    %v3016 = vrsqrt.pop %v3013
    %v3017 = vmul.f32 %v2993, %v3014
    %v3018 = vmul.f32 %v2994, %v3015
    %v3019 = vmul.f32 %v2995, %v3016
    %v3020 = vlaneseq
    %v3021 = vshrl.u32 %v3020, 7
    %v3022 = vsub.s32 0, %v3021
    %v3023 = vrot.slane %v2979, %v3022
    %v3024 = vmul.f32 %v3017, %v3023
    %v3025 = vmul.f32 %v3018, %v3023
    %v3026 = vmul.f32 %v3019, %v3023
    %v3027 = vlaneseq
    %v3028 = vshrl.u32 %v3027, 7
    %v3029 = vsub.s32 0, %v3028
    %v3030 = vrot.slane %v2980, %v3029
    %v3031 = vadd.f32 %v3024, %v3030
    %v3032 = vadd.f32 %v3025, %v3030
    %v3033 = vadd.f32 %v3026, %v3030
    %v3034 = vld [vmem:[%s1 + $0x280] sm:$0xf]
    %v3035 = vld [vmem:[%s1 + $0x288] sm:$0xf]
    %v3036 = vld [vmem:[%s1 + $0x290] sm:$0xf]
    %v3037 = vld [vmem:[%s1 + $0x298] sm:$0xf]
    %v3038 = vpack.c.bf16 %v3032, %v3031
    %v3039 = vpack.c.bf16 %v3033, %v3033
    %v3044 = vunpack.c.l.b16 %v3034
    %v3045 = vunpack.c.l.b16 %v3035
    %v3046 = vunpack.c.l.b16 %v3036
    %v3047 = vunpack.c.l.b16 %v3037
    %v3048 = vpack.c.b16 %v3045, %v3044
    %v3049 = vpack.c.b16 %v3047, %v3046
    %v3053 = vsel %vm128, %v3038, 0
    %v3056 = vsel %vm128, %v3039, 0
    %3058 = vmatprep.subr.bf16.mxu0 0
    %3059 = vmatpush1.bf16.msra.mxu0 %v3048
    %3060 = vmatprep.subr.bf16.mxu0 0
    %3061 = vmatpush1.bf16.msra.mxu0 %v3049
    %3062 = vmatprep.subr.bf16.mxu0 0
    %3063 = vmatpush1.bf16.msra.mxu0 0
    %3064 = vmatprep.subr.bf16.mxu0 0
    %3065 = vmatpush1.bf16.msra.mxu0 0
    %3066 = vmatprep.subr.bf16.mxu0 0
    %3067 = vmatpush1.bf16.msra.mxu0 0
    %3068 = vmatprep.subr.bf16.mxu0 0
    %3069 = vmatpush1.bf16.msra.mxu0 0
    %3070 = vmatprep.subr.bf16.mxu0 0
    %3071 = vmatpush1.bf16.msra.mxu0 0
    %3072 = vmatprep.subr.bf16.mxu0 0
    %3073 = vmatpush1.bf16.msra.mxu0 0
    %3074 = vmatprep.subr.bf16.mxu0 0
    %3075 = vmatpush1.bf16.msra.mxu0 0
    %3076 = vmatprep.subr.bf16.mxu0 0
    %3077 = vmatpush1.bf16.msra.mxu0 0
    %3078 = vmatprep.subr.bf16.mxu0 0
    %3079 = vmatpush1.bf16.msra.mxu0 0
    %3080 = vmatprep.subr.bf16.mxu0 0
    %3081 = vmatpush1.bf16.msra.mxu0 0
    %3082 = vmatprep.subr.bf16.mxu0 0
    %3083 = vmatpush1.bf16.msra.mxu0 0
    %3084 = vmatprep.subr.bf16.mxu0 0
    %3085 = vmatpush1.bf16.msra.mxu0 0
    %3086 = vmatprep.subr.bf16.mxu0 0
    %3087 = vmatpush1.bf16.msra.mxu0 0
    %3088 = vmatprep.subr.bf16.mxu0 0
    %3089 = vmatpush1.bf16.msra.mxu0 0
    %3090 = vmatprep.mubr.bf16.mxu0 0
    %3091 = vmatmul.mubr.bf16.gmra.mrb[0].mxu0 %v3053
    %v3092 = vpop.f32.mrb[0].mxu0
    %v3093 = vadd.f32 0.0, %v3092
    %v3094 = vpop.f32.mrb[0].mxu0
    %v3095 = vpop.f32.mrb[0].mxu0
    %v3096 = vadd.f32 0.0, %v3095
    %v3097 = vpop.f32.mrb[0].mxu0
    %3098 = vmatprep.mubr.bf16.mxu0 0
    %3099 = vmatmul.mubr.bf16.gmra.mrb[0].mxu0 %v3056
    %v3100 = vpop.f32.mrb[0].mxu0
    %v3101 = vadd.f32 0.0, %v3100
    %v3102 = vpop.f32.mrb[0].mxu0
    %v3103 = vpop.f32.mrb[0].mxu0
    %v3104 = vpop.f32.mrb[0].mxu0
    %3105 = vdwg.mxu0
    %v3106 = vld [vmem:[%s2 + $0x1f0] sm:$0xf]
    %v3107 = vpack.c.bf16 %v3096, %v3093
    %v3108 = vpack.c.bf16 %v3101, %v3101
    %v3109 = vlaneseq
    %v3110 = vshrl.u32 %v3109, 7
    %v3111 = vsub.s32 3, %v3110
    %v3112 = vrot.slane %v3106, %v3111
    %v3113 = vmul.f32 %v3093, %v3112
    %v3114 = vmul.f32 %v3096, %v3112
    %v3115 = vmul.f32 %v3101, %v3112
    %v3116 = vld [vmem:[%s1 + $0x110] sm:$0xf]
    %v3117 = vld [vmem:[%s1 + $0x118] sm:$0xf]
    %v3118 = vld [vmem:[%s1 + $0x120] sm:$0x1]
    %v3122 = vunpack.c.l.b16 %v3116
    %v3123 = vunpack.c.l.b16 %v3117
    %v3124 = vunpack.c.l.b16 %v3118
    %v3125 = vpack.c.b16 %v3123, %v3122
    %v3126 = vpack.c.b16 %v3124, %v3124
    %v3128 = vsel %vm321, %v3125, 0
    %v3131 = vsel %vm321, %v3126, 0
    %v3134 = vsel %vm328, %v3108, 0
    %3136 = vmatprep.subr.bf16.mxu0 0
    %3137 = vmatpush1.bf16.msra.mxu0 %v3107
    %3138 = vmatprep.subr.bf16.mxu0 0
    %3139 = vmatpush1.bf16.msra.mxu0 %v3134
    %3140 = vmatprep.subr.bf16.mxu0 0
    %3141 = vmatpush1.bf16.msra.mxu0 0
    %3142 = vmatprep.subr.bf16.mxu0 0
    %3143 = vmatpush1.bf16.msra.mxu0 0
    %3144 = vmatprep.subr.bf16.mxu0 0
    %3145 = vmatpush1.bf16.msra.mxu0 0
    %3146 = vmatprep.subr.bf16.mxu0 0
    %3147 = vmatpush1.bf16.msra.mxu0 0
    %3148 = vmatprep.subr.bf16.mxu0 0
    %3149 = vmatpush1.bf16.msra.mxu0 0
    %3150 = vmatprep.subr.bf16.mxu0 0
    %3151 = vmatpush1.bf16.msra.mxu0 0
    %3152 = vmatprep.subr.bf16.mxu0 0
    %3153 = vmatpush1.bf16.msra.mxu0 0
    %3154 = vmatprep.subr.bf16.mxu0 0
    %3155 = vmatpush1.bf16.msra.mxu0 0
    %3156 = vmatprep.subr.bf16.mxu0 0
    %3157 = vmatpush1.bf16.msra.mxu0 0
    %3158 = vmatprep.subr.bf16.mxu0 0
    %3159 = vmatpush1.bf16.msra.mxu0 0
    %3160 = vmatprep.subr.bf16.mxu0 0
    %3161 = vmatpush1.bf16.msra.mxu0 0
    %3162 = vmatprep.subr.bf16.mxu0 0
    %3163 = vmatpush1.bf16.msra.mxu0 0
    %3164 = vmatprep.subr.bf16.mxu0 0
    %3165 = vmatpush1.bf16.msra.mxu0 0
    %3166 = vmatprep.subr.bf16.mxu0 0
    %3167 = vmatpush1.bf16.msra.mxu0 0
    %3168 = vmatprep.mubr.bf16.mxu0 0
    %3169 = vmatmul.mubr.bf16.gmra.mrb[0].mxu0 %v3128
    %v3170 = vpop.f32.mrb[0].mxu0
    %v3171 = vadd.f32 0.0, %v3170
    %v3172 = vpop.f32.mrb[0].mxu0
    %v3173 = vpop.f32.mrb[0].mxu0
    %v3174 = vadd.f32 0.0, %v3173
    %v3175 = vpop.f32.mrb[0].mxu0
    %3176 = vmatprep.mubr.bf16.mxu0 0
    %3177 = vmatmul.mubr.bf16.gmra.mrb[0].mxu0 %v3131
    %v3178 = vpop.f32.mrb[0].mxu0
    %v3179 = vadd.f32 0.0, %v3178
    %v3180 = vpop.f32.mrb[0].mxu0
    %v3181 = vpop.f32.mrb[0].mxu0
    %v3182 = vpop.f32.mrb[0].mxu0
    %3183 = vdwg.mxu0
    %v3184 = vlaneseq
    %v3185 = vshrl.u32 %v3184, 7
    %v3186 = vsub.s32 2, %v3185
    %v3187 = vrot.slane %v3106, %v3186
    %v3188 = vmul.f32 %v3171, %v3187
    %v3189 = vmul.f32 %v3174, %v3187
    %v3190 = vmul.f32 %v3179, %v3187
    %v3191 = vadd.f32 %v3113, %v3188
    %v3192 = vadd.f32 %v3114, %v3189
    %v3193 = vadd.f32 %v3115, %v3190
    %v3194 = vld [vmem:[%s1 + $0x130] sm:$0xf]
    %v3195 = vld [vmem:[%s1 + $0x138] sm:$0xf]
    %v3196 = vld [vmem:[%s1 + $0x140] sm:$0x1]
    %v3200 = vunpack.c.l.b16 %v3194
    %v3201 = vunpack.c.l.b16 %v3195
    %v3202 = vunpack.c.l.b16 %v3196
    %v3203 = vpack.c.b16 %v3201, %v3200
    %v3204 = vpack.c.b16 %v3202, %v3202
    %v3206 = vsel %vm321, %v3203, 0
    %v3209 = vsel %vm321, %v3204, 0
    %3211 = vmatprep.subr.bf16.mxu0 0
    %3212 = vmatpush1.bf16.msra.mxu0 %v3107
    %3213 = vmatprep.subr.bf16.mxu0 0
    %3214 = vmatpush1.bf16.msra.mxu0 %v3134
    %3215 = vmatprep.subr.bf16.mxu0 0
    %3216 = vmatpush1.bf16.msra.mxu0 0
    %3217 = vmatprep.subr.bf16.mxu0 0
    %3218 = vmatpush1.bf16.msra.mxu0 0
    %3219 = vmatprep.subr.bf16.mxu0 0
    %3220 = vmatpush1.bf16.msra.mxu0 0
    %3221 = vmatprep.subr.bf16.mxu0 0
    %3222 = vmatpush1.bf16.msra.mxu0 0
    %3223 = vmatprep.subr.bf16.mxu0 0
    %3224 = vmatpush1.bf16.msra.mxu0 0
    %3225 = vmatprep.subr.bf16.mxu0 0
    %3226 = vmatpush1.bf16.msra.mxu0 0
    %3227 = vmatprep.subr.bf16.mxu0 0
    %3228 = vmatpush1.bf16.msra.mxu0 0
    %3229 = vmatprep.subr.bf16.mxu0 0
    %3230 = vmatpush1.bf16.msra.mxu0 0
    %3231 = vmatprep.subr.bf16.mxu0 0
    %3232 = vmatpush1.bf16.msra.mxu0 0
    %3233 = vmatprep.subr.bf16.mxu0 0
    %3234 = vmatpush1.bf16.msra.mxu0 0
    %3235 = vmatprep.subr.bf16.mxu0 0
    %3236 = vmatpush1.bf16.msra.mxu0 0
    %3237 = vmatprep.subr.bf16.mxu0 0
    %3238 = vmatpush1.bf16.msra.mxu0 0
    %3239 = vmatprep.subr.bf16.mxu0 0
    %3240 = vmatpush1.bf16.msra.mxu0 0
    %3241 = vmatprep.subr.bf16.mxu0 0
    %3242 = vmatpush1.bf16.msra.mxu0 0
    %3243 = vmatprep.mubr.bf16.mxu0 0
    %3244 = vmatmul.mubr.bf16.gmra.mrb[0].mxu0 %v3206
    %v3245 = vpop.f32.mrb[0].mxu0
    %v3246 = vadd.f32 0.0, %v3245
    %v3247 = vpop.f32.mrb[0].mxu0
    %v3248 = vpop.f32.mrb[0].mxu0
    %v3249 = vadd.f32 0.0, %v3248
    %v3250 = vpop.f32.mrb[0].mxu0
    %3251 = vmatprep.mubr.bf16.mxu0 0
    %3252 = vmatmul.mubr.bf16.gmra.mrb[0].mxu0 %v3209
    %v3253 = vpop.f32.mrb[0].mxu0
    %v3254 = vadd.f32 0.0, %v3253
    %v3255 = vpop.f32.mrb[0].mxu0
    %v3256 = vpop.f32.mrb[0].mxu0
    %v3257 = vpop.f32.mrb[0].mxu0
    %3258 = vdwg.mxu0
    %v3259 = vlaneseq
    %v3260 = vshrl.u32 %v3259, 7
    %v3261 = vsub.s32 1, %v3260
    %v3262 = vrot.slane %v3106, %v3261
    %v3263 = vmul.f32 %v3246, %v3262
    %v3264 = vmul.f32 %v3249, %v3262
    %v3265 = vmul.f32 %v3254, %v3262
    %v3266 = vadd.f32 %v3191, %v3263
    %v3267 = vadd.f32 %v3192, %v3264
    %v3268 = vadd.f32 %v3193, %v3265
    %v3269 = vld [vmem:[%s1 + $0x150] sm:$0xf]
    %v3270 = vld [vmem:[%s1 + $0x158] sm:$0xf]
    %v3271 = vld [vmem:[%s1 + $0x160] sm:$0x1]
    %v3275 = vunpack.c.l.b16 %v3269
    %v3276 = vunpack.c.l.b16 %v3270
    %v3277 = vunpack.c.l.b16 %v3271
    %v3278 = vpack.c.b16 %v3276, %v3275
    %v3279 = vpack.c.b16 %v3277, %v3277
    %v3281 = vsel %vm321, %v3278, 0
    %v3284 = vsel %vm321, %v3279, 0
    %3286 = vmatprep.subr.bf16.mxu0 0
    %3287 = vmatpush1.bf16.msra.mxu0 %v3107
    %3288 = vmatprep.subr.bf16.mxu0 0
    %3289 = vmatpush1.bf16.msra.mxu0 %v3134
    %3290 = vmatprep.subr.bf16.mxu0 0
    %3291 = vmatpush1.bf16.msra.mxu0 0
    %3292 = vmatprep.subr.bf16.mxu0 0
    %3293 = vmatpush1.bf16.msra.mxu0 0
    %3294 = vmatprep.subr.bf16.mxu0 0
    %3295 = vmatpush1.bf16.msra.mxu0 0
    %3296 = vmatprep.subr.bf16.mxu0 0
    %3297 = vmatpush1.bf16.msra.mxu0 0
    %3298 = vmatprep.subr.bf16.mxu0 0
    %3299 = vmatpush1.bf16.msra.mxu0 0
    %3300 = vmatprep.subr.bf16.mxu0 0
    %3301 = vmatpush1.bf16.msra.mxu0 0
    %3302 = vmatprep.subr.bf16.mxu0 0
    %3303 = vmatpush1.bf16.msra.mxu0 0
    %3304 = vmatprep.subr.bf16.mxu0 0
    %3305 = vmatpush1.bf16.msra.mxu0 0
    %3306 = vmatprep.subr.bf16.mxu0 0
    %3307 = vmatpush1.bf16.msra.mxu0 0
    %3308 = vmatprep.subr.bf16.mxu0 0
    %3309 = vmatpush1.bf16.msra.mxu0 0
    %3310 = vmatprep.subr.bf16.mxu0 0
    %3311 = vmatpush1.bf16.msra.mxu0 0
    %3312 = vmatprep.subr.bf16.mxu0 0
    %3313 = vmatpush1.bf16.msra.mxu0 0
    %3314 = vmatprep.subr.bf16.mxu0 0
    %3315 = vmatpush1.bf16.msra.mxu0 0
    %3316 = vmatprep.subr.bf16.mxu0 0
    %3317 = vmatpush1.bf16.msra.mxu0 0
    %3318 = vmatprep.mubr.bf16.mxu0 0
    %3319 = vmatmul.mubr.bf16.gmra.mrb[0].mxu0 %v3281
    %v3320 = vpop.f32.mrb[0].mxu0
    %v3321 = vadd.f32 0.0, %v3320
    %v3322 = vpop.f32.mrb[0].mxu0
    %v3323 = vpop.f32.mrb[0].mxu0
    %v3324 = vadd.f32 0.0, %v3323
    %v3325 = vpop.f32.mrb[0].mxu0
    %3326 = vmatprep.mubr.bf16.mxu0 0
    %3327 = vmatmul.mubr.bf16.gmra.mrb[0].mxu0 %v3284
    %v3328 = vpop.f32.mrb[0].mxu0
    %v3329 = vadd.f32 0.0, %v3328
    %v3330 = vpop.f32.mrb[0].mxu0
    %v3331 = vpop.f32.mrb[0].mxu0
    %v3332 = vpop.f32.mrb[0].mxu0
    %3333 = vdwg.mxu0
    %v3334 = vlaneseq
    %v3335 = vshrl.u32 %v3334, 7
    %v3336 = vsub.s32 0, %v3335
    %v3337 = vrot.slane %v3106, %v3336
    %v3338 = vmul.f32 %v3321, %v3337
    %v3339 = vmul.f32 %v3324, %v3337
    %v3340 = vmul.f32 %v3329, %v3337
    %v3341 = vadd.f32 %v3266, %v3338
    %v3342 = vadd.f32 %v3267, %v3339
    %v3343 = vadd.f32 %v3268, %v3340
    %v3344 = vld [vmem:[%s2 + $0x1f8] sm:$0x1]
    %v3345 = vlaneseq
    %v3346 = vshrl.u32 %v3345, 7
    %v3347 = vsub.s32 0, %v3346
    %v3348 = vrot.slane %v3344, %v3347
    %v3349 = vadd.f32 %v3341, %v3348
    %v3350 = vadd.f32 %v3342, %v3348
    %v3351 = vadd.f32 %v3343, %v3348
    %v3352 = vsub.f32 0.0, %v3349
    %v3353 = vsub.f32 0.0, %v3350
    %v3354 = vsub.f32 0.0, %v3351
    %v3355 = vmul.f32 %v3352, 1.442695
    %v3356 = vpow.pop %v3355
    %v3357 = vmul.f32 %v3353, 1.442695
    %v3358 = vpow.pop %v3357
    %v3359 = vmul.f32 %v3354, 1.442695
    %v3360 = vpow.pop %v3359
    %v3361 = vadd.f32 %v3356, 1.0
    %v3362 = vadd.f32 %v3358, 1.0
    %v3363 = vadd.f32 %v3360, 1.0
    %v3364 = vrcp.pop %v3361
    %v3365 = vmul.f32 1.0, %v3364
    %v3366 = vrcp.pop %v3362
    %v3367 = vmul.f32 1.0, %v3366
    %v3368 = vrcp.pop %v3363
    %v3369 = vmul.f32 1.0, %v3368
    %v3370 = vmul.f32 %v3349, %v3365
    %v3371 = vmul.f32 %v3350, %v3367
    %v3372 = vmul.f32 %v3351, %v3369
    %v3373 = vld [vmem:[%s1 + $0x2a0] sm:$0xf]
    %v3374 = vld [vmem:[%s1 + $0x2a8] sm:$0xf]
    %v3375 = vld [vmem:[%s1 + $0x2b0] sm:$0xf]
    %v3376 = vld [vmem:[%s1 + $0x2b8] sm:$0xf]
    %v3377 = vld [vmem:[%s1 + $0x2c0] sm:$0xf]
    %v3378 = vld [vmem:[%s1 + $0x2c8] sm:$0xf]
    %v3379 = vld [vmem:[%s1 + $0x2d0] sm:$0xf]
    %v3380 = vld [vmem:[%s1 + $0x2d8] sm:$0xf]
    %v3381 = vpack.c.bf16 %v3371, %v3370
    %v3382 = vpack.c.bf16 %v3372, %v3372
    %v3391 = vunpack.c.l.b16 %v3373
    %v3392 = vunpack.c.l.b16 %v3374
    %v3393 = vunpack.c.l.b16 %v3375
    %v3394 = vunpack.c.l.b16 %v3376
    %v3395 = vunpack.c.l.b16 %v3377
    %v3396 = vunpack.c.l.b16 %v3378
    %v3397 = vunpack.c.l.b16 %v3379
    %v3398 = vunpack.c.l.b16 %v3380
    %v3399 = vpack.c.b16 %v3392, %v3391
    %v3400 = vpack.c.b16 %v3394, %v3393
    %v3401 = vpack.c.b16 %v3396, %v3395
    %v3402 = vpack.c.b16 %v3398, %v3397
    %v3408 = vsel %vm603, %v3381, 0
    %v3411 = vsel %vm603, %v3382, 0
    %3413 = vmatprep.subr.bf16.mxu0 0
    %3414 = vmatpush1.bf16.msra.mxu0 %v3399
    %3415 = vmatprep.subr.bf16.mxu0 0
    %3416 = vmatpush1.bf16.msra.mxu0 %v3400
    %3417 = vmatprep.subr.bf16.mxu0 0
    %3418 = vmatpush1.bf16.msra.mxu0 %v3401
    %3419 = vmatprep.subr.bf16.mxu0 0
    %3420 = vmatpush1.bf16.msra.mxu0 %v3402
    %3421 = vmatprep.subr.bf16.mxu0 0
    %3422 = vmatpush1.bf16.msra.mxu0 0
    %3423 = vmatprep.subr.bf16.mxu0 0
    %3424 = vmatpush1.bf16.msra.mxu0 0
    %3425 = vmatprep.subr.bf16.mxu0 0
    %3426 = vmatpush1.bf16.msra.mxu0 0
    %3427 = vmatprep.subr.bf16.mxu0 0
    %3428 = vmatpush1.bf16.msra.mxu0 0
    %3429 = vmatprep.subr.bf16.mxu0 0
    %3430 = vmatpush1.bf16.msra.mxu0 0
    %3431 = vmatprep.subr.bf16.mxu0 0
    %3432 = vmatpush1.bf16.msra.mxu0 0
    %3433 = vmatprep.subr.bf16.mxu0 0
    %3434 = vmatpush1.bf16.msra.mxu0 0
    %3435 = vmatprep.subr.bf16.mxu0 0
    %3436 = vmatpush1.bf16.msra.mxu0 0
    %3437 = vmatprep.subr.bf16.mxu0 0
    %3438 = vmatpush1.bf16.msra.mxu0 0
    %3439 = vmatprep.subr.bf16.mxu0 0
    %3440 = vmatpush1.bf16.msra.mxu0 0
    %3441 = vmatprep.subr.bf16.mxu0 0
    %3442 = vmatpush1.bf16.msra.mxu0 0
    %3443 = vmatprep.subr.bf16.mxu0 0
    %3444 = vmatpush1.bf16.msra.mxu0 0
    %3445 = vmatprep.mubr.bf16.mxu0 0
    %3446 = vmatmul.mubr.bf16.gmra.mrb[0].mxu0 %v3408
    %v3447 = vpop.f32.mrb[0].mxu0
    %v3448 = vadd.f32 0.0, %v3447
    %v3449 = vpop.f32.mrb[0].mxu0
    %v3450 = vpop.f32.mrb[0].mxu0
    %v3451 = vadd.f32 0.0, %v3450
    %v3452 = vpop.f32.mrb[0].mxu0
    %3453 = vmatprep.mubr.bf16.mxu0 0
    %3454 = vmatmul.mubr.bf16.gmra.mrb[0].mxu0 %v3411
    %v3455 = vpop.f32.mrb[0].mxu0
    %v3456 = vadd.f32 0.0, %v3455
    %v3457 = vpop.f32.mrb[0].mxu0
    %v3458 = vpop.f32.mrb[0].mxu0
    %v3459 = vpop.f32.mrb[0].mxu0
    %3460 = vdwg.mxu0
    %v3461 = vld [vmem:[%s1 + $0x2e0] sm:$0x1]
    %v3462 = vpack.c.bf16 %v3451, %v3448
    %v3463 = vpack.c.bf16 %v3456, %v3456
    %v3464 = vld [vmem:[%s2 + $0x200] sm:$0x1]
    %v3465 = vlaneseq
    %v3466 = vshrl.u32 %v3465, 7
    %v3467 = vsub.s32 0, %v3466
    %v3468 = vrot.slane %v3464, %v3467
    %v3470 = vsel %vm666, %v3462, 0
    %v3473 = vsel %vm666, %v3463, 0
    %v3476 = vsel %vm328, %v3461, 0
    %3478 = vmatprep.subr.bf16.mxu0 0
    %3479 = vmatpush1.bf16.msra.mxu0 %v3476
    %3480 = vmatprep.subr.bf16.mxu0 0
    %3481 = vmatpush1.bf16.msra.mxu0 0
    %3482 = vmatprep.subr.bf16.mxu0 0
    %3483 = vmatpush1.bf16.msra.mxu0 0
    %3484 = vmatprep.subr.bf16.mxu0 0
    %3485 = vmatpush1.bf16.msra.mxu0 0
    %3486 = vmatprep.subr.bf16.mxu0 0
    %3487 = vmatpush1.bf16.msra.mxu0 0
    %3488 = vmatprep.subr.bf16.mxu0 0
    %3489 = vmatpush1.bf16.msra.mxu0 0
    %3490 = vmatprep.subr.bf16.mxu0 0
    %3491 = vmatpush1.bf16.msra.mxu0 0
    %3492 = vmatprep.subr.bf16.mxu0 0
    %3493 = vmatpush1.bf16.msra.mxu0 0
    %3494 = vmatprep.subr.bf16.mxu0 0
    %3495 = vmatpush1.bf16.msra.mxu0 0
    %3496 = vmatprep.subr.bf16.mxu0 0
    %3497 = vmatpush1.bf16.msra.mxu0 0
    %3498 = vmatprep.subr.bf16.mxu0 0
    %3499 = vmatpush1.bf16.msra.mxu0 0
    %3500 = vmatprep.subr.bf16.mxu0 0
    %3501 = vmatpush1.bf16.msra.mxu0 0
    %3502 = vmatprep.subr.bf16.mxu0 0
    %3503 = vmatpush1.bf16.msra.mxu0 0
    %3504 = vmatprep.subr.bf16.mxu0 0
    %3505 = vmatpush1.bf16.msra.mxu0 0
    %3506 = vmatprep.subr.bf16.mxu0 0
    %3507 = vmatpush1.bf16.msra.mxu0 0
    %3508 = vmatprep.subr.bf16.mxu0 0
    %3509 = vmatpush1.bf16.msra.mxu0 0
    %3510 = vmatprep.mubr.bf16.mxu0 0
    %3511 = vmatmul.mubr.bf16.gmra.mrb[0].mxu0 %v3470
    %v3512 = vpop.f32.mrb[0].mxu0
    %v3513 = vadd.f32 %v3468, %v3512
    %v3514 = vpop.f32.mrb[0].mxu0
    %v3515 = vpop.f32.mrb[0].mxu0
    %v3516 = vadd.f32 %v3468, %v3515
    %v3517 = vpop.f32.mrb[0].mxu0
    %3518 = vmatprep.mubr.bf16.mxu0 0
    %3519 = vmatmul.mubr.bf16.gmra.mrb[0].mxu0 %v3473
    %v3520 = vpop.f32.mrb[0].mxu0
    %v3521 = vadd.f32 %v3468, %v3520
    %v3522 = vpop.f32.mrb[0].mxu0
    %v3523 = vpop.f32.mrb[0].mxu0
    %v3524 = vpop.f32.mrb[0].mxu0
    %3525 = vdwg.mxu0
    %v3526 = vmax.f32 %v3513, 0.0
    %v3527 = vmax.f32 %v3516, 0.0
    %v3528 = vmax.f32 %v3521, 0.0
    %v3529 = vand.u32 2147483647, %v3513
    %v3530 = vand.u32 2147483647, %v3516
    %v3531 = vand.u32 2147483647, %v3521
    %v3532 = vsub.f32 0.0, %v3529
    %v3533 = vsub.f32 0.0, %v3530
    %v3534 = vsub.f32 0.0, %v3531
    %v3535 = vmul.f32 %v3532, 1.442695
    %v3536 = vpow.pop %v3535
    %v3537 = vmul.f32 %v3533, 1.442695
    %v3538 = vpow.pop %v3537
    %v3539 = vmul.f32 %v3534, 1.442695
    %v3540 = vpow.pop %v3539
    %v3541 = vadd.f32 %v3536, 1.0
    %v3542 = vadd.f32 %v3538, 1.0
    %v3543 = vadd.f32 %v3540, 1.0
    %v3544 = vlog2.pop %v3541
    %v3545 = vmul.f32 %v3544, 0.6931472
    %v3546 = vlog2.pop %v3542
    %v3547 = vmul.f32 %v3546, 0.6931472
    %v3548 = vlog2.pop %v3543
    %v3549 = vmul.f32 %v3548, 0.6931472
    %v3550 = vadd.f32 %v3526, %v3545
    %v3551 = vadd.f32 %v3527, %v3547
    %v3552 = vadd.f32 %v3528, %v3549
    %v3553 = vld [vmem:[%s1 + $0x30] sm:$0xf]
    %v3554 = vld [vmem:[%s1 + $0x38] sm:$0xf]
    %v3555 = vld [vmem:[%s1 + $0x40] sm:$0xf]
    %v3556 = vld [vmem:[%s1 + $0x48] sm:$0xf]
    %v3557 = vld [vmem:[%s1 + $0x50] sm:$0xf]
    %v3558 = vld [vmem:[%s1 + $0x58] sm:$0xf]
    %v3559 = vld [vmem:[%s1 + $0x60] sm:$0xf]
    %v3560 = vld [vmem:[%s1 + $0x68] sm:$0xf]
    %v3561 = vld [vmem:[%s1 + $0x70] sm:$0xf]
    %v3562 = vld [vmem:[%s1 + $0x78] sm:$0xf]
    %v3563 = vld [vmem:[%s1 + $0x80] sm:$0xf]
    %v3564 = vld [vmem:[%s1 + $0x88] sm:$0xf]
    %v3565 = vld [vmem:[%s1 + $0x90] sm:$0xf]
    %v3566 = vld [vmem:[%s1 + $0x98] sm:$0xf]
    %v3567 = vld [vmem:[%s1 + $0xa0] sm:$0xf]
    %v3568 = vld [vmem:[%s1 + $0xa8] sm:$0xf]
    %v3569 = vld [vmem:[%s1 + $0xb0] sm:$0xf]
    %v3570 = vld [vmem:[%s1 + $0xb8] sm:$0xf]
    %v3571 = vld [vmem:[%s2 + $0x78] sm:$0xff]
    %v3572 = vld [vmem:[%s2 + $0x80] sm:$0xff]
    %v3573 = vld [vmem:[%s2 + $0x88] sm:$0xff]
    %v3574 = vld [vmem:[%s2 + $0x90] sm:$0xff]
    %v3575 = vld [vmem:[%s2 + $0x98] sm:$0xff]
    %v3576 = vld [vmem:[%s2 + $0xa0] sm:$0xff]
    %v3577 = vld [vmem:[%s2 + $0xa8] sm:$0xff]
    %v3578 = vld [vmem:[%s2 + $0xb0] sm:$0xff]
    %v3579 = vld [vmem:[%s2 + $0xb8] sm:$0xff]
    %v3580 = vld [vmem:[%s2 + $0xc0] sm:$0xff]
    %v3581 = vld [vmem:[%s2 + $0xc8] sm:$0xff]
    %v3582 = vld [vmem:[%s2 + $0xd0] sm:$0xff]
    %v3583 = vld [vmem:[%s2 + $0xd8] sm:$0xff]
    %v3584 = vld [vmem:[%s2 + $0xe0] sm:$0xff]
    %v3585 = vld [vmem:[%s2 + $0xe8] sm:$0xff]
    %v3586 = vld [vmem:[%s2 + $0xf0] sm:$0xff]
    %v3587 = vld [vmem:[%s2 + $0xf8] sm:$0xff]
    %v3588 = vld [vmem:[%s2 + $0x100] sm:$0xff]
    %v3589 = vpack.c.bf16 %v3551, %v3550
    %v3590 = vpack.c.bf16 %v3552, %v3552
    %v3609 = vunpack.c.l.b16 %v3553
    %v3610 = vunpack.c.l.b16 %v3554
    %v3611 = vunpack.c.l.b16 %v3555
    %v3612 = vunpack.c.l.b16 %v3556
    %v3613 = vunpack.c.l.b16 %v3557
    %v3614 = vunpack.c.l.b16 %v3558
    %v3615 = vunpack.c.l.b16 %v3559
    %v3616 = vunpack.c.l.b16 %v3560
    %v3617 = vunpack.c.l.b16 %v3561
    %v3618 = vunpack.c.l.b16 %v3562
    %v3619 = vunpack.c.l.b16 %v3563
    %v3620 = vunpack.c.l.b16 %v3564
    %v3621 = vunpack.c.l.b16 %v3565
    %v3622 = vunpack.c.l.b16 %v3566
    %v3623 = vunpack.c.l.b16 %v3567
    %v3624 = vunpack.c.l.b16 %v3568
    %v3625 = vunpack.c.l.b16 %v3569
    %v3626 = vunpack.c.l.b16 %v3570
    %v3627 = vpack.c.b16 %v3610, %v3609
    %v3628 = vpack.c.b16 %v3612, %v3611
    %v3629 = vpack.c.b16 %v3614, %v3613
    %v3630 = vpack.c.b16 %v3616, %v3615
    %v3631 = vpack.c.b16 %v3618, %v3617
    %v3632 = vpack.c.b16 %v3620, %v3619
    %v3633 = vpack.c.b16 %v3622, %v3621
    %v3634 = vpack.c.b16 %v3624, %v3623
    %v3635 = vpack.c.b16 %v3626, %v3625
    %v3637 = vsel %vm321, %v3627, 0
    %v3640 = vsel %vm321, %v3628, 0
    %v3643 = vsel %vm321, %v3629, 0
    %v3646 = vsel %vm321, %v3630, 0
    %v3649 = vsel %vm321, %v3631, 0
    %v3652 = vsel %vm321, %v3632, 0
    %v3655 = vsel %vm321, %v3633, 0
    %v3658 = vsel %vm321, %v3634, 0
    %v3661 = vsel %vm321, %v3635, 0
    %v3664 = vsel %vm328, %v3590, 0
    %3666 = vmatprep.subr.bf16.mxu0 0
    %3667 = vmatpush1.bf16.msra.mxu0 %v3589
    %3668 = vmatprep.subr.bf16.mxu0 0
    %3669 = vmatpush1.bf16.msra.mxu0 %v3664
    %3670 = vmatprep.subr.bf16.mxu0 0
    %3671 = vmatpush1.bf16.msra.mxu0 0
    %3672 = vmatprep.subr.bf16.mxu0 0
    %3673 = vmatpush1.bf16.msra.mxu0 0
    %3674 = vmatprep.subr.bf16.mxu0 0
    %3675 = vmatpush1.bf16.msra.mxu0 0
    %3676 = vmatprep.subr.bf16.mxu0 0
    %3677 = vmatpush1.bf16.msra.mxu0 0
    %3678 = vmatprep.subr.bf16.mxu0 0
    %3679 = vmatpush1.bf16.msra.mxu0 0
    %3680 = vmatprep.subr.bf16.mxu0 0
    %3681 = vmatpush1.bf16.msra.mxu0 0
    %3682 = vmatprep.subr.bf16.mxu0 0
    %3683 = vmatpush1.bf16.msra.mxu0 0
    %3684 = vmatprep.subr.bf16.mxu0 0
    %3685 = vmatpush1.bf16.msra.mxu0 0
    %3686 = vmatprep.subr.bf16.mxu0 0
    %3687 = vmatpush1.bf16.msra.mxu0 0
    %3688 = vmatprep.subr.bf16.mxu0 0
    %3689 = vmatpush1.bf16.msra.mxu0 0
    %3690 = vmatprep.subr.bf16.mxu0 0
    %3691 = vmatpush1.bf16.msra.mxu0 0
    %3692 = vmatprep.subr.bf16.mxu0 0
    %3693 = vmatpush1.bf16.msra.mxu0 0
    %3694 = vmatprep.subr.bf16.mxu0 0
    %3695 = vmatpush1.bf16.msra.mxu0 0
    %3696 = vmatprep.subr.bf16.mxu0 0
    %3697 = vmatpush1.bf16.msra.mxu0 0
    %3698 = vmatprep.mubr.bf16.mxu0 0
    %3699 = vmatmul.mubr.bf16.gmra.mrb[0].mxu0 %v3637
    %v3700 = vpop.f32.mrb[0].mxu0
    %v3701 = vadd.f32 0.0, %v3700
    %v3702 = vpop.f32.mrb[0].mxu0
    %v3703 = vpop.f32.mrb[0].mxu0
    %v3704 = vadd.f32 0.0, %v3703
    %v3705 = vpop.f32.mrb[0].mxu0
    %3706 = vmatprep.mubr.bf16.mxu0 0
    %3707 = vmatmul.mubr.bf16.gmra.mrb[0].mxu0 %v3640
    %v3708 = vpop.f32.mrb[0].mxu0
    %v3709 = vadd.f32 0.0, %v3708
    %v3710 = vpop.f32.mrb[0].mxu0
    %v3711 = vpop.f32.mrb[0].mxu0
    %v3712 = vadd.f32 0.0, %v3711
    %v3713 = vpop.f32.mrb[0].mxu0
    %3714 = vmatprep.mubr.bf16.mxu0 0
    %3715 = vmatmul.mubr.bf16.gmra.mrb[0].mxu0 %v3643
    %v3716 = vpop.f32.mrb[0].mxu0
    %v3717 = vadd.f32 0.0, %v3716
    %v3718 = vpop.f32.mrb[0].mxu0
    %v3719 = vpop.f32.mrb[0].mxu0
    %v3720 = vadd.f32 0.0, %v3719
    %v3721 = vpop.f32.mrb[0].mxu0
    %3722 = vmatprep.mubr.bf16.mxu0 0
    %3723 = vmatmul.mubr.bf16.gmra.mrb[0].mxu0 %v3646
    %v3724 = vpop.f32.mrb[0].mxu0
    %v3725 = vadd.f32 0.0, %v3724
    %v3726 = vpop.f32.mrb[0].mxu0
    %v3727 = vpop.f32.mrb[0].mxu0
    %v3728 = vadd.f32 0.0, %v3727
    %v3729 = vpop.f32.mrb[0].mxu0
    %3730 = vmatprep.mubr.bf16.mxu0 0
    %3731 = vmatmul.mubr.bf16.gmra.mrb[0].mxu0 %v3649
    %v3732 = vpop.f32.mrb[0].mxu0
    %v3733 = vadd.f32 0.0, %v3732
    %v3734 = vpop.f32.mrb[0].mxu0
    %v3735 = vpop.f32.mrb[0].mxu0
    %v3736 = vadd.f32 0.0, %v3735
    %v3737 = vpop.f32.mrb[0].mxu0
    %3738 = vmatprep.mubr.bf16.mxu0 0
    %3739 = vmatmul.mubr.bf16.gmra.mrb[0].mxu0 %v3652
    %v3740 = vpop.f32.mrb[0].mxu0
    %v3741 = vadd.f32 0.0, %v3740
    %v3742 = vpop.f32.mrb[0].mxu0
    %v3743 = vpop.f32.mrb[0].mxu0
    %v3744 = vadd.f32 0.0, %v3743
    %v3745 = vpop.f32.mrb[0].mxu0
    %3746 = vmatprep.mubr.bf16.mxu0 0
    %3747 = vmatmul.mubr.bf16.gmra.mrb[0].mxu0 %v3655
    %v3748 = vpop.f32.mrb[0].mxu0
    %v3749 = vadd.f32 0.0, %v3748
    %v3750 = vpop.f32.mrb[0].mxu0
    %v3751 = vpop.f32.mrb[0].mxu0
    %v3752 = vadd.f32 0.0, %v3751
    %v3753 = vpop.f32.mrb[0].mxu0
    %3754 = vmatprep.mubr.bf16.mxu0 0
    %3755 = vmatmul.mubr.bf16.gmra.mrb[0].mxu0 %v3658
    %v3756 = vpop.f32.mrb[0].mxu0
    %v3757 = vadd.f32 0.0, %v3756
    %v3758 = vpop.f32.mrb[0].mxu0
    %v3759 = vpop.f32.mrb[0].mxu0
    %v3760 = vadd.f32 0.0, %v3759
    %v3761 = vpop.f32.mrb[0].mxu0
    %3762 = vmatprep.mubr.bf16.mxu0 0
    %3763 = vmatmul.mubr.bf16.gmra.mrb[0].mxu0 %v3661
    %v3764 = vpop.f32.mrb[0].mxu0
    %v3765 = vadd.f32 0.0, %v3764
    %v3766 = vpop.f32.mrb[0].mxu0
    %v3767 = vpop.f32.mrb[0].mxu0
    %v3768 = vadd.f32 0.0, %v3767
    %v3769 = vpop.f32.mrb[0].mxu0
    %3770 = vdwg.mxu0
    %v3771 = vmul.f32 %v3550, %v3370
    %v3772 = vmul.f32 %v3551, %v3371
    %v3773 = vmul.f32 %v3552, %v3372
    %v3774 = vpack.c.bf16 %v3772, %v3771
    %v3775 = vpack.c.bf16 %v3773, %v3773
    %v3777 = vsel %vm328, %v3775, 0
    %3779 = vmatprep.subr.bf16.mxu0 0
    %3780 = vmatpush1.bf16.msra.mxu0 %v3774
    %3781 = vmatprep.subr.bf16.mxu0 0
    %3782 = vmatpush1.bf16.msra.mxu0 %v3777
    %3783 = vmatprep.subr.bf16.mxu0 0
    %3784 = vmatpush1.bf16.msra.mxu0 0
    %3785 = vmatprep.subr.bf16.mxu0 0
    %3786 = vmatpush1.bf16.msra.mxu0 0
    %3787 = vmatprep.subr.bf16.mxu0 0
    %3788 = vmatpush1.bf16.msra.mxu0 0
    %3789 = vmatprep.subr.bf16.mxu0 0
    %3790 = vmatpush1.bf16.msra.mxu0 0
    %3791 = vmatprep.subr.bf16.mxu0 0
    %3792 = vmatpush1.bf16.msra.mxu0 0
    %3793 = vmatprep.subr.bf16.mxu0 0
    %3794 = vmatpush1.bf16.msra.mxu0 0
    %3795 = vmatprep.subr.bf16.mxu0 0
    %3796 = vmatpush1.bf16.msra.mxu0 0
    %3797 = vmatprep.subr.bf16.mxu0 0
    %3798 = vmatpush1.bf16.msra.mxu0 0
    %3799 = vmatprep.subr.bf16.mxu0 0
    %3800 = vmatpush1.bf16.msra.mxu0 0
    %3801 = vmatprep.subr.bf16.mxu0 0
    %3802 = vmatpush1.bf16.msra.mxu0 0
    %3803 = vmatprep.subr.bf16.mxu0 0
    %3804 = vmatpush1.bf16.msra.mxu0 0
    %3805 = vmatprep.subr.bf16.mxu0 0
    %3806 = vmatpush1.bf16.msra.mxu0 0
    %3807 = vmatprep.subr.bf16.mxu0 0
    %3808 = vmatpush1.bf16.msra.mxu0 0
    %3809 = vmatprep.subr.bf16.mxu0 0
    %3810 = vmatpush1.bf16.msra.mxu0 0
    %3811 = vmatprep.mubr.bf16.mxu0 0
    %3812 = vmatmul.mubr.bf16.gmra.mrb[0].mxu0 %v3637
    %v3813 = vpop.f32.mrb[0].mxu0
    %v3814 = vadd.f32 0.0, %v3813
    %v3815 = vpop.f32.mrb[0].mxu0
    %v3816 = vpop.f32.mrb[0].mxu0
    %v3817 = vadd.f32 0.0, %v3816
    %v3818 = vpop.f32.mrb[0].mxu0
    %3819 = vmatprep.mubr.bf16.mxu0 0
    %3820 = vmatmul.mubr.bf16.gmra.mrb[0].mxu0 %v3640
    %v3821 = vpop.f32.mrb[0].mxu0
    %v3822 = vadd.f32 0.0, %v3821
    %v3823 = vpop.f32.mrb[0].mxu0
    %v3824 = vpop.f32.mrb[0].mxu0
    %v3825 = vadd.f32 0.0, %v3824
    %v3826 = vpop.f32.mrb[0].mxu0
    %3827 = vmatprep.mubr.bf16.mxu0 0
    %3828 = vmatmul.mubr.bf16.gmra.mrb[0].mxu0 %v3643
    %v3829 = vpop.f32.mrb[0].mxu0
    %v3830 = vadd.f32 0.0, %v3829
    %v3831 = vpop.f32.mrb[0].mxu0
    %v3832 = vpop.f32.mrb[0].mxu0
    %v3833 = vadd.f32 0.0, %v3832
    %v3834 = vpop.f32.mrb[0].mxu0
    %3835 = vmatprep.mubr.bf16.mxu0 0
    %3836 = vmatmul.mubr.bf16.gmra.mrb[0].mxu0 %v3646
    %v3837 = vpop.f32.mrb[0].mxu0
    %v3838 = vadd.f32 0.0, %v3837
    %v3839 = vpop.f32.mrb[0].mxu0
    %v3840 = vpop.f32.mrb[0].mxu0
    %v3841 = vadd.f32 0.0, %v3840
    %v3842 = vpop.f32.mrb[0].mxu0
    %3843 = vmatprep.mubr.bf16.mxu0 0
    %3844 = vmatmul.mubr.bf16.gmra.mrb[0].mxu0 %v3649
    %v3845 = vpop.f32.mrb[0].mxu0
    %v3846 = vadd.f32 0.0, %v3845
    %v3847 = vpop.f32.mrb[0].mxu0
    %v3848 = vpop.f32.mrb[0].mxu0
    %v3849 = vadd.f32 0.0, %v3848
    %v3850 = vpop.f32.mrb[0].mxu0
    %3851 = vmatprep.mubr.bf16.mxu0 0
    %3852 = vmatmul.mubr.bf16.gmra.mrb[0].mxu0 %v3652
    %v3853 = vpop.f32.mrb[0].mxu0
    %v3854 = vadd.f32 0.0, %v3853
    %v3855 = vpop.f32.mrb[0].mxu0
    %v3856 = vpop.f32.mrb[0].mxu0
    %v3857 = vadd.f32 0.0, %v3856
    %v3858 = vpop.f32.mrb[0].mxu0
    %3859 = vmatprep.mubr.bf16.mxu0 0
    %3860 = vmatmul.mubr.bf16.gmra.mrb[0].mxu0 %v3655
    %v3861 = vpop.f32.mrb[0].mxu0
    %v3862 = vadd.f32 0.0, %v3861
    %v3863 = vpop.f32.mrb[0].mxu0
    %v3864 = vpop.f32.mrb[0].mxu0
    %v3865 = vadd.f32 0.0, %v3864
    %v3866 = vpop.f32.mrb[0].mxu0
    %3867 = vmatprep.mubr.bf16.mxu0 0
    %3868 = vmatmul.mubr.bf16.gmra.mrb[0].mxu0 %v3658
    %v3869 = vpop.f32.mrb[0].mxu0
    %v3870 = vadd.f32 0.0, %v3869
    %v3871 = vpop.f32.mrb[0].mxu0
    %v3872 = vpop.f32.mrb[0].mxu0
    %v3873 = vadd.f32 0.0, %v3872
    %v3874 = vpop.f32.mrb[0].mxu0
    %3875 = vmatprep.mubr.bf16.mxu0 0
    %3876 = vmatmul.mubr.bf16.gmra.mrb[0].mxu0 %v3661
    %v3877 = vpop.f32.mrb[0].mxu0
    %v3878 = vadd.f32 0.0, %v3877
    %v3879 = vpop.f32.mrb[0].mxu0
    %v3880 = vpop.f32.mrb[0].mxu0
    %v3881 = vadd.f32 0.0, %v3880
    %v3882 = vpop.f32.mrb[0].mxu0
    %3883 = vdwg.mxu0
    %3886 = vrot.lane.b32.xlu0 %v3462, 126
    %v3887 = vpop.permute.xlu0 %3886
    %3888 = vrot.lane.b32.xlu0 %v3463, 126
    %v3889 = vpop.permute.xlu0 %3888
    %v3892 = vsel %vm328, %v3889, 0
    %3894 = vmatprep.subr.bf16.mxu0 0
    %3895 = vmatpush1.bf16.msra.mxu0 %v3887
    %3896 = vmatprep.subr.bf16.mxu0 0
    %3897 = vmatpush1.bf16.msra.mxu0 %v3892
    %3898 = vmatprep.subr.bf16.mxu0 0
    %3899 = vmatpush1.bf16.msra.mxu0 0
    %3900 = vmatprep.subr.bf16.mxu0 0
    %3901 = vmatpush1.bf16.msra.mxu0 0
    %3902 = vmatprep.subr.bf16.mxu0 0
    %3903 = vmatpush1.bf16.msra.mxu0 0
    %3904 = vmatprep.subr.bf16.mxu0 0
    %3905 = vmatpush1.bf16.msra.mxu0 0
    %3906 = vmatprep.subr.bf16.mxu0 0
    %3907 = vmatpush1.bf16.msra.mxu0 0
    %3908 = vmatprep.subr.bf16.mxu0 0
    %3909 = vmatpush1.bf16.msra.mxu0 0
    %3910 = vmatprep.subr.bf16.mxu0 0
    %3911 = vmatpush1.bf16.msra.mxu0 0
    %3912 = vmatprep.subr.bf16.mxu0 0
    %3913 = vmatpush1.bf16.msra.mxu0 0
    %3914 = vmatprep.subr.bf16.mxu0 0
    %3915 = vmatpush1.bf16.msra.mxu0 0
    %3916 = vmatprep.subr.bf16.mxu0 0
    %3917 = vmatpush1.bf16.msra.mxu0 0
    %3918 = vmatprep.subr.bf16.mxu0 0
    %3919 = vmatpush1.bf16.msra.mxu0 0
    %3920 = vmatprep.subr.bf16.mxu0 0
    %3921 = vmatpush1.bf16.msra.mxu0 0
    %3922 = vmatprep.subr.bf16.mxu0 0
    %3923 = vmatpush1.bf16.msra.mxu0 0
    %3924 = vmatprep.subr.bf16.mxu0 0
    %3925 = vmatpush1.bf16.msra.mxu0 0
    %3926 = vmatprep.mubr.bf16.mxu0 0
    %3927 = vmatmul.mubr.bf16.gmra.mrb[0].mxu0 %v3637
    %v3928 = vpop.f32.mrb[0].mxu0
    %v3929 = vadd.f32 0.0, %v3928
    %v3930 = vpop.f32.mrb[0].mxu0
    %v3931 = vpop.f32.mrb[0].mxu0
    %v3932 = vadd.f32 0.0, %v3931
    %v3933 = vpop.f32.mrb[0].mxu0
    %3934 = vmatprep.mubr.bf16.mxu0 0
    %3935 = vmatmul.mubr.bf16.gmra.mrb[0].mxu0 %v3640
    %v3936 = vpop.f32.mrb[0].mxu0
    %v3937 = vadd.f32 0.0, %v3936
    %v3938 = vpop.f32.mrb[0].mxu0
    %v3939 = vpop.f32.mrb[0].mxu0
    %v3940 = vadd.f32 0.0, %v3939
    %v3941 = vpop.f32.mrb[0].mxu0
    %3942 = vmatprep.mubr.bf16.mxu0 0
    %3943 = vmatmul.mubr.bf16.gmra.mrb[0].mxu0 %v3643
    %v3944 = vpop.f32.mrb[0].mxu0
    %v3945 = vadd.f32 0.0, %v3944
    %v3946 = vpop.f32.mrb[0].mxu0
    %v3947 = vpop.f32.mrb[0].mxu0
    %v3948 = vadd.f32 0.0, %v3947
    %v3949 = vpop.f32.mrb[0].mxu0
    %3950 = vmatprep.mubr.bf16.mxu0 0
    %3951 = vmatmul.mubr.bf16.gmra.mrb[0].mxu0 %v3646
    %v3952 = vpop.f32.mrb[0].mxu0
    %v3953 = vadd.f32 0.0, %v3952
    %v3954 = vpop.f32.mrb[0].mxu0
    %v3955 = vpop.f32.mrb[0].mxu0
    %v3956 = vadd.f32 0.0, %v3955
    %v3957 = vpop.f32.mrb[0].mxu0
    %3958 = vmatprep.mubr.bf16.mxu0 0
    %3959 = vmatmul.mubr.bf16.gmra.mrb[0].mxu0 %v3649
    %v3960 = vpop.f32.mrb[0].mxu0
    %v3961 = vadd.f32 0.0, %v3960
    %v3962 = vpop.f32.mrb[0].mxu0
    %v3963 = vpop.f32.mrb[0].mxu0
    %v3964 = vadd.f32 0.0, %v3963
    %v3965 = vpop.f32.mrb[0].mxu0
    %3966 = vmatprep.mubr.bf16.mxu0 0
    %3967 = vmatmul.mubr.bf16.gmra.mrb[0].mxu0 %v3652
    %v3968 = vpop.f32.mrb[0].mxu0
    %v3969 = vadd.f32 0.0, %v3968
    %v3970 = vpop.f32.mrb[0].mxu0
    %v3971 = vpop.f32.mrb[0].mxu0
    %v3972 = vadd.f32 0.0, %v3971
    %v3973 = vpop.f32.mrb[0].mxu0
    %3974 = vmatprep.mubr.bf16.mxu0 0
    %3975 = vmatmul.mubr.bf16.gmra.mrb[0].mxu0 %v3655
    %v3976 = vpop.f32.mrb[0].mxu0
    %v3977 = vadd.f32 0.0, %v3976
    %v3978 = vpop.f32.mrb[0].mxu0
    %v3979 = vpop.f32.mrb[0].mxu0
    %v3980 = vadd.f32 0.0, %v3979
    %v3981 = vpop.f32.mrb[0].mxu0
    %3982 = vmatprep.mubr.bf16.mxu0 0
    %3983 = vmatmul.mubr.bf16.gmra.mrb[0].mxu0 %v3658
    %v3984 = vpop.f32.mrb[0].mxu0
    %v3985 = vadd.f32 0.0, %v3984
    %v3986 = vpop.f32.mrb[0].mxu0
    %v3987 = vpop.f32.mrb[0].mxu0
    %v3988 = vadd.f32 0.0, %v3987
    %v3989 = vpop.f32.mrb[0].mxu0
    %3990 = vmatprep.mubr.bf16.mxu0 0
    %3991 = vmatmul.mubr.bf16.gmra.mrb[0].mxu0 %v3661
    %v3992 = vpop.f32.mrb[0].mxu0
    %v3993 = vadd.f32 0.0, %v3992
    %v3994 = vpop.f32.mrb[0].mxu0
    %v3995 = vpop.f32.mrb[0].mxu0
    %v3996 = vadd.f32 0.0, %v3995
    %v3997 = vpop.f32.mrb[0].mxu0
    %3998 = vdwg.mxu0
    %v3999 = vmul.f32 %v3929, %v3571
    %v4000 = vmul.f32 %v3932, %v3572
    %v4001 = vmul.f32 %v3937, %v3573
    %v4002 = vmul.f32 %v3940, %v3574
    %v4003 = vmul.f32 %v3945, %v3575
    %v4004 = vmul.f32 %v3948, %v3576
    %v4005 = vmul.f32 %v3953, %v3577
    %v4006 = vmul.f32 %v3956, %v3578
    %v4007 = vmul.f32 %v3961, %v3579
    %v4008 = vmul.f32 %v3964, %v3580
    %v4009 = vmul.f32 %v3969, %v3581
    %v4010 = vmul.f32 %v3972, %v3582
    %v4011 = vmul.f32 %v3977, %v3583
    %v4012 = vmul.f32 %v3980, %v3584
    %v4013 = vmul.f32 %v3985, %v3585
    %v4014 = vmul.f32 %v3988, %v3586
    %v4015 = vmul.f32 %v3993, %v3587
    %v4016 = vmul.f32 %v3996, %v3588
    %v4017 = vsel %vm1215, %v3999, 0.0
    %4018 = vadd.xlane.f32.xlu0 %v4017
    %v4019 = vpop.xlane.xlu0 %4018
    %v4020 = vsel %vm1215, %v4000, 0.0
    %4021 = vadd.xlane.f32.xlu0 %v4020
    %v4022 = vpop.xlane.xlu0 %4021
    %v4023 = vsel %vm1215, %v4001, 0.0
    %4024 = vadd.xlane.f32.xlu0 %v4023
    %v4025 = vpop.xlane.xlu0 %4024
    %v4026 = vsel %vm1215, %v4002, 0.0
    %4027 = vadd.xlane.f32.xlu0 %v4026
    %v4028 = vpop.xlane.xlu0 %4027
    %v4029 = vsel %vm1215, %v4003, 0.0
    %4030 = vadd.xlane.f32.xlu0 %v4029
    %v4031 = vpop.xlane.xlu0 %4030
    %v4032 = vsel %vm1215, %v4004, 0.0
    %4033 = vadd.xlane.f32.xlu0 %v4032
    %v4034 = vpop.xlane.xlu0 %4033
    %v4035 = vsel %vm1215, %v4005, 0.0
    %4036 = vadd.xlane.f32.xlu0 %v4035
    %v4037 = vpop.xlane.xlu0 %4036
    %v4038 = vsel %vm1215, %v4006, 0.0
    %4039 = vadd.xlane.f32.xlu0 %v4038
    %v4040 = vpop.xlane.xlu0 %4039
    %v4041 = vsel %vm1215, %v4007, 0.0
    %4042 = vadd.xlane.f32.xlu0 %v4041
    %v4043 = vpop.xlane.xlu0 %4042
    %v4044 = vsel %vm1215, %v4008, 0.0
    %4045 = vadd.xlane.f32.xlu0 %v4044
    %v4046 = vpop.xlane.xlu0 %4045
    %v4047 = vsel %vm1215, %v4009, 0.0
    %4048 = vadd.xlane.f32.xlu0 %v4047
    %v4049 = vpop.xlane.xlu0 %4048
    %v4050 = vsel %vm1215, %v4010, 0.0
    %4051 = vadd.xlane.f32.xlu0 %v4050
    %v4052 = vpop.xlane.xlu0 %4051
    %v4053 = vsel %vm1215, %v4011, 0.0
    %4054 = vadd.xlane.f32.xlu0 %v4053
    %v4055 = vpop.xlane.xlu0 %4054
    %v4056 = vsel %vm1215, %v4012, 0.0
    %4057 = vadd.xlane.f32.xlu0 %v4056
    %v4058 = vpop.xlane.xlu0 %4057
    %v4059 = vsel %vm1215, %v4013, 0.0
    %4060 = vadd.xlane.f32.xlu0 %v4059
    %v4061 = vpop.xlane.xlu0 %4060
    %v4062 = vsel %vm1215, %v4014, 0.0
    %4063 = vadd.xlane.f32.xlu0 %v4062
    %v4064 = vpop.xlane.xlu0 %4063
    %v4065 = vsel %vm1215, %v4015, 0.0
    %4066 = vadd.xlane.f32.xlu0 %v4065
    %v4067 = vpop.xlane.xlu0 %4066
    %v4068 = vsel %vm1215, %v4016, 0.0
    %4069 = vadd.xlane.f32.xlu0 %v4068
    %v4070 = vpop.xlane.xlu0 %4069
    %v4071 = vld [vmem:[%s2 + $0x210] sm:$0xff]
    %v4072 = vld [vmem:[%s2 + $0x218] sm:$0xff]
    %v4073 = vld [vmem:[%s2 + $0x220] sm:$0xff]
    %v4074 = vld [vmem:[%s2 + $0x228] sm:$0xff]
    %v4075 = vld [vmem:[%s2 + $0x230] sm:$0xff]
    %v4076 = vld [vmem:[%s2 + $0x238] sm:$0xff]
    %v4077 = vld [vmem:[%s2 + $0x240] sm:$0xff]
    %v4078 = vld [vmem:[%s2 + $0x248] sm:$0xff]
    %v4079 = vld [vmem:[%s2 + $0x250] sm:$0xff]
    %v4080 = vld [vmem:[%s2 + $0x258] sm:$0xff]
    %v4081 = vld [vmem:[%s2 + $0x260] sm:$0xff]
    %v4082 = vld [vmem:[%s2 + $0x268] sm:$0xff]
    %v4083 = vld [vmem:[%s2 + $0x270] sm:$0xff]
    %v4084 = vld [vmem:[%s2 + $0x278] sm:$0xff]
    %v4085 = vld [vmem:[%s2 + $0x280] sm:$0xff]
    %v4086 = vld [vmem:[%s2 + $0x288] sm:$0xff]
    %v4087 = vld [vmem:[%s2 + $0x290] sm:$0xff]
    %v4088 = vld [vmem:[%s2 + $0x298] sm:$0xff]
    %v4089 = vmul.f32 %v3701, %v4071
    %v4090 = vmul.f32 %v3704, %v4072
    %v4091 = vmul.f32 %v3709, %v4073
    %v4092 = vmul.f32 %v3712, %v4074
    %v4093 = vmul.f32 %v3717, %v4075
    %v4094 = vmul.f32 %v3720, %v4076
    %v4095 = vmul.f32 %v3725, %v4077
    %v4096 = vmul.f32 %v3728, %v4078
    %v4097 = vmul.f32 %v3733, %v4079
    %v4098 = vmul.f32 %v3736, %v4080
    %v4099 = vmul.f32 %v3741, %v4081
    %v4100 = vmul.f32 %v3744, %v4082
    %v4101 = vmul.f32 %v3749, %v4083
    %v4102 = vmul.f32 %v3752, %v4084
    %v4103 = vmul.f32 %v3757, %v4085
    %v4104 = vmul.f32 %v3760, %v4086
    %v4105 = vmul.f32 %v3765, %v4087
    %v4106 = vmul.f32 %v3768, %v4088
    %v4107 = vmul.f32 %v4089, 1.442695
    %v4108 = vpow.pop %v4107
    %v4109 = vmul.f32 %v4090, 1.442695
    %v4110 = vpow.pop %v4109
    %v4111 = vmul.f32 %v4091, 1.442695
    %v4112 = vpow.pop %v4111
    %v4113 = vmul.f32 %v4092, 1.442695
    %v4114 = vpow.pop %v4113
    %v4115 = vmul.f32 %v4093, 1.442695
    %v4116 = vpow.pop %v4115
    %v4117 = vmul.f32 %v4094, 1.442695
    %v4118 = vpow.pop %v4117
    %v4119 = vmul.f32 %v4095, 1.442695
    %v4120 = vpow.pop %v4119
    %v4121 = vmul.f32 %v4096, 1.442695
    %v4122 = vpow.pop %v4121
    %v4123 = vmul.f32 %v4097, 1.442695
    %v4124 = vpow.pop %v4123
    %v4125 = vmul.f32 %v4098, 1.442695
    %v4126 = vpow.pop %v4125
    %v4127 = vmul.f32 %v4099, 1.442695
    %v4128 = vpow.pop %v4127
    %v4129 = vmul.f32 %v4100, 1.442695
    %v4130 = vpow.pop %v4129
    %v4131 = vmul.f32 %v4101, 1.442695
    %v4132 = vpow.pop %v4131
    %v4133 = vmul.f32 %v4102, 1.442695
    %v4134 = vpow.pop %v4133
    %v4135 = vmul.f32 %v4103, 1.442695
    %v4136 = vpow.pop %v4135
    %v4137 = vmul.f32 %v4104, 1.442695
    %v4138 = vpow.pop %v4137
    %v4139 = vmul.f32 %v4105, 1.442695
    %v4140 = vpow.pop %v4139
    %v4141 = vmul.f32 %v4106, 1.442695
    %v4142 = vpow.pop %v4141
    %4143 = vst.msk [vmem:[#allocation2] sm:$0xff] %vm603, %v4108
    %4144 = vst.msk [vmem:[#allocation2 + $0x8] sm:$0xff] %vm603, %v4110
    %4145 = vst.msk [vmem:[#allocation2 + $0x10] sm:$0xff] %vm603, %v4112
    %4146 = vst.msk [vmem:[#allocation2 + $0x18] sm:$0xff] %vm603, %v4114
    %4147 = vst.msk [vmem:[#allocation2 + $0x20] sm:$0xff] %vm603, %v4116
    %4148 = vst.msk [vmem:[#allocation2 + $0x28] sm:$0xff] %vm603, %v4118
    %4149 = vst.msk [vmem:[#allocation2 + $0x30] sm:$0xff] %vm603, %v4120
    %4150 = vst.msk [vmem:[#allocation2 + $0x38] sm:$0xff] %vm603, %v4122
    %4151 = vst.msk [vmem:[#allocation2 + $0x40] sm:$0xff] %vm603, %v4124
    %4152 = vst.msk [vmem:[#allocation2 + $0x48] sm:$0xff] %vm603, %v4126
    %4153 = vst.msk [vmem:[#allocation2 + $0x50] sm:$0xff] %vm603, %v4128
    %4154 = vst.msk [vmem:[#allocation2 + $0x58] sm:$0xff] %vm603, %v4130
    %4155 = vst.msk [vmem:[#allocation2 + $0x60] sm:$0xff] %vm603, %v4132
    %4156 = vst.msk [vmem:[#allocation2 + $0x68] sm:$0xff] %vm603, %v4134
    %4157 = vst.msk [vmem:[#allocation2 + $0x70] sm:$0xff] %vm603, %v4136
    %4158 = vst.msk [vmem:[#allocation2 + $0x78] sm:$0xff] %vm603, %v4138
    %4159 = vst.msk [vmem:[#allocation2 + $0x80] sm:$0xff] %vm603, %v4140
    %4160 = vst.msk [vmem:[#allocation2 + $0x88] sm:$0xff] %vm603, %v4142
    %v4161 = vmul.f32 %v3814, %v4019
    %v4162 = vmul.f32 %v3817, %v4022
    %v4163 = vmul.f32 %v3822, %v4025
    %v4164 = vmul.f32 %v3825, %v4028
    %v4165 = vmul.f32 %v3830, %v4031
    %v4166 = vmul.f32 %v3833, %v4034
    %v4167 = vmul.f32 %v3838, %v4037
    %v4168 = vmul.f32 %v3841, %v4040
    %v4169 = vmul.f32 %v3846, %v4043
    %v4170 = vmul.f32 %v3849, %v4046
    %v4171 = vmul.f32 %v3854, %v4049
    %v4172 = vmul.f32 %v3857, %v4052
    %v4173 = vmul.f32 %v3862, %v4055
    %v4174 = vmul.f32 %v3865, %v4058
    %v4175 = vmul.f32 %v3870, %v4061
    %v4176 = vmul.f32 %v3873, %v4064
    %v4177 = vmul.f32 %v3878, %v4067
    %v4178 = vmul.f32 %v3881, %v4070
    %4179 = vst.msk [vmem:[#allocation3] sm:$0xff] %vm603, %v4161
    %4180 = vst.msk [vmem:[#allocation3 + $0x8] sm:$0xff] %vm603, %v4162
    %4181 = vst.msk [vmem:[#allocation3 + $0x10] sm:$0xff] %vm603, %v4163
    %4182 = vst.msk [vmem:[#allocation3 + $0x18] sm:$0xff] %vm603, %v4164
    %4183 = vst.msk [vmem:[#allocation3 + $0x20] sm:$0xff] %vm603, %v4165
    %4184 = vst.msk [vmem:[#allocation3 + $0x28] sm:$0xff] %vm603, %v4166
    %4185 = vst.msk [vmem:[#allocation3 + $0x30] sm:$0xff] %vm603, %v4167
    %4186 = vst.msk [vmem:[#allocation3 + $0x38] sm:$0xff] %vm603, %v4168
    %4187 = vst.msk [vmem:[#allocation3 + $0x40] sm:$0xff] %vm603, %v4169
    %4188 = vst.msk [vmem:[#allocation3 + $0x48] sm:$0xff] %vm603, %v4170
    %4189 = vst.msk [vmem:[#allocation3 + $0x50] sm:$0xff] %vm603, %v4171
    %4190 = vst.msk [vmem:[#allocation3 + $0x58] sm:$0xff] %vm603, %v4172
    %4191 = vst.msk [vmem:[#allocation3 + $0x60] sm:$0xff] %vm603, %v4173
    %4192 = vst.msk [vmem:[#allocation3 + $0x68] sm:$0xff] %vm603, %v4174
    %4193 = vst.msk [vmem:[#allocation3 + $0x70] sm:$0xff] %vm603, %v4175
    %4194 = vst.msk [vmem:[#allocation3 + $0x78] sm:$0xff] %vm603, %v4176
    %4195 = vst.msk [vmem:[#allocation3 + $0x80] sm:$0xff] %vm603, %v4177
    %4196 = vst.msk [vmem:[#allocation3 + $0x88] sm:$0xff] %vm603, %v4178
    %v4197 = vld [vmem:[#allocation2] sm:$0xff]
    %v4198 = vld [vmem:[#allocation2 + $0x8] sm:$0xff]
    %v4199 = vmul.f32 %v4197, 0.0
    %v4200 = vmul.f32 %v4198, 0.0
    %v4201 = vld [vmem:[#allocation3] sm:$0xff]
    %v4202 = vld [vmem:[#allocation3 + $0x8] sm:$0xff]
    %v4203 = vadd.f32 %v4199, %v4201
    %v4204 = vadd.f32 %v4200, %v4202
    %4205 = vst.msk [vmem:[#allocation4] sm:$0xff] %vm603, %v4203
    %4206 = vst.msk [vmem:[#allocation4 + $0x8] sm:$0xff] %vm603, %v4204
    %v4207 = vld [vmem:[#allocation2 + $0x10] sm:$0xff]
    %v4208 = vld [vmem:[#allocation2 + $0x18] sm:$0xff]
    %v4209 = vmul.f32 %v4207, %v4203
    %v4210 = vmul.f32 %v4208, %v4204
    %v4211 = vld [vmem:[#allocation3 + $0x10] sm:$0xff]
    %v4212 = vld [vmem:[#allocation3 + $0x18] sm:$0xff]
    %v4213 = vadd.f32 %v4209, %v4211
    %v4214 = vadd.f32 %v4210, %v4212
    %4215 = vst.msk [vmem:[#allocation4 + $0x10] sm:$0xff] %vm603, %v4213
    %4216 = vst.msk [vmem:[#allocation4 + $0x18] sm:$0xff] %vm603, %v4214
    %v4217 = vld [vmem:[#allocation2 + $0x20] sm:$0xff]
    %v4218 = vld [vmem:[#allocation2 + $0x28] sm:$0xff]
    %v4219 = vmul.f32 %v4217, %v4213
    %v4220 = vmul.f32 %v4218, %v4214
    %v4221 = vld [vmem:[#allocation3 + $0x20] sm:$0xff]
    %v4222 = vld [vmem:[#allocation3 + $0x28] sm:$0xff]
    %v4223 = vadd.f32 %v4219, %v4221
    %v4224 = vadd.f32 %v4220, %v4222
    %4225 = vst.msk [vmem:[#allocation4 + $0x20] sm:$0xff] %vm603, %v4223
    %4226 = vst.msk [vmem:[#allocation4 + $0x28] sm:$0xff] %vm603, %v4224
    %v4227 = vld [vmem:[#allocation2 + $0x30] sm:$0xff]
    %v4228 = vld [vmem:[#allocation2 + $0x38] sm:$0xff]
    %v4229 = vmul.f32 %v4227, %v4223
    %v4230 = vmul.f32 %v4228, %v4224
    %v4231 = vld [vmem:[#allocation3 + $0x30] sm:$0xff]
    %v4232 = vld [vmem:[#allocation3 + $0x38] sm:$0xff]
    %v4233 = vadd.f32 %v4229, %v4231
    %v4234 = vadd.f32 %v4230, %v4232
    %4235 = vst.msk [vmem:[#allocation4 + $0x30] sm:$0xff] %vm603, %v4233
    %4236 = vst.msk [vmem:[#allocation4 + $0x38] sm:$0xff] %vm603, %v4234
    %v4237 = vld [vmem:[#allocation2 + $0x40] sm:$0xff]
    %v4238 = vld [vmem:[#allocation2 + $0x48] sm:$0xff]
    %v4239 = vmul.f32 %v4237, %v4233
    %v4240 = vmul.f32 %v4238, %v4234
    %v4241 = vld [vmem:[#allocation3 + $0x40] sm:$0xff]
    %v4242 = vld [vmem:[#allocation3 + $0x48] sm:$0xff]
    %v4243 = vadd.f32 %v4239, %v4241
    %v4244 = vadd.f32 %v4240, %v4242
    %4245 = vst.msk [vmem:[#allocation4 + $0x40] sm:$0xff] %vm603, %v4243
    %4246 = vst.msk [vmem:[#allocation4 + $0x48] sm:$0xff] %vm603, %v4244
    %v4247 = vld [vmem:[#allocation2 + $0x50] sm:$0xff]
    %v4248 = vld [vmem:[#allocation2 + $0x58] sm:$0xff]
    %v4249 = vmul.f32 %v4247, %v4243
    %v4250 = vmul.f32 %v4248, %v4244
    %v4251 = vld [vmem:[#allocation3 + $0x50] sm:$0xff]
    %v4252 = vld [vmem:[#allocation3 + $0x58] sm:$0xff]
    %v4253 = vadd.f32 %v4249, %v4251
    %v4254 = vadd.f32 %v4250, %v4252
    %4255 = vst.msk [vmem:[#allocation4 + $0x50] sm:$0xff] %vm603, %v4253
    %4256 = vst.msk [vmem:[#allocation4 + $0x58] sm:$0xff] %vm603, %v4254
    %v4257 = vld [vmem:[#allocation2 + $0x60] sm:$0xff]
    %v4258 = vld [vmem:[#allocation2 + $0x68] sm:$0xff]
    %v4259 = vmul.f32 %v4257, %v4253
    %v4260 = vmul.f32 %v4258, %v4254
    %v4261 = vld [vmem:[#allocation3 + $0x60] sm:$0xff]
    %v4262 = vld [vmem:[#allocation3 + $0x68] sm:$0xff]
    %v4263 = vadd.f32 %v4259, %v4261
    %v4264 = vadd.f32 %v4260, %v4262
    %4265 = vst.msk [vmem:[#allocation4 + $0x60] sm:$0xff] %vm603, %v4263
    %4266 = vst.msk [vmem:[#allocation4 + $0x68] sm:$0xff] %vm603, %v4264
    %v4267 = vld [vmem:[#allocation2 + $0x70] sm:$0xff]
    %v4268 = vld [vmem:[#allocation2 + $0x78] sm:$0xff]
    %v4269 = vmul.f32 %v4267, %v4263
    %v4270 = vmul.f32 %v4268, %v4264
    %v4271 = vld [vmem:[#allocation3 + $0x70] sm:$0xff]
    %v4272 = vld [vmem:[#allocation3 + $0x78] sm:$0xff]
    %v4273 = vadd.f32 %v4269, %v4271
    %v4274 = vadd.f32 %v4270, %v4272
    %4275 = vst.msk [vmem:[#allocation4 + $0x70] sm:$0xff] %vm603, %v4273
    %4276 = vst.msk [vmem:[#allocation4 + $0x78] sm:$0xff] %vm603, %v4274
    %v4277 = vld [vmem:[#allocation2 + $0x80] sm:$0xff]
    %v4278 = vld [vmem:[#allocation2 + $0x88] sm:$0xff]
    %v4279 = vmul.f32 %v4277, %v4273
    %v4280 = vmul.f32 %v4278, %v4274
    %v4281 = vld [vmem:[#allocation3 + $0x80] sm:$0xff]
    %v4282 = vld [vmem:[#allocation3 + $0x88] sm:$0xff]
    %v4283 = vadd.f32 %v4279, %v4281
    %v4284 = vadd.f32 %v4280, %v4282
    %4285 = vst.msk [vmem:[#allocation4 + $0x80] sm:$0xff] %vm603, %v4283
    %4286 = vst.msk [vmem:[#allocation4 + $0x88] sm:$0xff] %vm603, %v4284
    %4287 = vrot.lane.b32.xlu0 %v3462, 118
    %v4288 = vpop.permute.xlu0 %4287
    %4289 = vrot.lane.b32.xlu0 %v3463, 118
    %v4290 = vpop.permute.xlu0 %4289
    %v4293 = vsel %vm328, %v4290, 0
    %4295 = vmatprep.subr.bf16.mxu0 0
    %4296 = vmatpush1.bf16.msra.mxu0 %v4288
    %4297 = vmatprep.subr.bf16.mxu0 0
    %4298 = vmatpush1.bf16.msra.mxu0 %v4293
    %4299 = vmatprep.subr.bf16.mxu0 0
    %4300 = vmatpush1.bf16.msra.mxu0 0
    %4301 = vmatprep.subr.bf16.mxu0 0
    %4302 = vmatpush1.bf16.msra.mxu0 0
    %4303 = vmatprep.subr.bf16.mxu0 0
    %4304 = vmatpush1.bf16.msra.mxu0 0
    %4305 = vmatprep.subr.bf16.mxu0 0
    %4306 = vmatpush1.bf16.msra.mxu0 0
    %4307 = vmatprep.subr.bf16.mxu0 0
    %4308 = vmatpush1.bf16.msra.mxu0 0
    %4309 = vmatprep.subr.bf16.mxu0 0
    %4310 = vmatpush1.bf16.msra.mxu0 0
    %4311 = vmatprep.subr.bf16.mxu0 0
    %4312 = vmatpush1.bf16.msra.mxu0 0
    %4313 = vmatprep.subr.bf16.mxu0 0
    %4314 = vmatpush1.bf16.msra.mxu0 0
    %4315 = vmatprep.subr.bf16.mxu0 0
    %4316 = vmatpush1.bf16.msra.mxu0 0
    %4317 = vmatprep.subr.bf16.mxu0 0
    %4318 = vmatpush1.bf16.msra.mxu0 0
    %4319 = vmatprep.subr.bf16.mxu0 0
    %4320 = vmatpush1.bf16.msra.mxu0 0
    %4321 = vmatprep.subr.bf16.mxu0 0
    %4322 = vmatpush1.bf16.msra.mxu0 0
    %4323 = vmatprep.subr.bf16.mxu0 0
    %4324 = vmatpush1.bf16.msra.mxu0 0
    %4325 = vmatprep.subr.bf16.mxu0 0
    %4326 = vmatpush1.bf16.msra.mxu0 0
    %4327 = vmatprep.mubr.bf16.mxu0 0
    %4328 = vmatmul.mubr.bf16.gmra.mrb[0].mxu0 %v3637
    %v4329 = vpop.f32.mrb[0].mxu0
    %v4330 = vadd.f32 0.0, %v4329
    %v4331 = vpop.f32.mrb[0].mxu0
    %v4332 = vpop.f32.mrb[0].mxu0
    %v4333 = vadd.f32 0.0, %v4332
    %v4334 = vpop.f32.mrb[0].mxu0
    %4335 = vmatprep.mubr.bf16.mxu0 0
    %4336 = vmatmul.mubr.bf16.gmra.mrb[0].mxu0 %v3640
    %v4337 = vpop.f32.mrb[0].mxu0
    %v4338 = vadd.f32 0.0, %v4337
    %v4339 = vpop.f32.mrb[0].mxu0
    %v4340 = vpop.f32.mrb[0].mxu0
    %v4341 = vadd.f32 0.0, %v4340
    %v4342 = vpop.f32.mrb[0].mxu0
    %4343 = vmatprep.mubr.bf16.mxu0 0
    %4344 = vmatmul.mubr.bf16.gmra.mrb[0].mxu0 %v3643
    %v4345 = vpop.f32.mrb[0].mxu0
    %v4346 = vadd.f32 0.0, %v4345
    %v4347 = vpop.f32.mrb[0].mxu0
    %v4348 = vpop.f32.mrb[0].mxu0
    %v4349 = vadd.f32 0.0, %v4348
    %v4350 = vpop.f32.mrb[0].mxu0
    %4351 = vmatprep.mubr.bf16.mxu0 0
    %4352 = vmatmul.mubr.bf16.gmra.mrb[0].mxu0 %v3646
    %v4353 = vpop.f32.mrb[0].mxu0
    %v4354 = vadd.f32 0.0, %v4353
    %v4355 = vpop.f32.mrb[0].mxu0
    %v4356 = vpop.f32.mrb[0].mxu0
    %v4357 = vadd.f32 0.0, %v4356
    %v4358 = vpop.f32.mrb[0].mxu0
    %4359 = vmatprep.mubr.bf16.mxu0 0
    %4360 = vmatmul.mubr.bf16.gmra.mrb[0].mxu0 %v3649
    %v4361 = vpop.f32.mrb[0].mxu0
    %v4362 = vadd.f32 0.0, %v4361
    %v4363 = vpop.f32.mrb[0].mxu0
    %v4364 = vpop.f32.mrb[0].mxu0
    %v4365 = vadd.f32 0.0, %v4364
    %v4366 = vpop.f32.mrb[0].mxu0
    %4367 = vmatprep.mubr.bf16.mxu0 0
    %4368 = vmatmul.mubr.bf16.gmra.mrb[0].mxu0 %v3652
    %v4369 = vpop.f32.mrb[0].mxu0
    %v4370 = vadd.f32 0.0, %v4369
    %v4371 = vpop.f32.mrb[0].mxu0
    %v4372 = vpop.f32.mrb[0].mxu0
    %v4373 = vadd.f32 0.0, %v4372
    %v4374 = vpop.f32.mrb[0].mxu0
    %4375 = vmatprep.mubr.bf16.mxu0 0
    %4376 = vmatmul.mubr.bf16.gmra.mrb[0].mxu0 %v3655
    %v4377 = vpop.f32.mrb[0].mxu0
    %v4378 = vadd.f32 0.0, %v4377
    %v4379 = vpop.f32.mrb[0].mxu0
    %v4380 = vpop.f32.mrb[0].mxu0
    %v4381 = vadd.f32 0.0, %v4380
    %v4382 = vpop.f32.mrb[0].mxu0
    %4383 = vmatprep.mubr.bf16.mxu0 0
    %4384 = vmatmul.mubr.bf16.gmra.mrb[0].mxu0 %v3658
    %v4385 = vpop.f32.mrb[0].mxu0
    %v4386 = vadd.f32 0.0, %v4385
    %v4387 = vpop.f32.mrb[0].mxu0
    %v4388 = vpop.f32.mrb[0].mxu0
    %v4389 = vadd.f32 0.0, %v4388
    %v4390 = vpop.f32.mrb[0].mxu0
    %4391 = vmatprep.mubr.bf16.mxu0 0
    %4392 = vmatmul.mubr.bf16.gmra.mrb[0].mxu0 %v3661
    %v4393 = vpop.f32.mrb[0].mxu0
    %v4394 = vadd.f32 0.0, %v4393
    %v4395 = vpop.f32.mrb[0].mxu0
    %v4396 = vpop.f32.mrb[0].mxu0
    %v4397 = vadd.f32 0.0, %v4396
    %v4398 = vpop.f32.mrb[0].mxu0
    %4399 = vdwg.mxu0
    %v4400 = vmul.f32 %v4330, %v3571
    %v4401 = vmul.f32 %v4333, %v3572
    %v4402 = vmul.f32 %v4338, %v3573
    %v4403 = vmul.f32 %v4341, %v3574
    %v4404 = vmul.f32 %v4346, %v3575
    %v4405 = vmul.f32 %v4349, %v3576
    %v4406 = vmul.f32 %v4354, %v3577
    %v4407 = vmul.f32 %v4357, %v3578
    %v4408 = vmul.f32 %v4362, %v3579
    %v4409 = vmul.f32 %v4365, %v3580
    %v4410 = vmul.f32 %v4370, %v3581
    %v4411 = vmul.f32 %v4373, %v3582
    %v4412 = vmul.f32 %v4378, %v3583
    %v4413 = vmul.f32 %v4381, %v3584
    %v4414 = vmul.f32 %v4386, %v3585
    %v4415 = vmul.f32 %v4389, %v3586
    %v4416 = vmul.f32 %v4394, %v3587
    %v4417 = vmul.f32 %v4397, %v3588
    %v4418 = vsel %vm1215, %v4400, 0.0
    %4419 = vadd.xlane.f32.xlu0 %v4418
    %v4420 = vpop.xlane.xlu0 %4419
    %v4421 = vsel %vm1215, %v4401, 0.0
    %4422 = vadd.xlane.f32.xlu0 %v4421
    %v4423 = vpop.xlane.xlu0 %4422
    %v4424 = vsel %vm1215, %v4402, 0.0
    %4425 = vadd.xlane.f32.xlu0 %v4424
    %v4426 = vpop.xlane.xlu0 %4425
    %v4427 = vsel %vm1215, %v4403, 0.0
    %4428 = vadd.xlane.f32.xlu0 %v4427
    %v4429 = vpop.xlane.xlu0 %4428
    %v4430 = vsel %vm1215, %v4404, 0.0
    %4431 = vadd.xlane.f32.xlu0 %v4430
    %v4432 = vpop.xlane.xlu0 %4431
    %v4433 = vsel %vm1215, %v4405, 0.0
    %4434 = vadd.xlane.f32.xlu0 %v4433
    %v4435 = vpop.xlane.xlu0 %4434
    %v4436 = vsel %vm1215, %v4406, 0.0
    %4437 = vadd.xlane.f32.xlu0 %v4436
    %v4438 = vpop.xlane.xlu0 %4437
    %v4439 = vsel %vm1215, %v4407, 0.0
    %4440 = vadd.xlane.f32.xlu0 %v4439
    %v4441 = vpop.xlane.xlu0 %4440
    %v4442 = vsel %vm1215, %v4408, 0.0
    %4443 = vadd.xlane.f32.xlu0 %v4442
    %v4444 = vpop.xlane.xlu0 %4443
    %v4445 = vsel %vm1215, %v4409, 0.0
    %4446 = vadd.xlane.f32.xlu0 %v4445
    %v4447 = vpop.xlane.xlu0 %4446
    %v4448 = vsel %vm1215, %v4410, 0.0
    %4449 = vadd.xlane.f32.xlu0 %v4448
    %v4450 = vpop.xlane.xlu0 %4449
    %v4451 = vsel %vm1215, %v4411, 0.0
    %4452 = vadd.xlane.f32.xlu0 %v4451
    %v4453 = vpop.xlane.xlu0 %4452
    %v4454 = vsel %vm1215, %v4412, 0.0
    %4455 = vadd.xlane.f32.xlu0 %v4454
    %v4456 = vpop.xlane.xlu0 %4455
    %v4457 = vsel %vm1215, %v4413, 0.0
    %4458 = vadd.xlane.f32.xlu0 %v4457
    %v4459 = vpop.xlane.xlu0 %4458
    %v4460 = vsel %vm1215, %v4414, 0.0
    %4461 = vadd.xlane.f32.xlu0 %v4460
    %v4462 = vpop.xlane.xlu0 %4461
    %v4463 = vsel %vm1215, %v4415, 0.0
    %4464 = vadd.xlane.f32.xlu0 %v4463
    %v4465 = vpop.xlane.xlu0 %4464
    %v4466 = vsel %vm1215, %v4416, 0.0
    %4467 = vadd.xlane.f32.xlu0 %v4466
    %v4468 = vpop.xlane.xlu0 %4467
    %v4469 = vsel %vm1215, %v4417, 0.0
    %4470 = vadd.xlane.f32.xlu0 %v4469
    %v4471 = vpop.xlane.xlu0 %4470
    %v4472 = vld [vmem:[#allocation4] sm:$0xff]
    %v4473 = vld [vmem:[#allocation4 + $0x8] sm:$0xff]
    %v4474 = vld [vmem:[#allocation4 + $0x10] sm:$0xff]
    %v4475 = vld [vmem:[#allocation4 + $0x18] sm:$0xff]
    %v4476 = vld [vmem:[#allocation4 + $0x20] sm:$0xff]
    %v4477 = vld [vmem:[#allocation4 + $0x28] sm:$0xff]
    %v4478 = vld [vmem:[#allocation4 + $0x30] sm:$0xff]
    %v4479 = vld [vmem:[#allocation4 + $0x38] sm:$0xff]
    %v4480 = vld [vmem:[#allocation4 + $0x40] sm:$0xff]
    %v4481 = vld [vmem:[#allocation4 + $0x48] sm:$0xff]
    %v4482 = vld [vmem:[#allocation4 + $0x50] sm:$0xff]
    %v4483 = vld [vmem:[#allocation4 + $0x58] sm:$0xff]
    %v4484 = vld [vmem:[#allocation4 + $0x60] sm:$0xff]
    %v4485 = vld [vmem:[#allocation4 + $0x68] sm:$0xff]
    %v4486 = vld [vmem:[#allocation4 + $0x70] sm:$0xff]
    %v4487 = vld [vmem:[#allocation4 + $0x78] sm:$0xff]
    %v4488 = vld [vmem:[#allocation4 + $0x80] sm:$0xff]
    %v4489 = vld [vmem:[#allocation4 + $0x88] sm:$0xff]
    %v4490 = vmul.f32 %v4472, %v4420
    %v4491 = vmul.f32 %v4473, %v4423
    %v4492 = vmul.f32 %v4474, %v4426
    %v4493 = vmul.f32 %v4475, %v4429
    %v4494 = vmul.f32 %v4476, %v4432
    %v4495 = vmul.f32 %v4477, %v4435
    %v4496 = vmul.f32 %v4478, %v4438
    %v4497 = vmul.f32 %v4479, %v4441
    %v4498 = vmul.f32 %v4480, %v4444
    %v4499 = vmul.f32 %v4481, %v4447
    %v4500 = vmul.f32 %v4482, %v4450
    %v4501 = vmul.f32 %v4483, %v4453
    %v4502 = vmul.f32 %v4484, %v4456
    %v4503 = vmul.f32 %v4485, %v4459
    %v4504 = vmul.f32 %v4486, %v4462
    %v4505 = vmul.f32 %v4487, %v4465
    %v4506 = vmul.f32 %v4488, %v4468
    %v4507 = vmul.f32 %v4489, %v4471
    %v4508 = vld [vmem:[%s1 + $0xc0] sm:$0xff]
    %v4509 = vld [vmem:[%s1 + $0xc8] sm:$0xff]
    %v4510 = vld [vmem:[%s1 + $0xd0] sm:$0x11]
    %v4511 = vpack.c.bf16 %v4491, %v4490
    %v4512 = vpack.c.bf16 %v4493, %v4492
    %v4513 = vpack.c.bf16 %v4495, %v4494
    %v4514 = vpack.c.bf16 %v4497, %v4496
    %v4515 = vpack.c.bf16 %v4499, %v4498
    %v4516 = vpack.c.bf16 %v4501, %v4500
    %v4517 = vpack.c.bf16 %v4503, %v4502
    %v4518 = vpack.c.bf16 %v4505, %v4504
    %v4519 = vpack.c.bf16 %v4507, %v4506
    %v4520 = vld [vmem:[%s2 + $0x208] sm:$0x1]
    %v4521 = vlaneseq
    %v4522 = vshrl.u32 %v4521, 7
    %v4523 = vsub.s32 0, %v4522
    %v4524 = vrot.slane %v4520, %v4523
    %v4525 = vmul.f32 %v4524, %v3370
    %v4526 = vmul.f32 %v4524, %v3371
    %v4527 = vmul.f32 %v4524, %v3372
    %v4531 = vunpack.c.l.b16 %v4508
    %v4532 = vunpack.c.h.b16 %v4508
    %v4533 = vunpack.c.l.b16 %v4509
    %v4534 = vunpack.c.h.b16 %v4509
    %v4535 = vunpack.c.l.b16 %v4510
    %v4536 = vunpack.c.h.b16 %v4510
    %v4537 = vpack.c.b16 %v4533, %v4531
    %v4538 = vpack.c.b16 %v4534, %v4532
    %v4539 = vpack.c.b16 %v4535, %v4535
    %v4540 = vpack.c.b16 %v4536, %v4536
    %v4544 = vsel %vm51, %v4538, 0
    %v4547 = vsel %vm51, %v4540, 0
    %4549 = vmatprep.subr.bf16.mxu0 0
    %4550 = vmatpush1.bf16.msra.mxu0 %v4511
    %4551 = vmatprep.subr.bf16.mxu0 0
    %4552 = vmatpush1.bf16.msra.mxu0 %v4512
    %4553 = vmatprep.subr.bf16.mxu0 0
    %4554 = vmatpush1.bf16.msra.mxu0 %v4513
    %4555 = vmatprep.subr.bf16.mxu0 0
    %4556 = vmatpush1.bf16.msra.mxu0 %v4514
    %4557 = vmatprep.subr.bf16.mxu0 0
    %4558 = vmatpush1.bf16.msra.mxu0 %v4515
    %4559 = vmatprep.subr.bf16.mxu0 0
    %4560 = vmatpush1.bf16.msra.mxu0 %v4516
    %4561 = vmatprep.subr.bf16.mxu0 0
    %4562 = vmatpush1.bf16.msra.mxu0 %v4517
    %4563 = vmatprep.subr.bf16.mxu0 0
    %4564 = vmatpush1.bf16.msra.mxu0 %v4518
    %4565 = vmatprep.subr.bf16.mxu0 0
    %4566 = vmatpush1.bf16.msra.mxu0 %v4519
    %4567 = vmatprep.subr.bf16.mxu0 0
    %4568 = vmatpush1.bf16.msra.mxu0 0
    %4569 = vmatprep.subr.bf16.mxu0 0
    %4570 = vmatpush1.bf16.msra.mxu0 0
    %4571 = vmatprep.subr.bf16.mxu0 0
    %4572 = vmatpush1.bf16.msra.mxu0 0
    %4573 = vmatprep.subr.bf16.mxu0 0
    %4574 = vmatpush1.bf16.msra.mxu0 0
    %4575 = vmatprep.subr.bf16.mxu0 0
    %4576 = vmatpush1.bf16.msra.mxu0 0
    %4577 = vmatprep.subr.bf16.mxu0 0
    %4578 = vmatpush1.bf16.msra.mxu0 0
    %4579 = vmatprep.subr.bf16.mxu0 0
    %4580 = vmatpush1.bf16.msra.mxu0 0
    %4581 = vmatprep.mubr.bf16.mxu0 %v4544
    %4582 = vmatmul.mubr.bf16.gmra.mrb[0].mxu0 %v4537
    %v4583 = vpop.f32.mrb[0].mxu0
    %v4584 = vadd.f32 %v4525, %v4583
    %v4585 = vpop.f32.mrb[0].mxu0
    %v4586 = vpop.f32.mrb[0].mxu0
    %v4587 = vadd.f32 %v4526, %v4586
    %v4588 = vpop.f32.mrb[0].mxu0
    %4589 = vmatprep.mubr.bf16.mxu0 %v4547
    %4590 = vmatmul.mubr.bf16.gmra.mrb[0].mxu0 %v4539
    %v4591 = vpop.f32.mrb[0].mxu0
    %v4592 = vadd.f32 %v4527, %v4591
    %v4593 = vpop.f32.mrb[0].mxu0
    %v4594 = vpop.f32.mrb[0].mxu0
    %v4595 = vpop.f32.mrb[0].mxu0
    %4596 = vdwg.mxu0
    %v4597 = vsub.f32 0.0, %v3093
    %v4598 = vsub.f32 0.0, %v3096
    %v4599 = vsub.f32 0.0, %v3101
    %v4600 = vmul.f32 %v4597, 1.442695
    %v4601 = vpow.pop %v4600
    %v4602 = vmul.f32 %v4598, 1.442695
    %v4603 = vpow.pop %v4602
    %v4604 = vmul.f32 %v4599, 1.442695
    %v4605 = vpow.pop %v4604
    %v4606 = vadd.f32 %v4601, 1.0
    %v4607 = vadd.f32 %v4603, 1.0
    %v4608 = vadd.f32 %v4605, 1.0
    %v4609 = vrcp.pop %v4606
    %v4610 = vmul.f32 1.0, %v4609
    %v4611 = vrcp.pop %v4607
    %v4612 = vmul.f32 1.0, %v4611
    %v4613 = vrcp.pop %v4608
    %v4614 = vmul.f32 1.0, %v4613
    %v4615 = vmul.f32 %v3093, %v4610
    %v4616 = vmul.f32 %v3096, %v4612
    %v4617 = vmul.f32 %v3101, %v4614
    %4621 = vrot.lane.b32.xlu0 %v4615, 64
    %v4622 = vpop.permute.xlu0 %4621
    %4623 = vrot.lane.b32.xlu0 %v4616, 64
    %v4624 = vpop.permute.xlu0 %4623
    %4625 = vrot.lane.b32.xlu0 %v4617, 64
    %v4626 = vpop.permute.xlu0 %4625
    %v4630 = vmul.f32 %v4584, %v4622
    %v4631 = vmul.f32 %v4587, %v4624
    %v4632 = vmul.f32 %v4592, %v4626
    %v4633 = vld [vmem:[%s1 + $0x2f0] sm:$0xf]
    %v4634 = vld [vmem:[%s1 + $0x2f8] sm:$0xf]
    %v4635 = vld [vmem:[%s1 + $0x300] sm:$0xf]
    %v4636 = vld [vmem:[%s1 + $0x308] sm:$0xf]
    %v4637 = vld [vmem:[%s1 + $0x310] sm:$0xf]
    %v4638 = vld [vmem:[%s1 + $0x318] sm:$0xf]
    %v4639 = vld [vmem:[%s1 + $0x320] sm:$0xf]
    %v4640 = vld [vmem:[%s1 + $0x328] sm:$0xf]
    %v4641 = vpack.c.bf16 %v4631, %v4630
    %v4642 = vpack.c.bf16 %v4632, %v4632
    %v4651 = vunpack.c.l.b16 %v4633
    %v4652 = vunpack.c.l.b16 %v4634
    %v4653 = vunpack.c.l.b16 %v4635
    %v4654 = vunpack.c.l.b16 %v4636
    %v4655 = vunpack.c.l.b16 %v4637
    %v4656 = vunpack.c.l.b16 %v4638
    %v4657 = vunpack.c.l.b16 %v4639
    %v4658 = vunpack.c.l.b16 %v4640
    %v4659 = vpack.c.b16 %v4652, %v4651
    %v4660 = vpack.c.b16 %v4654, %v4653
    %v4661 = vpack.c.b16 %v4656, %v4655
    %v4662 = vpack.c.b16 %v4658, %v4657
    %v4668 = vsel %vm603, %v4641, 0
    %v4671 = vsel %vm603, %v4642, 0
    %4673 = vmatprep.subr.bf16.mxu0 0
    %4674 = vmatpush1.bf16.msra.mxu0 %v4659
    %4675 = vmatprep.subr.bf16.mxu0 0
    %4676 = vmatpush1.bf16.msra.mxu0 %v4660
    %4677 = vmatprep.subr.bf16.mxu0 0
    %4678 = vmatpush1.bf16.msra.mxu0 %v4661
    %4679 = vmatprep.subr.bf16.mxu0 0
    %4680 = vmatpush1.bf16.msra.mxu0 %v4662
    %4681 = vmatprep.subr.bf16.mxu0 0
    %4682 = vmatpush1.bf16.msra.mxu0 0
    %4683 = vmatprep.subr.bf16.mxu0 0
    %4684 = vmatpush1.bf16.msra.mxu0 0
    %4685 = vmatprep.subr.bf16.mxu0 0
    %4686 = vmatpush1.bf16.msra.mxu0 0
    %4687 = vmatprep.subr.bf16.mxu0 0
    %4688 = vmatpush1.bf16.msra.mxu0 0
    %4689 = vmatprep.subr.bf16.mxu0 0
    %4690 = vmatpush1.bf16.msra.mxu0 0
    %4691 = vmatprep.subr.bf16.mxu0 0
    %4692 = vmatpush1.bf16.msra.mxu0 0
    %4693 = vmatprep.subr.bf16.mxu0 0
    %4694 = vmatpush1.bf16.msra.mxu0 0
    %4695 = vmatprep.subr.bf16.mxu0 0
    %4696 = vmatpush1.bf16.msra.mxu0 0
    %4697 = vmatprep.subr.bf16.mxu0 0
    %4698 = vmatpush1.bf16.msra.mxu0 0
    %4699 = vmatprep.subr.bf16.mxu0 0
    %4700 = vmatpush1.bf16.msra.mxu0 0
    %4701 = vmatprep.subr.bf16.mxu0 0
    %4702 = vmatpush1.bf16.msra.mxu0 0
    %4703 = vmatprep.subr.bf16.mxu0 0
    %4704 = vmatpush1.bf16.msra.mxu0 0
    %4705 = vmatprep.mubr.bf16.mxu0 0
    %4706 = vmatmul.mubr.bf16.gmra.mrb[0].mxu0 %v4668
    %v4707 = vpop.f32.mrb[0].mxu0
    %v4708 = vadd.f32 0.0, %v4707
    %v4709 = vpop.f32.mrb[0].mxu0
    %v4710 = vpop.f32.mrb[0].mxu0
    %v4711 = vadd.f32 0.0, %v4710
    %v4712 = vpop.f32.mrb[0].mxu0
    %4713 = vmatprep.mubr.bf16.mxu0 0
    %4714 = vmatmul.mubr.bf16.gmra.mrb[0].mxu0 %v4671
    %v4715 = vpop.f32.mrb[0].mxu0
    %v4716 = vadd.f32 0.0, %v4715
    %v4717 = vpop.f32.mrb[0].mxu0
    %v4718 = vpop.f32.mrb[0].mxu0
    %v4719 = vpop.f32.mrb[0].mxu0
    %4720 = vdwg.mxu0
    %v4721 = vadd.f32 %v3031, %v4708
    %v4722 = vadd.f32 %v3032, %v4711
    %v4723 = vadd.f32 %v3033, %v4716
    %v4724 = vld [vmem:[%s2 + $0x2a0] sm:$0x1]
    %v4725 = vld [vmem:[%s2 + $0x2a8] sm:$0x1]
    %v4726 = vsel %vm128, %v4721, 0.0
    %4727 = vadd.xlane.f32.xlu0 %v4726
    %v4728 = vpop.xlane.xlu0 %4727
    %v4729 = vsel %vm128, %v4722, 0.0
    %4730 = vadd.xlane.f32.xlu0 %v4729
    %v4731 = vpop.xlane.xlu0 %4730
    %v4732 = vsel %vm1931, %v4723, 0.0
    %4733 = vadd.xlane.f32.xlu0 %v4732
    %v4734 = vpop.xlane.xlu0 %4733
    %v4735 = vmul.f32 %v4728, %v1935
    %v4736 = vmul.f32 %v4731, %v1935
    %v4737 = vmul.f32 %v4734, %v1935
    %v4738 = vsub.f32 %v4721, %v4735
    %v4739 = vsub.f32 %v4722, %v4736
    %v4740 = vsub.f32 %v4723, %v4737
    %v4741 = vmul.f32 %v4738, %v4738
    %v4742 = vmul.f32 %v4739, %v4739
    %v4743 = vmul.f32 %v4740, %v4740
    %v4744 = vsel %vm128, %v4741, 0.0
    %4745 = vadd.xlane.f32.xlu0 %v4744
    %v4746 = vpop.xlane.xlu0 %4745
    %v4747 = vsel %vm128, %v4742, 0.0
    %4748 = vadd.xlane.f32.xlu0 %v4747
    %v4749 = vpop.xlane.xlu0 %4748
    %v4750 = vsel %vm1931, %v4743, 0.0
    %4751 = vadd.xlane.f32.xlu0 %v4750
    %v4752 = vpop.xlane.xlu0 %4751
    %v4753 = vmul.f32 %v4746, %v1935
    %v4754 = vmul.f32 %v4749, %v1935
    %v4755 = vmul.f32 %v4752, %v1935
    %v4756 = vadd.f32 %v4753, 1e-05
    %v4757 = vadd.f32 %v4754, 1e-05
    %v4758 = vadd.f32 %v4755, 1e-05
    %v4759 = vrsqrt.pop %v4756
    %v4760 = vrsqrt.pop %v4757
    %v4761 = vrsqrt.pop %v4758
    %v4762 = vmul.f32 %v4738, %v4759
    %v4763 = vmul.f32 %v4739, %v4760
    %v4764 = vmul.f32 %v4740, %v4761
    %v4765 = vlaneseq
    %v4766 = vshrl.u32 %v4765, 7
    %v4767 = vsub.s32 0, %v4766
    %v4768 = vrot.slane %v4724, %v4767
    %v4769 = vmul.f32 %v4762, %v4768
    %v4770 = vmul.f32 %v4763, %v4768
    %v4771 = vmul.f32 %v4764, %v4768
    %v4772 = vlaneseq
    %v4773 = vshrl.u32 %v4772, 7
    %v4774 = vsub.s32 0, %v4773
    %v4775 = vrot.slane %v4725, %v4774
    %v4776 = vadd.f32 %v4769, %v4775
    %v4777 = vadd.f32 %v4770, %v4775
    %v4778 = vadd.f32 %v4771, %v4775
    %v4779 = vld [vmem:[%s1 + $0xe0] sm:$0x1]
    %v4780 = vpack.c.bf16 %v4777, %v4776
    %v4781 = vpack.c.bf16 %v4778, %v4778
    %v4783 = vsel %vm321, %v4779, 0
    %v4786 = vsel %vm328, %v4781, 0
    %4788 = vmatprep.subr.bf16.mxu0 0
    %4789 = vmatpush1.bf16.msra.mxu0 %v4780
    %4790 = vmatprep.subr.bf16.mxu0 0
    %4791 = vmatpush1.bf16.msra.mxu0 %v4786
    %4792 = vmatprep.subr.bf16.mxu0 0
    %4793 = vmatpush1.bf16.msra.mxu0 0
    %4794 = vmatprep.subr.bf16.mxu0 0
    %4795 = vmatpush1.bf16.msra.mxu0 0
    %4796 = vmatprep.subr.bf16.mxu0 0
    %4797 = vmatpush1.bf16.msra.mxu0 0
    %4798 = vmatprep.subr.bf16.mxu0 0
    %4799 = vmatpush1.bf16.msra.mxu0 0
    %4800 = vmatprep.subr.bf16.mxu0 0
    %4801 = vmatpush1.bf16.msra.mxu0 0
    %4802 = vmatprep.subr.bf16.mxu0 0
    %4803 = vmatpush1.bf16.msra.mxu0 0
    %4804 = vmatprep.subr.bf16.mxu0 0
    %4805 = vmatpush1.bf16.msra.mxu0 0
    %4806 = vmatprep.subr.bf16.mxu0 0
    %4807 = vmatpush1.bf16.msra.mxu0 0
    %4808 = vmatprep.subr.bf16.mxu0 0
    %4809 = vmatpush1.bf16.msra.mxu0 0
    %4810 = vmatprep.subr.bf16.mxu0 0
    %4811 = vmatpush1.bf16.msra.mxu0 0
    %4812 = vmatprep.subr.bf16.mxu0 0
    %4813 = vmatpush1.bf16.msra.mxu0 0
    %4814 = vmatprep.subr.bf16.mxu0 0
    %4815 = vmatpush1.bf16.msra.mxu0 0
    %4816 = vmatprep.subr.bf16.mxu0 0
    %4817 = vmatpush1.bf16.msra.mxu0 0
    %4818 = vmatprep.subr.bf16.mxu0 0
    %4819 = vmatpush1.bf16.msra.mxu0 0
    %4820 = vmatprep.mubr.bf16.mxu0 0
    %4821 = vmatmul.mubr.bf16.gmra.mrb[0].mxu0 %v4783
    %v4822 = vpop.f32.mrb[0].mxu0
    %v4823 = vadd.f32 0.0, %v4822
    %v4824 = vpop.f32.mrb[0].mxu0
    %v4825 = vpop.f32.mrb[0].mxu0
    %v4826 = vpop.f32.mrb[0].mxu0
    %4827 = vdwg.mxu0
    %v4828 = vld [vmem:[%s1 + $0xf0] sm:$0xf]
    %v4829 = vld [vmem:[%s1 + $0xf8] sm:$0xf]
    %v4830 = vld [vmem:[%s1 + $0x100] sm:$0xf]
    %v4831 = vld [vmem:[%s1 + $0x108] sm:$0xf]
    %v4832 = vpack.c.bf16 %v4823, %v4823
    %v4833 = vld [vmem:[%s2 + $0x108] sm:$0x1]
    %v4834 = vlaneseq
    %v4835 = vshrl.u32 %v4834, 7
    %v4836 = vsub.s32 0, %v4835
    %v4837 = vrot.slane %v4833, %v4836
    %v4842 = vunpack.c.l.b16 %v4828
    %v4843 = vunpack.c.l.b16 %v4829
    %v4844 = vunpack.c.l.b16 %v4830
    %v4845 = vunpack.c.l.b16 %v4831
    %v4846 = vpack.c.b16 %v4843, %v4842
    %v4847 = vpack.c.b16 %v4845, %v4844
    %v4851 = vsel %vm128, %v4832, 0
    %4853 = vmatprep.subr.bf16.mxu0 0
    %4854 = vmatpush1.bf16.msra.mxu0 %v4846
    %4855 = vmatprep.subr.bf16.mxu0 0
    %4856 = vmatpush1.bf16.msra.mxu0 %v4847
    %4857 = vmatprep.subr.bf16.mxu0 0
    %4858 = vmatpush1.bf16.msra.mxu0 0
    %4859 = vmatprep.subr.bf16.mxu0 0
    %4860 = vmatpush1.bf16.msra.mxu0 0
    %4861 = vmatprep.subr.bf16.mxu0 0
    %4862 = vmatpush1.bf16.msra.mxu0 0
    %4863 = vmatprep.subr.bf16.mxu0 0
    %4864 = vmatpush1.bf16.msra.mxu0 0
    %4865 = vmatprep.subr.bf16.mxu0 0
    %4866 = vmatpush1.bf16.msra.mxu0 0
    %4867 = vmatprep.subr.bf16.mxu0 0
    %4868 = vmatpush1.bf16.msra.mxu0 0
    %4869 = vmatprep.subr.bf16.mxu0 0
    %4870 = vmatpush1.bf16.msra.mxu0 0
    %4871 = vmatprep.subr.bf16.mxu0 0
    %4872 = vmatpush1.bf16.msra.mxu0 0
    %4873 = vmatprep.subr.bf16.mxu0 0
    %4874 = vmatpush1.bf16.msra.mxu0 0
    %4875 = vmatprep.subr.bf16.mxu0 0
    %4876 = vmatpush1.bf16.msra.mxu0 0
    %4877 = vmatprep.subr.bf16.mxu0 0
    %4878 = vmatpush1.bf16.msra.mxu0 0
    %4879 = vmatprep.subr.bf16.mxu0 0
    %4880 = vmatpush1.bf16.msra.mxu0 0
    %4881 = vmatprep.subr.bf16.mxu0 0
    %4882 = vmatpush1.bf16.msra.mxu0 0
    %4883 = vmatprep.subr.bf16.mxu0 0
    %4884 = vmatpush1.bf16.msra.mxu0 0
    %4885 = vmatprep.mubr.bf16.mxu0 0
    %4886 = vmatmul.mubr.bf16.gmra.mrb[0].mxu0 %v4851
    %v4887 = vpop.f32.mrb[0].mxu0
    %v4888 = vadd.f32 %v4837, %v4887
    %v4889 = vpop.f32.mrb[0].mxu0
    %v4890 = vpop.f32.mrb[0].mxu0
    %v4891 = vpop.f32.mrb[0].mxu0
    %4892 = vdwg.mxu0
    %vm4893 = vcmask 17408
    %v4894 = vsel %vm4893, %v4888, -inf
    %4895 = vmax.xlane.f32.xlu0 %v4894
    %v4896 = vpop.xlane.xlu0 %4895
    %v4897 = vsub.f32 %v4888, %v4896
    %v4898 = vmul.f32 %v4897, 1.442695
    %v4899 = vpow.pop %v4898
    %v4900 = vsel %vm4893, %v4899, 0.0
    %4901 = vadd.xlane.f32.xlu0 %v4900
    %v4902 = vpop.xlane.xlu0 %4901
    %v4903 = vrcp.pop %v4902
    %v4904 = vmul.f32 %v4899, %v4903
    %4905 = vst.msk [vmem:[#allocation5] sm:$0x3] %vm4893, %v4904
    // Predicated region
    $region14: #{_lambda_.1} parent=1 // pred_check
      _
    $region15: #{_lambda_.1} parent=1 // pred_check_branch
      %4907 = sbr.rel (0) target = $region17
    $region16: #{_lambda_.1} parent=1 // pred_region
      %s4909 = ssub.s32 32, 32
      %4910 = vsyncadd [#allocation6], %s4909
      %s4912 = sshll.u32 [#allocation5], 4
      %s4913 = int_to_ptr.vmem [resolvable:$true] %s4912
      %4915 = dma.vmem_to_hbm [thread:$0]  %s4913, 32, %s3, [#allocation6]
    $region17: #{_lambda_.1} parent=1 // pred_fallthru
      _
    // Predicated region
    $region18: #{_lambda_.1} parent=1 // pred_check
      _
    $region19: #{_lambda_.1} parent=1 // pred_check_branch
      %4917 = sbr.rel (0) target = $region21
    $region20: #{_lambda_.1} parent=1 // pred_region
      %4918 = dma.done [#allocation6], 32
    $region21: #{_lambda_.1} parent=1 // pred_fallthru
      _
    %4919 = vsyncpa [#allocation6], 1

</llo_original>
